<compile_context>
chip_gen: v6e
topology: v6e:2x2x1
jax: 0.10.0
libtpu: 0.0.40
codegen_flags: <defaults>
</compile_context>

<pallas_src>
import functools

import jax
import jax.numpy as jnp
from jax.experimental import pallas as pl
from jax.experimental.pallas import tpu as pltpu


def _round_up(x: int, m: int) -> int:
    return (x + m - 1) // m * m


def _conv3bn_kernel(x_ref, w_ref, b_ref, o_ref, acc_ref):
    """One (batch image, C_out tile) grid step.

    x_ref  : (H+2, W+2, Cin_p)   bf16  zero-padded input plane (halo included)
    w_ref  : (3, 3, Cin_p, Ct)   bf16  BN-folded conv weights (HWIO)
    b_ref  : (1, Ct)             f32   BN-folded bias
    o_ref  : (H, W, Ct)          f32   output plane
    acc_ref: (H*W, Ct)           f32   VMEM accumulator
    """
    H, W, Ct = o_ref.shape
    Cin = x_ref.shape[-1]

    acc_ref[...] = jnp.zeros_like(acc_ref)

    # 3x3 conv as 9 shifted MXU matmuls with f32 accumulation.  The full
    # reduction lives inside this grid step, so no cross-step init/finalize
    # (pl.when) is needed and no partial accumulators hit HBM.
    for kh in range(3):
        for kw in range(3):
            patch = x_ref[kh:kh + H, kw:kw + W, :]            # (H, W, Cin_p)
            acc_ref[...] += jnp.dot(
                patch.reshape(H * W, Cin),
                w_ref[kh, kw],                                 # (Cin_p, Ct)
                preferred_element_type=jnp.float32,
            )

    # Epilogue (once): bias + ELU(alpha=1) in f32, then store lane-dense.
    y = acc_ref[...] + b_ref[...]
    y = jnp.where(y > 0, y, jnp.exp(jnp.minimum(y, 0.0)) - 1.0)
    o_ref[...] = y.reshape(H, W, Ct).astype(o_ref.dtype)


def fold_bn_into_conv(weight_oihw, conv_bias, gamma, beta,
                      running_mean, running_var, eps):
    """Fold eval-mode BatchNorm2d (running stats) into conv weight/bias.

    Returns (w_hwio_f32, bias_f32):
        w' = w * gamma / sqrt(var + eps)      (scaled along O)
        b' = beta + (b_conv - mean) * gamma / sqrt(var + eps)
    """
    scale = gamma.astype(jnp.float32) * jax.lax.rsqrt(
        running_var.astype(jnp.float32) + eps)                       # (Cout,)
    w_hwio = jnp.transpose(weight_oihw.astype(jnp.float32), (2, 3, 1, 0))
    w_fold = w_hwio * scale[None, None, None, :]
    b_fold = beta.astype(jnp.float32) + scale * (
        conv_bias.astype(jnp.float32) - running_mean.astype(jnp.float32))
    return w_fold, b_fold


@functools.partial(jax.jit, static_argnames=("eps", "cout_tile"))
def conv3bn_forward(x_nchw, weight_oihw, conv_bias, gamma, beta,
                    running_mean, running_var, eps=1e-5, cout_tile=128):
    """Conv3BN forward (NCHW in, NCHW out), eval-mode BN folded.

    TODO(synk): training-mode BatchNorm (batch statistics) is not implemented;
    this matches PyTorch .eval() semantics.
    """
    N, Cin, H, W = x_nchw.shape
    Cout = weight_oihw.shape[0]

    # ---- trace-time weight preparation (no per-element work in the kernel) --
    w_fold, b_fold = fold_bn_into_conv(
        weight_oihw, conv_bias, gamma, beta, running_mean, running_var, eps)

    # Lane-friendly channel padding (multiples of 128).
    cin_p = _round_up(Cin, 128)
    cout_p = _round_up(Cout, cout_tile)

    # NCHW -> NHWC once; zero-pad spatial halo (pad=1) and channels.
    x_nhwc = jnp.transpose(x_nchw, (0, 2, 3, 1))
    x_pad = jnp.pad(x_nhwc, ((0, 0), (1, 1), (1, 1), (0, cin_p - Cin)))
    x_bf16 = x_pad.astype(jnp.bfloat16)

    w_pad = jnp.pad(w_fold,
                    ((0, 0), (0, 0), (0, cin_p - Cin), (0, cout_p - Cout)))
    w_bf16 = w_pad.astype(jnp.bfloat16)
    b_pad = jnp.pad(b_fold, ((0, cout_p - Cout),)).reshape(1, cout_p)

    grid = (N, cout_p // cout_tile)

    out_nhwc = pl.pallas_call(
        _conv3bn_kernel,
        out_shape=jax.ShapeDtypeStruct((N, H, W, cout_p), jnp.float32),
        grid_spec=pltpu.PrefetchScalarGridSpec(
            num_scalar_prefetch=0,
            grid=grid,
            in_specs=[
                # full padded plane per image (halo stays on the auto-DMA path)
                pl.BlockSpec((None, H + 2, W + 2, cin_p),
                             lambda n, co: (n, 0, 0, 0)),
                # tiny 3x3 weights, tiled over C_out only
                pl.BlockSpec((3, 3, cin_p, cout_tile),
                             lambda n, co: (0, 0, 0, co)),
                # folded bias
                pl.BlockSpec((1, cout_tile), lambda n, co: (0, co)),
            ],
            out_specs=pl.BlockSpec((None, H, W, cout_tile),
                                   lambda n, co: (n, 0, 0, co)),
            scratch_shapes=[pltpu.VMEM((H * W, cout_tile), jnp.float32)],
        ),
        compiler_params=pltpu.CompilerParams(
            dimension_semantics=("parallel", "parallel"),
            vmem_limit_bytes=48 * 1024 * 1024,
        ),
    )(x_bf16, w_bf16, b_pad)

    # Drop channel padding, back to NCHW for the PyTorch contract.
    return jnp.transpose(out_nhwc[:, :, :, :Cout], (0, 3, 1, 2))


if __name__ == "__main__":
    key = jax.random.PRNGKey(0)
    N, Cin, Cout, H, W = 2, 4, 8, 16, 16
    k1, k2, k3, k4, k5, k6, k7 = jax.random.split(key, 7)

    x = jax.random.normal(k1, (N, Cin, H, W), jnp.float32)
    w = jax.random.normal(k2, (Cout, Cin, 3, 3), jnp.float32) * 0.1
    b = jax.random.normal(k3, (Cout,), jnp.float32) * 0.1
    gamma = 1.0 + 0.1 * jax.random.normal(k4, (Cout,), jnp.float32)
    beta = 0.1 * jax.random.normal(k5, (Cout,), jnp.float32)
    running_mean = 0.1 * jax.random.normal(k6, (Cout,), jnp.float32)
    running_var = jnp.abs(jax.random.normal(k7, (Cout,), jnp.float32)) + 0.5

    y = conv3bn_forward(x, w, b, gamma, beta, running_mean, running_var)
    y = jax.block_until_ready(y)

    # Pure-JAX reference on the same bf16-rounded conv inputs (kernel uses
    # bf16 MXU operands with f32 accumulation).
    w_fold, b_fold = fold_bn_into_conv(w, b, gamma, beta, running_mean,
                                       running_var, 1e-5)
    xh = jnp.transpose(x, (0, 2, 3, 1)).astype(jnp.bfloat16).astype(jnp.float32)
    wh = w_fold.astype(jnp.bfloat16).astype(jnp.float32)
    ref = jax.lax.conv_general_dilated(
        xh, wh, window_strides=(1, 1), padding=((1, 1), (1, 1)),
        dimension_numbers=("NHWC", "HWIO", "NHWC"),
        precision=jax.lax.Precision.HIGHEST,
        preferred_element_type=jnp.float32)
    ref = ref + b_fold[None, None, None, :]
    ref = jnp.where(ref > 0, ref, jnp.exp(jnp.minimum(ref, 0.0)) - 1.0)
    ref = jnp.transpose(ref, (0, 3, 1, 2))

    err = float(jnp.max(jnp.abs(y - ref)))
    assert err < 1e-2, f"max abs err {err}"
    print("KERNEL_OK")
</pallas_src>

<mosaic_0001>
module attributes {stable_mosaic.version = 11 : i64} {
  func.func @_conv3bn_kernel(%arg0: i32, %arg1: i32, %arg2: memref<1x18x18x128xbf16, #tpu.memory_space<vmem>>, %arg3: memref<3x3x128x128xbf16, #tpu.memory_space<vmem>>, %arg4: memref<1x128xf32, #tpu.memory_space<vmem>>, %arg5: memref<1x16x16x128xf32, #tpu.memory_space<vmem>>, %arg6: memref<256x128xf32, #tpu.memory_space<vmem>>) attributes {dimension_semantics = [#tpu.dimension_semantics<parallel>, #tpu.dimension_semantics<parallel>], iteration_bounds = array<i64: 2, 1>, scalar_prefetch = 0 : i64, scratch_operands = 1 : i64, tpu.core_type = #tpu.core_type<tc>, window_params = [{transform_indices = @transform_0, window_bounds = array<i64: 1, 18, 18, 128>}, {transform_indices = @transform_1, window_bounds = array<i64: 3, 3, 128, 128>}, {transform_indices = @transform_2, window_bounds = array<i64: 1, 128>}, {transform_indices = @transform_3, window_bounds = array<i64: 1, 16, 16, 128>}]} {
    %cst = arith.constant 0.000000e+00 : f32
    %0 = vector.broadcast %cst : f32 to vector<256x128xf32>
    %c0 = arith.constant 0 : index
    %c0_0 = arith.constant 0 : index
    %1 = vector.load %arg6[%c0, %c0_0] : memref<256x128xf32, #tpu.memory_space<vmem>>, vector<256x128xf32>
    tpu.vector_store %arg6[%c0, %c0_0], %0 {strides = array<i32>} : memref<256x128xf32, #tpu.memory_space<vmem>>, vector<256x128xf32>,
    %c0_1 = arith.constant 0 : index
    %c0_2 = arith.constant 0 : index
    %c0_3 = arith.constant 0 : index
    %c0_4 = arith.constant 0 : index
    %2 = vector.load %arg2[%c0_1, %c0_2, %c0_3, %c0_4] : memref<1x18x18x128xbf16, #tpu.memory_space<vmem>>, vector<1x16x16x128xbf16>
    %3 = vector.shape_cast %2 : vector<1x16x16x128xbf16> to vector<16x16x128xbf16>
    %c0_5 = arith.constant 0 : index
    %c0_6 = arith.constant 0 : index
    %4 = vector.load %arg6[%c0_5, %c0_6] : memref<256x128xf32, #tpu.memory_space<vmem>>, vector<256x128xf32>
    %5 = vector.shape_cast %3 : vector<16x16x128xbf16> to vector<256x128xbf16>
    %c0_7 = arith.constant 0 : index
    %c0_8 = arith.constant 0 : index
    %c0_9 = arith.constant 0 : index
    %c0_10 = arith.constant 0 : index
    %6 = vector.load %arg3[%c0_7, %c0_8, %c0_9, %c0_10] : memref<3x3x128x128xbf16, #tpu.memory_space<vmem>>, vector<1x1x128x128xbf16>
    %7 = vector.shape_cast %6 : vector<1x1x128x128xbf16> to vector<128x128xbf16>
    %cst_11 = arith.constant dense<0.000000e+00> : vector<256x128xf32>
    %8 = tpu.matmul %5, %7, %cst_11 {dimension_numbers = #tpu.dot_dimension_numbers<[1], [0], [0], [1], [0, 0, 1, 1], [], []>} : vector<256x128xbf16>, vector<128x128xbf16>, vector<256x128xf32> -> vector<256x128xf32>
    %9 = arith.addf %4, %8 : vector<256x128xf32>
    %c0_12 = arith.constant 0 : index
    %c0_13 = arith.constant 0 : index
    %10 = vector.load %arg6[%c0_12, %c0_13] : memref<256x128xf32, #tpu.memory_space<vmem>>, vector<256x128xf32>
    tpu.vector_store %arg6[%c0_12, %c0_13], %9 {strides = array<i32>} : memref<256x128xf32, #tpu.memory_space<vmem>>, vector<256x128xf32>,
    %c0_14 = arith.constant 0 : index
    %c0_15 = arith.constant 0 : index
    %c1 = arith.constant 1 : index
    %c0_16 = arith.constant 0 : index
    %11 = vector.load %arg2[%c0_14, %c0_15, %c1, %c0_16] : memref<1x18x18x128xbf16, #tpu.memory_space<vmem>>, vector<1x16x16x128xbf16>
    %12 = vector.shape_cast %11 : vector<1x16x16x128xbf16> to vector<16x16x128xbf16>
    %c0_17 = arith.constant 0 : index
    %c0_18 = arith.constant 0 : index
    %13 = vector.load %arg6[%c0_17, %c0_18] : memref<256x128xf32, #tpu.memory_space<vmem>>, vector<256x128xf32>
    %14 = vector.shape_cast %12 : vector<16x16x128xbf16> to vector<256x128xbf16>
    %c0_19 = arith.constant 0 : index
    %c1_20 = arith.constant 1 : index
    %c0_21 = arith.constant 0 : index
    %c0_22 = arith.constant 0 : index
    %15 = vector.load %arg3[%c0_19, %c1_20, %c0_21, %c0_22] : memref<3x3x128x128xbf16, #tpu.memory_space<vmem>>, vector<1x1x128x128xbf16>
    %16 = vector.shape_cast %15 : vector<1x1x128x128xbf16> to vector<128x128xbf16>
    %cst_23 = arith.constant dense<0.000000e+00> : vector<256x128xf32>
    %17 = tpu.matmul %14, %16, %cst_23 {dimension_numbers = #tpu.dot_dimension_numbers<[1], [0], [0], [1], [0, 0, 1, 1], [], []>} : vector<256x128xbf16>, vector<128x128xbf16>, vector<256x128xf32> -> vector<256x128xf32>
    %18 = arith.addf %13, %17 : vector<256x128xf32>
    %c0_24 = arith.constant 0 : index
    %c0_25 = arith.constant 0 : index
    %19 = vector.load %arg6[%c0_24, %c0_25] : memref<256x128xf32, #tpu.memory_space<vmem>>, vector<256x128xf32>
    tpu.vector_store %arg6[%c0_24, %c0_25], %18 {strides = array<i32>} : memref<256x128xf32, #tpu.memory_space<vmem>>, vector<256x128xf32>,
    %c0_26 = arith.constant 0 : index
    %c0_27 = arith.constant 0 : index
    %c2 = arith.constant 2 : index
    %c0_28 = arith.constant 0 : index
    %20 = vector.load %arg2[%c0_26, %c0_27, %c2, %c0_28] : memref<1x18x18x128xbf16, #tpu.memory_space<vmem>>, vector<1x16x16x128xbf16>
    %21 = vector.shape_cast %20 : vector<1x16x16x128xbf16> to vector<16x16x128xbf16>
    %c0_29 = arith.constant 0 : index
    %c0_30 = arith.constant 0 : index
    %22 = vector.load %arg6[%c0_29, %c0_30] : memref<256x128xf32, #tpu.memory_space<vmem>>, vector<256x128xf32>
    %23 = vector.shape_cast %21 : vector<16x16x128xbf16> to vector<256x128xbf16>
    %c0_31 = arith.constant 0 : index
    %c2_32 = arith.constant 2 : index
    %c0_33 = arith.constant 0 : index
    %c0_34 = arith.constant 0 : index
    %24 = vector.load %arg3[%c0_31, %c2_32, %c0_33, %c0_34] : memref<3x3x128x128xbf16, #tpu.memory_space<vmem>>, vector<1x1x128x128xbf16>
    %25 = vector.shape_cast %24 : vector<1x1x128x128xbf16> to vector<128x128xbf16>
    %cst_35 = arith.constant dense<0.000000e+00> : vector<256x128xf32>
    %26 = tpu.matmul %23, %25, %cst_35 {dimension_numbers = #tpu.dot_dimension_numbers<[1], [0], [0], [1], [0, 0, 1, 1], [], []>} : vector<256x128xbf16>, vector<128x128xbf16>, vector<256x128xf32> -> vector<256x128xf32>
    %27 = arith.addf %22, %26 : vector<256x128xf32>
    %c0_36 = arith.constant 0 : index
    %c0_37 = arith.constant 0 : index
    %28 = vector.load %arg6[%c0_36, %c0_37] : memref<256x128xf32, #tpu.memory_space<vmem>>, vector<256x128xf32>
    tpu.vector_store %arg6[%c0_36, %c0_37], %27 {strides = array<i32>} : memref<256x128xf32, #tpu.memory_space<vmem>>, vector<256x128xf32>,
    %c0_38 = arith.constant 0 : index
    %c1_39 = arith.constant 1 : index
    %c0_40 = arith.constant 0 : index
    %c0_41 = arith.constant 0 : index
    %29 = vector.load %arg2[%c0_38, %c1_39, %c0_40, %c0_41] : memref<1x18x18x128xbf16, #tpu.memory_space<vmem>>, vector<1x16x16x128xbf16>
    %30 = vector.shape_cast %29 : vector<1x16x16x128xbf16> to vector<16x16x128xbf16>
    %c0_42 = arith.constant 0 : index
    %c0_43 = arith.constant 0 : index
    %31 = vector.load %arg6[%c0_42, %c0_43] : memref<256x128xf32, #tpu.memory_space<vmem>>, vector<256x128xf32>
    %32 = vector.shape_cast %30 : vector<16x16x128xbf16> to vector<256x128xbf16>
    %c1_44 = arith.constant 1 : index
    %c0_45 = arith.constant 0 : index
    %c0_46 = arith.constant 0 : index
    %c0_47 = arith.constant 0 : index
    %33 = vector.load %arg3[%c1_44, %c0_45, %c0_46, %c0_47] : memref<3x3x128x128xbf16, #tpu.memory_space<vmem>>, vector<1x1x128x128xbf16>
    %34 = vector.shape_cast %33 : vector<1x1x128x128xbf16> to vector<128x128xbf16>
    %cst_48 = arith.constant dense<0.000000e+00> : vector<256x128xf32>
    %35 = tpu.matmul %32, %34, %cst_48 {dimension_numbers = #tpu.dot_dimension_numbers<[1], [0], [0], [1], [0, 0, 1, 1], [], []>} : vector<256x128xbf16>, vector<128x128xbf16>, vector<256x128xf32> -> vector<256x128xf32>
    %36 = arith.addf %31, %35 : vector<256x128xf32>
    %c0_49 = arith.constant 0 : index
    %c0_50 = arith.constant 0 : index
    %37 = vector.load %arg6[%c0_49, %c0_50] : memref<256x128xf32, #tpu.memory_space<vmem>>, vector<256x128xf32>
    tpu.vector_store %arg6[%c0_49, %c0_50], %36 {strides = array<i32>} : memref<256x128xf32, #tpu.memory_space<vmem>>, vector<256x128xf32>,
    %c0_51 = arith.constant 0 : index
    %c1_52 = arith.constant 1 : index
    %c1_53 = arith.constant 1 : index
    %c0_54 = arith.constant 0 : index
    %38 = vector.load %arg2[%c0_51, %c1_52, %c1_53, %c0_54] : memref<1x18x18x128xbf16, #tpu.memory_space<vmem>>, vector<1x16x16x128xbf16>
    %39 = vector.shape_cast %38 : vector<1x16x16x128xbf16> to vector<16x16x128xbf16>
    %c0_55 = arith.constant 0 : index
    %c0_56 = arith.constant 0 : index
    %40 = vector.load %arg6[%c0_55, %c0_56] : memref<256x128xf32, #tpu.memory_space<vmem>>, vector<256x128xf32>
    %41 = vector.shape_cast %39 : vector<16x16x128xbf16> to vector<256x128xbf16>
    %c1_57 = arith.constant 1 : index
    %c1_58 = arith.constant 1 : index
    %c0_59 = arith.constant 0 : index
    %c0_60 = arith.constant 0 : index
    %42 = vector.load %arg3[%c1_57, %c1_58, %c0_59, %c0_60] : memref<3x3x128x128xbf16, #tpu.memory_space<vmem>>, vector<1x1x128x128xbf16>
    %43 = vector.shape_cast %42 : vector<1x1x128x128xbf16> to vector<128x128xbf16>
    %cst_61 = arith.constant dense<0.000000e+00> : vector<256x128xf32>
    %44 = tpu.matmul %41, %43, %cst_61 {dimension_numbers = #tpu.dot_dimension_numbers<[1], [0], [0], [1], [0, 0, 1, 1], [], []>} : vector<256x128xbf16>, vector<128x128xbf16>, vector<256x128xf32> -> vector<256x128xf32>
    %45 = arith.addf %40, %44 : vector<256x128xf32>
    %c0_62 = arith.constant 0 : index
    %c0_63 = arith.constant 0 : index
    %46 = vector.load %arg6[%c0_62, %c0_63] : memref<256x128xf32, #tpu.memory_space<vmem>>, vector<256x128xf32>
    tpu.vector_store %arg6[%c0_62, %c0_63], %45 {strides = array<i32>} : memref<256x128xf32, #tpu.memory_space<vmem>>, vector<256x128xf32>,
    %c0_64 = arith.constant 0 : index
    %c1_65 = arith.constant 1 : index
    %c2_66 = arith.constant 2 : index
    %c0_67 = arith.constant 0 : index
    %47 = vector.load %arg2[%c0_64, %c1_65, %c2_66, %c0_67] : memref<1x18x18x128xbf16, #tpu.memory_space<vmem>>, vector<1x16x16x128xbf16>
    %48 = vector.shape_cast %47 : vector<1x16x16x128xbf16> to vector<16x16x128xbf16>
    %c0_68 = arith.constant 0 : index
    %c0_69 = arith.constant 0 : index
    %49 = vector.load %arg6[%c0_68, %c0_69] : memref<256x128xf32, #tpu.memory_space<vmem>>, vector<256x128xf32>
    %50 = vector.shape_cast %48 : vector<16x16x128xbf16> to vector<256x128xbf16>
    %c1_70 = arith.constant 1 : index
    %c2_71 = arith.constant 2 : index
    %c0_72 = arith.constant 0 : index
    %c0_73 = arith.constant 0 : index
    %51 = vector.load %arg3[%c1_70, %c2_71, %c0_72, %c0_73] : memref<3x3x128x128xbf16, #tpu.memory_space<vmem>>, vector<1x1x128x128xbf16>
    %52 = vector.shape_cast %51 : vector<1x1x128x128xbf16> to vector<128x128xbf16>
    %cst_74 = arith.constant dense<0.000000e+00> : vector<256x128xf32>
    %53 = tpu.matmul %50, %52, %cst_74 {dimension_numbers = #tpu.dot_dimension_numbers<[1], [0], [0], [1], [0, 0, 1, 1], [], []>} : vector<256x128xbf16>, vector<128x128xbf16>, vector<256x128xf32> -> vector<256x128xf32>
    %54 = arith.addf %49, %53 : vector<256x128xf32>
    %c0_75 = arith.constant 0 : index
    %c0_76 = arith.constant 0 : index
    %55 = vector.load %arg6[%c0_75, %c0_76] : memref<256x128xf32, #tpu.memory_space<vmem>>, vector<256x128xf32>
    tpu.vector_store %arg6[%c0_75, %c0_76], %54 {strides = array<i32>} : memref<256x128xf32, #tpu.memory_space<vmem>>, vector<256x128xf32>,
    %c0_77 = arith.constant 0 : index
    %c2_78 = arith.constant 2 : index
    %c0_79 = arith.constant 0 : index
    %c0_80 = arith.constant 0 : index
    %56 = vector.load %arg2[%c0_77, %c2_78, %c0_79, %c0_80] : memref<1x18x18x128xbf16, #tpu.memory_space<vmem>>, vector<1x16x16x128xbf16>
    %57 = vector.shape_cast %56 : vector<1x16x16x128xbf16> to vector<16x16x128xbf16>
    %c0_81 = arith.constant 0 : index
    %c0_82 = arith.constant 0 : index
    %58 = vector.load %arg6[%c0_81, %c0_82] : memref<256x128xf32, #tpu.memory_space<vmem>>, vector<256x128xf32>
    %59 = vector.shape_cast %57 : vector<16x16x128xbf16> to vector<256x128xbf16>
    %c2_83 = arith.constant 2 : index
    %c0_84 = arith.constant 0 : index
    %c0_85 = arith.constant 0 : index
    %c0_86 = arith.constant 0 : index
    %60 = vector.load %arg3[%c2_83, %c0_84, %c0_85, %c0_86] : memref<3x3x128x128xbf16, #tpu.memory_space<vmem>>, vector<1x1x128x128xbf16>
    %61 = vector.shape_cast %60 : vector<1x1x128x128xbf16> to vector<128x128xbf16>
    %cst_87 = arith.constant dense<0.000000e+00> : vector<256x128xf32>
    %62 = tpu.matmul %59, %61, %cst_87 {dimension_numbers = #tpu.dot_dimension_numbers<[1], [0], [0], [1], [0, 0, 1, 1], [], []>} : vector<256x128xbf16>, vector<128x128xbf16>, vector<256x128xf32> -> vector<256x128xf32>
    %63 = arith.addf %58, %62 : vector<256x128xf32>
    %c0_88 = arith.constant 0 : index
    %c0_89 = arith.constant 0 : index
    %64 = vector.load %arg6[%c0_88, %c0_89] : memref<256x128xf32, #tpu.memory_space<vmem>>, vector<256x128xf32>
    tpu.vector_store %arg6[%c0_88, %c0_89], %63 {strides = array<i32>} : memref<256x128xf32, #tpu.memory_space<vmem>>, vector<256x128xf32>,
    %c0_90 = arith.constant 0 : index
    %c2_91 = arith.constant 2 : index
    %c1_92 = arith.constant 1 : index
    %c0_93 = arith.constant 0 : index
    %65 = vector.load %arg2[%c0_90, %c2_91, %c1_92, %c0_93] : memref<1x18x18x128xbf16, #tpu.memory_space<vmem>>, vector<1x16x16x128xbf16>
    %66 = vector.shape_cast %65 : vector<1x16x16x128xbf16> to vector<16x16x128xbf16>
    %c0_94 = arith.constant 0 : index
    %c0_95 = arith.constant 0 : index
    %67 = vector.load %arg6[%c0_94, %c0_95] : memref<256x128xf32, #tpu.memory_space<vmem>>, vector<256x128xf32>
    %68 = vector.shape_cast %66 : vector<16x16x128xbf16> to vector<256x128xbf16>
    %c2_96 = arith.constant 2 : index
    %c1_97 = arith.constant 1 : index
    %c0_98 = arith.constant 0 : index
    %c0_99 = arith.constant 0 : index
    %69 = vector.load %arg3[%c2_96, %c1_97, %c0_98, %c0_99] : memref<3x3x128x128xbf16, #tpu.memory_space<vmem>>, vector<1x1x128x128xbf16>
    %70 = vector.shape_cast %69 : vector<1x1x128x128xbf16> to vector<128x128xbf16>
    %cst_100 = arith.constant dense<0.000000e+00> : vector<256x128xf32>
    %71 = tpu.matmul %68, %70, %cst_100 {dimension_numbers = #tpu.dot_dimension_numbers<[1], [0], [0], [1], [0, 0, 1, 1], [], []>} : vector<256x128xbf16>, vector<128x128xbf16>, vector<256x128xf32> -> vector<256x128xf32>
    %72 = arith.addf %67, %71 : vector<256x128xf32>
    %c0_101 = arith.constant 0 : index
    %c0_102 = arith.constant 0 : index
    %73 = vector.load %arg6[%c0_101, %c0_102] : memref<256x128xf32, #tpu.memory_space<vmem>>, vector<256x128xf32>
    tpu.vector_store %arg6[%c0_101, %c0_102], %72 {strides = array<i32>} : memref<256x128xf32, #tpu.memory_space<vmem>>, vector<256x128xf32>,
    %c0_103 = arith.constant 0 : index
    %c2_104 = arith.constant 2 : index
    %c2_105 = arith.constant 2 : index
    %c0_106 = arith.constant 0 : index
    %74 = vector.load %arg2[%c0_103, %c2_104, %c2_105, %c0_106] : memref<1x18x18x128xbf16, #tpu.memory_space<vmem>>, vector<1x16x16x128xbf16>
    %75 = vector.shape_cast %74 : vector<1x16x16x128xbf16> to vector<16x16x128xbf16>
    %c0_107 = arith.constant 0 : index
    %c0_108 = arith.constant 0 : index
    %76 = vector.load %arg6[%c0_107, %c0_108] : memref<256x128xf32, #tpu.memory_space<vmem>>, vector<256x128xf32>
    %77 = vector.shape_cast %75 : vector<16x16x128xbf16> to vector<256x128xbf16>
    %c2_109 = arith.constant 2 : index
    %c2_110 = arith.constant 2 : index
    %c0_111 = arith.constant 0 : index
    %c0_112 = arith.constant 0 : index
    %78 = vector.load %arg3[%c2_109, %c2_110, %c0_111, %c0_112] : memref<3x3x128x128xbf16, #tpu.memory_space<vmem>>, vector<1x1x128x128xbf16>
    %79 = vector.shape_cast %78 : vector<1x1x128x128xbf16> to vector<128x128xbf16>
    %cst_113 = arith.constant dense<0.000000e+00> : vector<256x128xf32>
    %80 = tpu.matmul %77, %79, %cst_113 {dimension_numbers = #tpu.dot_dimension_numbers<[1], [0], [0], [1], [0, 0, 1, 1], [], []>} : vector<256x128xbf16>, vector<128x128xbf16>, vector<256x128xf32> -> vector<256x128xf32>
    %81 = arith.addf %76, %80 : vector<256x128xf32>
    %c0_114 = arith.constant 0 : index
    %c0_115 = arith.constant 0 : index
    %82 = vector.load %arg6[%c0_114, %c0_115] : memref<256x128xf32, #tpu.memory_space<vmem>>, vector<256x128xf32>
    tpu.vector_store %arg6[%c0_114, %c0_115], %81 {strides = array<i32>} : memref<256x128xf32, #tpu.memory_space<vmem>>, vector<256x128xf32>,
    %c0_116 = arith.constant 0 : index
    %c0_117 = arith.constant 0 : index
    %83 = vector.load %arg6[%c0_116, %c0_117] : memref<256x128xf32, #tpu.memory_space<vmem>>, vector<256x128xf32>
    %c0_118 = arith.constant 0 : index
    %c0_119 = arith.constant 0 : index
    %84 = vector.load %arg4[%c0_118, %c0_119] : memref<1x128xf32, #tpu.memory_space<vmem>>, vector<1x128xf32>
    %85 = vector.broadcast %84 : vector<1x128xf32> to vector<256x128xf32>
    %86 = arith.addf %83, %85 : vector<256x128xf32>
    %cst_120 = arith.constant 0.000000e+00 : f32
    %87 = vector.broadcast %cst_120 : f32 to vector<256x128xf32>
    %88 = arith.cmpf ogt, %86, %87 : vector<256x128xf32>
    %cst_121 = arith.constant 0.000000e+00 : f32
    %89 = vector.broadcast %cst_121 : f32 to vector<256x128xf32>
    %90 = arith.minimumf %86, %89 : vector<256x128xf32>
    %91 = math.exp %90 : vector<256x128xf32>
    %cst_122 = arith.constant 1.000000e+00 : f32
    %92 = vector.broadcast %cst_122 : f32 to vector<256x128xf32>
    %93 = arith.subf %91, %92 : vector<256x128xf32>
    %94 = arith.select %88, %86, %93 : vector<256x128xi1>, vector<256x128xf32>
    %95 = vector.shape_cast %94 : vector<256x128xf32> to vector<16x16x128xf32>
    %c0_123 = arith.constant 0 : index
    %c0_124 = arith.constant 0 : index
    %c0_125 = arith.constant 0 : index
    %c0_126 = arith.constant 0 : index
    %96 = vector.load %arg5[%c0_123, %c0_124, %c0_125, %c0_126] : memref<1x16x16x128xf32, #tpu.memory_space<vmem>>, vector<1x16x16x128xf32>
    %97 = vector.shape_cast %96 : vector<1x16x16x128xf32> to vector<16x16x128xf32>
    %98 = vector.shape_cast %95 : vector<16x16x128xf32> to vector<1x16x16x128xf32>
    tpu.vector_store %arg5[%c0_123, %c0_124, %c0_125, %c0_126], %98 {strides = array<i32>} : memref<1x16x16x128xf32, #tpu.memory_space<vmem>>, vector<1x16x16x128xf32>,
    return
  }
  func.func @transform_0(%arg0: i32, %arg1: i32) -> (i32, i32, i32, i32) {
    %c0_i32 = arith.constant 0 : i32
    %c0_i32_0 = arith.constant 0 : i32
    %c0_i32_1 = arith.constant 0 : i32
    %c0_i32_2 = arith.constant 0 : i32
    return %arg0, %c0_i32, %c0_i32_0, %c0_i32_1 : i32, i32, i32, i32
  }
  func.func @transform_1(%arg0: i32, %arg1: i32) -> (i32, i32, i32, i32) {
    %c0_i32 = arith.constant 0 : i32
    %c0_i32_0 = arith.constant 0 : i32
    %c0_i32_1 = arith.constant 0 : i32
    %c0_i32_2 = arith.constant 0 : i32
    return %c0_i32, %c0_i32_0, %c0_i32_1, %arg1 : i32, i32, i32, i32
  }
  func.func @transform_2(%arg0: i32, %arg1: i32) -> (i32, i32) {
    %c0_i32 = arith.constant 0 : i32
    %c0_i32_0 = arith.constant 0 : i32
    return %c0_i32, %arg1 : i32, i32
  }
  func.func @transform_3(%arg0: i32, %arg1: i32) -> (i32, i32, i32, i32) {
    %c0_i32 = arith.constant 0 : i32
    %c0_i32_0 = arith.constant 0 : i32
    %c0_i32_1 = arith.constant 0 : i32
    return %arg0, %c0_i32, %c0_i32_0, %arg1 : i32, i32, i32, i32
  }
}

</mosaic_0001>

<llo_original>
// kernel: conv3bn_forward.1
$region0: #{conv3bn_forward.1}
  #allocation0 [shape = 'u32[]', space=smem, size = 0x4, offset = 0x4, fixed_abs, tag = 'smem constant byte address 0x4 - core index']
  #allocation1 [shape = 'u32[144,128]{1,0:T(1,128)}', space=vmem, size = 0x12000, scoped, tag = 'internal scratch']
  #allocation2 [shape = 'f32[256,128]{1,0:T(8,128)}', space=vmem, size = 0x20000, scoped, tag = 'scratch operand']
  %s0 = inlined_call_operand.vmem [shape: bf16[2,18,18,128], index: 0, kind: input, shape index: {}]
  %s1 = inlined_call_operand.vmem [shape: bf16[3,3,128,128], index: 1, kind: input, shape index: {}]
  %s2 = inlined_call_operand.vmem [shape: f32[1,128], index: 2, kind: input, shape index: {}]
  %s3 = inlined_call_operand.vmem [shape: f32[2,16,16,128], index: 3, kind: output, shape index: {}]
  %s4 = sld [smem:[#allocation0]]
  $region45: #{conv3bn_forward.1} parent=0
    _
  %s6 = ssub.s32 1, %s4
  %s7 = scalar_select 0, %s6, %s4
  loop: start=0, step=1, limit=4
  $region2: #{conv3bn_forward.1} parent=0 // loop_pre_header
    _
  $region3: #{conv3bn_forward.1} parent=0 // loop_header
    %s9 = sphi 0, %s13
    %p10 = scmp.ge.s32.totalorder %s9, 4
    %s16 = sphi 0, %s28
    %s17 = sphi 0, %s24
    %s18 = sphi 0, %s16
    %s19 = sphi 0, %s17
    %s20 = sphi 0, %s18
    %s21 = sphi 0, %s19
    %s31 = sphi 0, %s33
    %s34 = sphi 0, %s31
    %s35 = sphi 0, %s34
    %s51 = sphi 0, %s35
    %s57 = sphi 0, %s59
    %s60 = sphi 0, %s57
    %s61 = sphi 0, %s60
    %s77 = sphi 0, %s61
    %s83 = sphi 0, %s85
    %s86 = sphi 0, %s83
    %s87 = sphi 0, %s86
    %s103 = sphi 0, %s87
    %s111 = sphi 0, %s113
    %s114 = sphi 0, %s111
    %s115 = sphi 0, %s114
    %s131 = sphi 0, %s115
  $region4: #{conv3bn_forward.1} parent=0 // loop_header_branch
    %12 = sbr.rel (%p10) target = $region8
  $region5: #{conv3bn_forward.1} parent=0 // loop_body
    %s14 = ssub.s32 %s9, 1
    %s15 = ssub.s32 %s9, 2
    %s22 = sadd.s32 1, %s17
    %p23 = scmp.ge.s32.totalorder %s22, 1
    %s24 = scalar_select %p23, 0, %s22
    %s25 = sadd.s32 1, %s16
    %s26 = scalar_select %p23, %s25, %s16
    %p27 = scmp.ge.s32.totalorder %s26, 2
    %s28 = scalar_select %p27, 0, %s26
    %s29 = ssub.s32 %s16, %s28
    %p30 = scmp.eq.s32.totalorder %s29, 0
    %s32 = sadd.s32 %s31, 1
    %s33 = scalar_select %p30, %s31, %s32
    %p36 = pneg %p30
    %p37 = scmp.eq.s32.totalorder %s9, 1
    %p38 = por %p36, %p37
    %p39 = scmp.ne.s32.totalorder %s31, %s34
    %p40 = scmp.eq.s32.totalorder %s9, 0
    %p41 = por %p39, %p40
    %p42 = scmp.ne.s32.totalorder %s31, %s34
    %p43 = scmp.eq.s32.totalorder %s14, 1
    %p44 = por %p42, %p43
    %p45 = scmp.ne.s32.totalorder %s34, %s35
    %p46 = scmp.eq.s32.totalorder %s14, 0
    %p47 = por %p45, %p46
    %p48 = scmp.ne.s32.totalorder %s34, %s35
    %p49 = scmp.eq.s32.totalorder %s15, 1
    %p50 = por %p48, %p49
    %p52 = scmp.ne.s32.totalorder %s35, %s51
    %p53 = scmp.eq.s32.totalorder %s15, 0
    %p54 = por %p52, %p53
    %s55 = ssub.s32 %s17, %s24
    %p56 = scmp.eq.s32.totalorder %s55, 0
    %s58 = sadd.s32 %s57, 1
    %s59 = scalar_select %p56, %s57, %s58
    %p62 = pneg %p56
    %p63 = scmp.eq.s32.totalorder %s9, 1
    %p64 = por %p62, %p63
    %p65 = scmp.ne.s32.totalorder %s57, %s60
    %p66 = scmp.eq.s32.totalorder %s9, 0
    %p67 = por %p65, %p66
    %p68 = scmp.ne.s32.totalorder %s57, %s60
    %p69 = scmp.eq.s32.totalorder %s14, 1
    %p70 = por %p68, %p69
    %p71 = scmp.ne.s32.totalorder %s60, %s61
    %p72 = scmp.eq.s32.totalorder %s14, 0
    %p73 = por %p71, %p72
    %p74 = scmp.ne.s32.totalorder %s60, %s61
    %p75 = scmp.eq.s32.totalorder %s15, 1
    %p76 = por %p74, %p75
    %p78 = scmp.ne.s32.totalorder %s61, %s77
    %p79 = scmp.eq.s32.totalorder %s15, 0
    %p80 = por %p78, %p79
    %s81 = ssub.s32 %s17, %s24
    %p82 = scmp.eq.s32.totalorder %s81, 0
    %s84 = sadd.s32 %s83, 1
    %s85 = scalar_select %p82, %s83, %s84
    %p88 = pneg %p82
    %p89 = scmp.eq.s32.totalorder %s9, 1
    %p90 = por %p88, %p89
    %p91 = scmp.ne.s32.totalorder %s83, %s86
    %p92 = scmp.eq.s32.totalorder %s9, 0
    %p93 = por %p91, %p92
    %p94 = scmp.ne.s32.totalorder %s83, %s86
    %p95 = scmp.eq.s32.totalorder %s14, 1
    %p96 = por %p94, %p95
    %p97 = scmp.ne.s32.totalorder %s86, %s87
    %p98 = scmp.eq.s32.totalorder %s14, 0
    %p99 = por %p97, %p98
    %p100 = scmp.ne.s32.totalorder %s86, %s87
    %p101 = scmp.eq.s32.totalorder %s15, 1
    %p102 = por %p100, %p101
    %p104 = scmp.ne.s32.totalorder %s87, %s103
    %p105 = scmp.eq.s32.totalorder %s15, 0
    %p106 = por %p104, %p105
    %s107 = ssub.s32 %s16, %s28
    %s108 = ssub.s32 %s17, %s24
    %s109 = sor.u32 %s107, %s108
    %p110 = scmp.eq.s32.totalorder %s109, 0
    %s112 = sadd.s32 %s111, 1
    %s113 = scalar_select %p110, %s111, %s112
    %p116 = pneg %p110
    %p117 = scmp.eq.s32.totalorder %s9, 1
    %p118 = por %p116, %p117
    %p119 = scmp.ne.s32.totalorder %s111, %s114
    %p120 = scmp.eq.s32.totalorder %s9, 0
    %p121 = por %p119, %p120
    %p122 = scmp.ne.s32.totalorder %s111, %s114
    %p123 = scmp.eq.s32.totalorder %s14, 1
    %p124 = por %p122, %p123
    %p125 = scmp.ne.s32.totalorder %s114, %s115
    %p126 = scmp.eq.s32.totalorder %s14, 0
    %p127 = por %p125, %p126
    %p128 = scmp.ne.s32.totalorder %s114, %s115
    %p129 = scmp.eq.s32.totalorder %s15, 1
    %p130 = por %p128, %p129
    %p132 = scmp.ne.s32.totalorder %s115, %s131
    %p133 = scmp.eq.s32.totalorder %s15, 0
    %p134 = por %p132, %p133
    %p135 = scmp.le.s32.totalorder 1, %s9
    %p136 = scmp.lt.s32.totalorder %s9, 3
    %p137 = pnand %p135, %p136
    %p138 = pneg %p137
    // Predicated region
    $region9: #{conv3bn_forward.1} parent=5 // pred_check
      _
    $region10: #{conv3bn_forward.1} parent=5 // pred_check_branch
      %140 = sbr.rel (%p137) target = $region12
    $region11: #{conv3bn_forward.1} parent=5 // pred_region
      %s141 = ssub.s32 %s9, 1
      // Predicated region
      $region13: #{conv3bn_forward.1} parent=11 // pred_check
        %p142 = pneg %p73
      $region14: #{conv3bn_forward.1} parent=11 // pred_check_branch
        %144 = sbr.rel (%p142) target = $region16
      $region15: #{conv3bn_forward.1} parent=11 // pred_region
        %p145 = scmp.lt.s32.totalorder %s19, 0
        %s146 = scalar_select %p145, %s19, 0
        %s147 = smul.addr %s146, 4
        %s148 = scalar_lea.vmem %s1, %s147
      $region16: #{conv3bn_forward.1} parent=11 // pred_fallthru
        _
      // Predicated region
      $region17: #{conv3bn_forward.1} parent=11 // pred_check
        %p149 = pneg %p99
      $region18: #{conv3bn_forward.1} parent=11 // pred_check_branch
        %151 = sbr.rel (%p149) target = $region20
      $region19: #{conv3bn_forward.1} parent=11 // pred_region
        %p152 = scmp.lt.s32.totalorder %s19, 0
        %s153 = scalar_select %p152, %s19, 0
        %s154 = scalar_lea.vmem %s2, %s153
      $region20: #{conv3bn_forward.1} parent=11 // pred_fallthru
        _
    $region12: #{conv3bn_forward.1} parent=5 // pred_fallthru
      _
    %p155 = scmp.lt.s32.totalorder %s9, 2
    // Predicated region
    $region21: #{conv3bn_forward.1} parent=5 // pred_check
      %p156 = pneg %p155
    $region22: #{conv3bn_forward.1} parent=5 // pred_check_branch
      %158 = sbr.rel (%p156) target = $region24
    $region23: #{conv3bn_forward.1} parent=5 // pred_region
      // Predicated region
      $region25: #{conv3bn_forward.1} parent=23 // pred_check
        %p159 = pneg %p41
      $region26: #{conv3bn_forward.1} parent=23 // pred_check_branch
        %161 = sbr.rel (%p159) target = $region28
      $region27: #{conv3bn_forward.1} parent=23 // pred_region
        %p162 = scmp.lt.s32.totalorder %s16, 1
        %s163 = scalar_select %p162, %s16, 1
        %s164 = smul.addr %s163, 54
        %s165 = smul.addr %s164, 4
        %s166 = scalar_lea.vmem %s0, %s165
      $region28: #{conv3bn_forward.1} parent=23 // pred_fallthru
        _
    $region24: #{conv3bn_forward.1} parent=5 // pred_fallthru
      _
    %p167 = scmp.le.s32.totalorder 1, %s9
    %p168 = scmp.lt.s32.totalorder %s9, 3
    %p169 = pnand %p167, %p168
    %p170 = pneg %p169
    // Predicated region
    $region29: #{conv3bn_forward.1} parent=5 // pred_check
      _
    $region30: #{conv3bn_forward.1} parent=5 // pred_check_branch
      %172 = sbr.rel (%p169) target = $region32
    $region31: #{conv3bn_forward.1} parent=5 // pred_region
      %s173 = ssub.s32 %s9, 1
      %p174 = scmp.lt.s32.totalorder %s18, 1
      %s175 = scalar_select %p174, %s18, 1
      %s176 = smul.addr %s175, 54
      %s177 = smul.addr %s176, 4
      %s178 = scalar_lea.vmem %s0, %s177
      %p179 = pneg %p47
      %p180 = pneg %p44
      %p181 = scmp.lt.s32.totalorder %s19, 0
      %s182 = scalar_select %p181, %s19, 0
      %s183 = smul.addr %s182, 4
      %s184 = scalar_lea.vmem %s1, %s183
      %p185 = pneg %p73
      %p186 = pneg %p70
      %p187 = scmp.lt.s32.totalorder %s19, 0
      %s188 = scalar_select %p187, %s19, 0
      %s189 = scalar_lea.vmem %s2, %s188
      %p190 = pneg %p99
      %p191 = pneg %p96
      %p192 = pneg %p127
      %p193 = pneg %p124
      %p194 = scmp.lt.s32.totalorder %s18, 1
      %s195 = scalar_select %p194, %s18, 1
      %p196 = scmp.lt.s32.totalorder %s19, 0
      %s197 = scalar_select %p196, %s19, 0
      %s198 = smul.addr %s195, 32
      %s199 = sadd.s32 %s197, %s198
      %s200 = smul.addr %s199, 8
      %s201 = scalar_lea.vmem %s3, %s200
      %p202 = scmp.lt.s32.totalorder %s18, 1
      %s203 = scalar_select %p202, %s18, 1
      %s204 = smul.addr %s203, 54
      %s205 = smul.addr %s204, 4
      %s206 = scalar_lea.vmem %s0, %s205
      %p207 = scmp.lt.s32.totalorder %s19, 0
      %s208 = scalar_select %p207, %s19, 0
      %s209 = smul.addr %s208, 4
      %s210 = scalar_lea.vmem %s1, %s209
      %p211 = scmp.lt.s32.totalorder %s19, 0
      %s212 = scalar_select %p211, %s19, 0
      %s213 = scalar_lea.vmem %s2, %s212
      %p214 = scmp.lt.s32.totalorder %s18, 1
      %s215 = scalar_select %p214, %s18, 1
      %p216 = scmp.lt.s32.totalorder %s19, 0
      %s217 = scalar_select %p216, %s19, 0
      %s218 = smul.addr %s215, 32
      %s219 = sadd.s32 %s217, %s218
      %s220 = smul.addr %s219, 8
      %s221 = scalar_lea.vmem %s3, %s220
      %223 = vst [vmem:[#allocation2] sm:$0xff] 0.0
      %224 = vst [vmem:[#allocation2 + $0x8] sm:$0xff] 0.0
      %225 = vst [vmem:[#allocation2 + $0x10] sm:$0xff] 0.0
      %226 = vst [vmem:[#allocation2 + $0x18] sm:$0xff] 0.0
      %227 = vst [vmem:[#allocation2 + $0x20] sm:$0xff] 0.0
      %228 = vst [vmem:[#allocation2 + $0x28] sm:$0xff] 0.0
      %229 = vst [vmem:[#allocation2 + $0x30] sm:$0xff] 0.0
      %230 = vst [vmem:[#allocation2 + $0x38] sm:$0xff] 0.0
      %231 = vst [vmem:[#allocation2 + $0x40] sm:$0xff] 0.0
      %232 = vst [vmem:[#allocation2 + $0x48] sm:$0xff] 0.0
      %233 = vst [vmem:[#allocation2 + $0x50] sm:$0xff] 0.0
      %234 = vst [vmem:[#allocation2 + $0x58] sm:$0xff] 0.0
      %235 = vst [vmem:[#allocation2 + $0x60] sm:$0xff] 0.0
      %236 = vst [vmem:[#allocation2 + $0x68] sm:$0xff] 0.0
      %237 = vst [vmem:[#allocation2 + $0x70] sm:$0xff] 0.0
      %238 = vst [vmem:[#allocation2 + $0x78] sm:$0xff] 0.0
      %239 = vst [vmem:[#allocation2 + $0x80] sm:$0xff] 0.0
      %240 = vst [vmem:[#allocation2 + $0x88] sm:$0xff] 0.0
      %241 = vst [vmem:[#allocation2 + $0x90] sm:$0xff] 0.0
      %242 = vst [vmem:[#allocation2 + $0x98] sm:$0xff] 0.0
      %243 = vst [vmem:[#allocation2 + $0xa0] sm:$0xff] 0.0
      %244 = vst [vmem:[#allocation2 + $0xa8] sm:$0xff] 0.0
      %245 = vst [vmem:[#allocation2 + $0xb0] sm:$0xff] 0.0
      %246 = vst [vmem:[#allocation2 + $0xb8] sm:$0xff] 0.0
      %247 = vst [vmem:[#allocation2 + $0xc0] sm:$0xff] 0.0
      %248 = vst [vmem:[#allocation2 + $0xc8] sm:$0xff] 0.0
      %249 = vst [vmem:[#allocation2 + $0xd0] sm:$0xff] 0.0
      %250 = vst [vmem:[#allocation2 + $0xd8] sm:$0xff] 0.0
      %251 = vst [vmem:[#allocation2 + $0xe0] sm:$0xff] 0.0
      %252 = vst [vmem:[#allocation2 + $0xe8] sm:$0xff] 0.0
      %253 = vst [vmem:[#allocation2 + $0xf0] sm:$0xff] 0.0
      %254 = vst [vmem:[#allocation2 + $0xf8] sm:$0xff] 0.0
      %v255 = vld [vmem:[%s206] sm:$0xf]
      %v256 = vld [vmem:[%s206 + $0x4] sm:$0xf]
      %v257 = vld [vmem:[%s206 + $0xc] sm:$0xf]
      %v258 = vld [vmem:[%s206 + $0x10] sm:$0xf]
      %v259 = vld [vmem:[%s206 + $0x18] sm:$0xf]
      %v260 = vld [vmem:[%s206 + $0x1c] sm:$0xf]
      %v261 = vld [vmem:[%s206 + $0x24] sm:$0xf]
      %v262 = vld [vmem:[%s206 + $0x28] sm:$0xf]
      %v263 = vld [vmem:[%s206 + $0x30] sm:$0xf]
      %v264 = vld [vmem:[%s206 + $0x34] sm:$0xf]
      %v265 = vld [vmem:[%s206 + $0x3c] sm:$0xf]
      %v266 = vld [vmem:[%s206 + $0x40] sm:$0xf]
      %v267 = vld [vmem:[%s206 + $0x48] sm:$0xf]
      %v268 = vld [vmem:[%s206 + $0x4c] sm:$0xf]
      %v269 = vld [vmem:[%s206 + $0x54] sm:$0xf]
      %v270 = vld [vmem:[%s206 + $0x58] sm:$0xf]
      %v271 = vld [vmem:[%s206 + $0x60] sm:$0xf]
      %v272 = vld [vmem:[%s206 + $0x64] sm:$0xf]
      %v273 = vld [vmem:[%s206 + $0x6c] sm:$0xf]
      %v274 = vld [vmem:[%s206 + $0x70] sm:$0xf]
      %v275 = vld [vmem:[%s206 + $0x78] sm:$0xf]
      %v276 = vld [vmem:[%s206 + $0x7c] sm:$0xf]
      %v277 = vld [vmem:[%s206 + $0x84] sm:$0xf]
      %v278 = vld [vmem:[%s206 + $0x88] sm:$0xf]
      %v279 = vld [vmem:[%s206 + $0x90] sm:$0xf]
      %v280 = vld [vmem:[%s206 + $0x94] sm:$0xf]
      %v281 = vld [vmem:[%s206 + $0x9c] sm:$0xf]
      %v282 = vld [vmem:[%s206 + $0xa0] sm:$0xf]
      %v283 = vld [vmem:[%s206 + $0xa8] sm:$0xf]
      %v284 = vld [vmem:[%s206 + $0xac] sm:$0xf]
      %v285 = vld [vmem:[%s206 + $0xb4] sm:$0xf]
      %v286 = vld [vmem:[%s206 + $0xb8] sm:$0xf]
      %v287 = vld [vmem:[#allocation2] sm:$0xff]
      %v288 = vld [vmem:[#allocation2 + $0x8] sm:$0xff]
      %v289 = vld [vmem:[#allocation2 + $0x10] sm:$0xff]
      %v290 = vld [vmem:[#allocation2 + $0x18] sm:$0xff]
      %v291 = vld [vmem:[#allocation2 + $0x20] sm:$0xff]
      %v292 = vld [vmem:[#allocation2 + $0x28] sm:$0xff]
      %v293 = vld [vmem:[#allocation2 + $0x30] sm:$0xff]
      %v294 = vld [vmem:[#allocation2 + $0x38] sm:$0xff]
      %v295 = vld [vmem:[#allocation2 + $0x40] sm:$0xff]
      %v296 = vld [vmem:[#allocation2 + $0x48] sm:$0xff]
      %v297 = vld [vmem:[#allocation2 + $0x50] sm:$0xff]
      %v298 = vld [vmem:[#allocation2 + $0x58] sm:$0xff]
      %v299 = vld [vmem:[#allocation2 + $0x60] sm:$0xff]
      %v300 = vld [vmem:[#allocation2 + $0x68] sm:$0xff]
      %v301 = vld [vmem:[#allocation2 + $0x70] sm:$0xff]
      %v302 = vld [vmem:[#allocation2 + $0x78] sm:$0xff]
      %v303 = vld [vmem:[#allocation2 + $0x80] sm:$0xff]
      %v304 = vld [vmem:[#allocation2 + $0x88] sm:$0xff]
      %v305 = vld [vmem:[#allocation2 + $0x90] sm:$0xff]
      %v306 = vld [vmem:[#allocation2 + $0x98] sm:$0xff]
      %v307 = vld [vmem:[#allocation2 + $0xa0] sm:$0xff]
      %v308 = vld [vmem:[#allocation2 + $0xa8] sm:$0xff]
      %v309 = vld [vmem:[#allocation2 + $0xb0] sm:$0xff]
      %v310 = vld [vmem:[#allocation2 + $0xb8] sm:$0xff]
      %v311 = vld [vmem:[#allocation2 + $0xc0] sm:$0xff]
      %v312 = vld [vmem:[#allocation2 + $0xc8] sm:$0xff]
      %v313 = vld [vmem:[#allocation2 + $0xd0] sm:$0xff]
      %v314 = vld [vmem:[#allocation2 + $0xd8] sm:$0xff]
      %v315 = vld [vmem:[#allocation2 + $0xe0] sm:$0xff]
      %v316 = vld [vmem:[#allocation2 + $0xe8] sm:$0xff]
      %v317 = vld [vmem:[#allocation2 + $0xf0] sm:$0xff]
      %v318 = vld [vmem:[#allocation2 + $0xf8] sm:$0xff]
      %v319 = vld [vmem:[%s210] sm:$0xf]
      %v320 = vld [vmem:[%s210 + $0x4] sm:$0xf]
      %v321 = vld [vmem:[%s210 + $0x8] sm:$0xf]
      %v322 = vld [vmem:[%s210 + $0xc] sm:$0xf]
      %v323 = vld [vmem:[%s210 + $0x10] sm:$0xf]
      %v324 = vld [vmem:[%s210 + $0x14] sm:$0xf]
      %v325 = vld [vmem:[%s210 + $0x18] sm:$0xf]
      %v326 = vld [vmem:[%s210 + $0x1c] sm:$0xf]
      %v327 = vld [vmem:[%s210 + $0x20] sm:$0xf]
      %v328 = vld [vmem:[%s210 + $0x24] sm:$0xf]
      %v329 = vld [vmem:[%s210 + $0x28] sm:$0xf]
      %v330 = vld [vmem:[%s210 + $0x2c] sm:$0xf]
      %v331 = vld [vmem:[%s210 + $0x30] sm:$0xf]
      %v332 = vld [vmem:[%s210 + $0x34] sm:$0xf]
      %v333 = vld [vmem:[%s210 + $0x38] sm:$0xf]
      %v334 = vld [vmem:[%s210 + $0x3c] sm:$0xf]
      %v367 = vunpack.c.l.b16 %v255
      %v368 = vunpack.c.l.b16 %v256
      %v369 = vunpack.c.l.b16 %v257
      %v370 = vunpack.c.l.b16 %v258
      %v371 = vunpack.c.l.b16 %v259
      %v372 = vunpack.c.l.b16 %v260
      %v373 = vunpack.c.l.b16 %v261
      %v374 = vunpack.c.l.b16 %v262
      %v375 = vunpack.c.l.b16 %v263
      %v376 = vunpack.c.l.b16 %v264
      %v377 = vunpack.c.l.b16 %v265
      %v378 = vunpack.c.l.b16 %v266
      %v379 = vunpack.c.l.b16 %v267
      %v380 = vunpack.c.l.b16 %v268
      %v381 = vunpack.c.l.b16 %v269
      %v382 = vunpack.c.l.b16 %v270
      %v383 = vunpack.c.l.b16 %v271
      %v384 = vunpack.c.l.b16 %v272
      %v385 = vunpack.c.l.b16 %v273
      %v386 = vunpack.c.l.b16 %v274
      %v387 = vunpack.c.l.b16 %v275
      %v388 = vunpack.c.l.b16 %v276
      %v389 = vunpack.c.l.b16 %v277
      %v390 = vunpack.c.l.b16 %v278
      %v391 = vunpack.c.l.b16 %v279
      %v392 = vunpack.c.l.b16 %v280
      %v393 = vunpack.c.l.b16 %v281
      %v394 = vunpack.c.l.b16 %v282
      %v395 = vunpack.c.l.b16 %v283
      %v396 = vunpack.c.l.b16 %v284
      %v397 = vunpack.c.l.b16 %v285
      %v398 = vunpack.c.l.b16 %v286
      %v399 = vpack.c.b16 %v368, %v367
      %v400 = vpack.c.b16 %v370, %v369
      %v401 = vpack.c.b16 %v372, %v371
      %v402 = vpack.c.b16 %v374, %v373
      %v403 = vpack.c.b16 %v376, %v375
      %v404 = vpack.c.b16 %v378, %v377
      %v405 = vpack.c.b16 %v380, %v379
      %v406 = vpack.c.b16 %v382, %v381
      %v407 = vpack.c.b16 %v384, %v383
      %v408 = vpack.c.b16 %v386, %v385
      %v409 = vpack.c.b16 %v388, %v387
      %v410 = vpack.c.b16 %v390, %v389
      %v411 = vpack.c.b16 %v392, %v391
      %v412 = vpack.c.b16 %v394, %v393
      %v413 = vpack.c.b16 %v396, %v395
      %v414 = vpack.c.b16 %v398, %v397
      %v447 = vunpack.c.l.b16 %v319
      %v448 = vunpack.c.l.b16 %v320
      %v449 = vunpack.c.l.b16 %v321
      %v450 = vunpack.c.l.b16 %v322
      %v451 = vunpack.c.l.b16 %v323
      %v452 = vunpack.c.l.b16 %v324
      %v453 = vunpack.c.l.b16 %v325
      %v454 = vunpack.c.l.b16 %v326
      %v455 = vunpack.c.l.b16 %v327
      %v456 = vunpack.c.l.b16 %v328
      %v457 = vunpack.c.l.b16 %v329
      %v458 = vunpack.c.l.b16 %v330
      %v459 = vunpack.c.l.b16 %v331
      %v460 = vunpack.c.l.b16 %v332
      %v461 = vunpack.c.l.b16 %v333
      %v462 = vunpack.c.l.b16 %v334
      %v463 = vpack.c.b16 %v448, %v447
      %v464 = vpack.c.b16 %v450, %v449
      %v465 = vpack.c.b16 %v452, %v451
      %v466 = vpack.c.b16 %v454, %v453
      %v467 = vpack.c.b16 %v456, %v455
      %v468 = vpack.c.b16 %v458, %v457
      %v469 = vpack.c.b16 %v460, %v459
      %v470 = vpack.c.b16 %v462, %v461
      %479 = vmatprep.subr.bf16.mxu0 0
      %480 = vmatpush1.bf16.msra.mxu0 %v470
      %481 = vmatprep.subr.bf16.mxu0 0
      %482 = vmatpush1.bf16.msra.mxu0 %v469
      %483 = vmatprep.subr.bf16.mxu0 0
      %484 = vmatpush1.bf16.msra.mxu0 %v468
      %485 = vmatprep.subr.bf16.mxu0 0
      %486 = vmatpush1.bf16.msra.mxu0 %v467
      %487 = vmatprep.subr.bf16.mxu0 0
      %488 = vmatpush1.bf16.msra.mxu0 %v466
      %489 = vmatprep.subr.bf16.mxu0 0
      %490 = vmatpush1.bf16.msra.mxu0 %v465
      %491 = vmatprep.subr.bf16.mxu0 0
      %492 = vmatpush1.bf16.msra.mxu0 %v464
      %493 = vmatprep.subr.bf16.mxu0 0
      %494 = vmatpush1.bf16.msra.mxu0 %v463
      %495 = vmatprep.subr.bf16.mxu0 0
      %496 = vmatpush2.bf16.msra.mxu0 0
      %497 = vmatprep.subr.bf16.mxu0 0
      %498 = vmatpush2.bf16.msra.mxu0 0
      %499 = vmatprep.subr.bf16.mxu0 0
      %500 = vmatpush2.bf16.msra.mxu0 0
      %501 = vmatprep.subr.bf16.mxu0 0
      %502 = vmatpush2.bf16.msra.mxu0 0
      %503 = vmatprep.subr.bf16.mxu0 0
      %504 = vmatpush2.bf16.msra.mxu0 0
      %505 = vmatprep.subr.bf16.mxu0 0
      %506 = vmatpush2.bf16.msra.mxu0 0
      %507 = vmatprep.subr.bf16.mxu0 0
      %508 = vmatpush2.bf16.msra.mxu0 0
      %509 = vmatprep.subr.bf16.mxu0 0
      %510 = vmatpush2.bf16.msra.mxu0 0
      %511 = vmatprep.mubr.bf16.mxu0 0
      %512 = vmatmul.mubr.bf16.gmra.mxu0 %v399
      %v513 = vpop.f32.mrf.mxu0
      %v514 = vadd.f32 0.0, %v513
      %v515 = vpop.f32.mrf.mxu0
      %v516 = vpop.f32.mrf.mxu0
      %v517 = vadd.f32 0.0, %v516
      %v518 = vpop.f32.mrf.mxu0
      %519 = vmatprep.mubr.bf16.mxu0 0
      %520 = vmatmul.mubr.bf16.gmra.mxu0 %v400
      %v521 = vpop.f32.mrf.mxu0
      %v522 = vadd.f32 0.0, %v521
      %v523 = vpop.f32.mrf.mxu0
      %v524 = vpop.f32.mrf.mxu0
      %v525 = vadd.f32 0.0, %v524
      %v526 = vpop.f32.mrf.mxu0
      %527 = vmatprep.mubr.bf16.mxu0 0
      %528 = vmatmul.mubr.bf16.gmra.mxu0 %v401
      %v529 = vpop.f32.mrf.mxu0
      %v530 = vadd.f32 0.0, %v529
      %v531 = vpop.f32.mrf.mxu0
      %v532 = vpop.f32.mrf.mxu0
      %v533 = vadd.f32 0.0, %v532
      %v534 = vpop.f32.mrf.mxu0
      %535 = vmatprep.mubr.bf16.mxu0 0
      %536 = vmatmul.mubr.bf16.gmra.mxu0 %v402
      %v537 = vpop.f32.mrf.mxu0
      %v538 = vadd.f32 0.0, %v537
      %v539 = vpop.f32.mrf.mxu0
      %v540 = vpop.f32.mrf.mxu0
      %v541 = vadd.f32 0.0, %v540
      %v542 = vpop.f32.mrf.mxu0
      %543 = vmatprep.mubr.bf16.mxu0 0
      %544 = vmatmul.mubr.bf16.gmra.mxu0 %v403
      %v545 = vpop.f32.mrf.mxu0
      %v546 = vadd.f32 0.0, %v545
      %v547 = vpop.f32.mrf.mxu0
      %v548 = vpop.f32.mrf.mxu0
      %v549 = vadd.f32 0.0, %v548
      %v550 = vpop.f32.mrf.mxu0
      %551 = vmatprep.mubr.bf16.mxu0 0
      %552 = vmatmul.mubr.bf16.gmra.mxu0 %v404
      %v553 = vpop.f32.mrf.mxu0
      %v554 = vadd.f32 0.0, %v553
      %v555 = vpop.f32.mrf.mxu0
      %v556 = vpop.f32.mrf.mxu0
      %v557 = vadd.f32 0.0, %v556
      %v558 = vpop.f32.mrf.mxu0
      %559 = vmatprep.mubr.bf16.mxu0 0
      %560 = vmatmul.mubr.bf16.gmra.mxu0 %v405
      %v561 = vpop.f32.mrf.mxu0
      %v562 = vadd.f32 0.0, %v561
      %v563 = vpop.f32.mrf.mxu0
      %v564 = vpop.f32.mrf.mxu0
      %v565 = vadd.f32 0.0, %v564
      %v566 = vpop.f32.mrf.mxu0
      %567 = vmatprep.mubr.bf16.mxu0 0
      %568 = vmatmul.mubr.bf16.gmra.mxu0 %v406
      %v569 = vpop.f32.mrf.mxu0
      %v570 = vadd.f32 0.0, %v569
      %v571 = vpop.f32.mrf.mxu0
      %v572 = vpop.f32.mrf.mxu0
      %v573 = vadd.f32 0.0, %v572
      %v574 = vpop.f32.mrf.mxu0
      %575 = vmatprep.mubr.bf16.mxu0 0
      %576 = vmatmul.mubr.bf16.gmra.mxu0 %v407
      %v577 = vpop.f32.mrf.mxu0
      %v578 = vadd.f32 0.0, %v577
      %v579 = vpop.f32.mrf.mxu0
      %v580 = vpop.f32.mrf.mxu0
      %v581 = vadd.f32 0.0, %v580
      %v582 = vpop.f32.mrf.mxu0
      %583 = vmatprep.mubr.bf16.mxu0 0
      %584 = vmatmul.mubr.bf16.gmra.mxu0 %v408
      %v585 = vpop.f32.mrf.mxu0
      %v586 = vadd.f32 0.0, %v585
      %v587 = vpop.f32.mrf.mxu0
      %v588 = vpop.f32.mrf.mxu0
      %v589 = vadd.f32 0.0, %v588
      %v590 = vpop.f32.mrf.mxu0
      %591 = vmatprep.mubr.bf16.mxu0 0
      %592 = vmatmul.mubr.bf16.gmra.mxu0 %v409
      %v593 = vpop.f32.mrf.mxu0
      %v594 = vadd.f32 0.0, %v593
      %v595 = vpop.f32.mrf.mxu0
      %v596 = vpop.f32.mrf.mxu0
      %v597 = vadd.f32 0.0, %v596
      %v598 = vpop.f32.mrf.mxu0
      %599 = vmatprep.mubr.bf16.mxu0 0
      %600 = vmatmul.mubr.bf16.gmra.mxu0 %v410
      %v601 = vpop.f32.mrf.mxu0
      %v602 = vadd.f32 0.0, %v601
      %v603 = vpop.f32.mrf.mxu0
      %v604 = vpop.f32.mrf.mxu0
      %v605 = vadd.f32 0.0, %v604
      %v606 = vpop.f32.mrf.mxu0
      %607 = vmatprep.mubr.bf16.mxu0 0
      %608 = vmatmul.mubr.bf16.gmra.mxu0 %v411
      %v609 = vpop.f32.mrf.mxu0
      %v610 = vadd.f32 0.0, %v609
      %v611 = vpop.f32.mrf.mxu0
      %v612 = vpop.f32.mrf.mxu0
      %v613 = vadd.f32 0.0, %v612
      %v614 = vpop.f32.mrf.mxu0
      %615 = vmatprep.mubr.bf16.mxu0 0
      %616 = vmatmul.mubr.bf16.gmra.mxu0 %v412
      %v617 = vpop.f32.mrf.mxu0
      %v618 = vadd.f32 0.0, %v617
      %v619 = vpop.f32.mrf.mxu0
      %v620 = vpop.f32.mrf.mxu0
      %v621 = vadd.f32 0.0, %v620
      %v622 = vpop.f32.mrf.mxu0
      %623 = vmatprep.mubr.bf16.mxu0 0
      %624 = vmatmul.mubr.bf16.gmra.mxu0 %v413
      %v625 = vpop.f32.mrf.mxu0
      %v626 = vadd.f32 0.0, %v625
      %v627 = vpop.f32.mrf.mxu0
      %v628 = vpop.f32.mrf.mxu0
      %v629 = vadd.f32 0.0, %v628
      %v630 = vpop.f32.mrf.mxu0
      %631 = vmatprep.mubr.bf16.mxu0 0
      %632 = vmatmul.mubr.bf16.gmra.mxu0 %v414
      %v633 = vpop.f32.mrf.mxu0
      %v634 = vadd.f32 0.0, %v633
      %v635 = vpop.f32.mrf.mxu0
      %v636 = vpop.f32.mrf.mxu0
      %v637 = vadd.f32 0.0, %v636
      %v638 = vpop.f32.mrf.mxu0
      %639 = vdwg.mxu0
      %v640 = vadd.f32 %v287, %v514
      %v641 = vadd.f32 %v288, %v517
      %v642 = vadd.f32 %v289, %v522
      %v643 = vadd.f32 %v290, %v525
      %v644 = vadd.f32 %v291, %v530
      %v645 = vadd.f32 %v292, %v533
      %v646 = vadd.f32 %v293, %v538
      %v647 = vadd.f32 %v294, %v541
      %v648 = vadd.f32 %v295, %v546
      %v649 = vadd.f32 %v296, %v549
      %v650 = vadd.f32 %v297, %v554
      %v651 = vadd.f32 %v298, %v557
      %v652 = vadd.f32 %v299, %v562
      %v653 = vadd.f32 %v300, %v565
      %v654 = vadd.f32 %v301, %v570
      %v655 = vadd.f32 %v302, %v573
      %v656 = vadd.f32 %v303, %v578
      %v657 = vadd.f32 %v304, %v581
      %v658 = vadd.f32 %v305, %v586
      %v659 = vadd.f32 %v306, %v589
      %v660 = vadd.f32 %v307, %v594
      %v661 = vadd.f32 %v308, %v597
      %v662 = vadd.f32 %v309, %v602
      %v663 = vadd.f32 %v310, %v605
      %v664 = vadd.f32 %v311, %v610
      %v665 = vadd.f32 %v312, %v613
      %v666 = vadd.f32 %v313, %v618
      %v667 = vadd.f32 %v314, %v621
      %v668 = vadd.f32 %v315, %v626
      %v669 = vadd.f32 %v316, %v629
      %v670 = vadd.f32 %v317, %v634
      %v671 = vadd.f32 %v318, %v637
      %672 = vst [vmem:[#allocation2] sm:$0xff] %v640
      %673 = vst [vmem:[#allocation2 + $0x8] sm:$0xff] %v641
      %674 = vst [vmem:[#allocation2 + $0x10] sm:$0xff] %v642
      %675 = vst [vmem:[#allocation2 + $0x18] sm:$0xff] %v643
      %676 = vst [vmem:[#allocation2 + $0x20] sm:$0xff] %v644
      %677 = vst [vmem:[#allocation2 + $0x28] sm:$0xff] %v645
      %678 = vst [vmem:[#allocation2 + $0x30] sm:$0xff] %v646
      %679 = vst [vmem:[#allocation2 + $0x38] sm:$0xff] %v647
      %680 = vst [vmem:[#allocation2 + $0x40] sm:$0xff] %v648
      %681 = vst [vmem:[#allocation2 + $0x48] sm:$0xff] %v649
      %682 = vst [vmem:[#allocation2 + $0x50] sm:$0xff] %v650
      %683 = vst [vmem:[#allocation2 + $0x58] sm:$0xff] %v651
      %684 = vst [vmem:[#allocation2 + $0x60] sm:$0xff] %v652
      %685 = vst [vmem:[#allocation2 + $0x68] sm:$0xff] %v653
      %686 = vst [vmem:[#allocation2 + $0x70] sm:$0xff] %v654
      %687 = vst [vmem:[#allocation2 + $0x78] sm:$0xff] %v655
      %688 = vst [vmem:[#allocation2 + $0x80] sm:$0xff] %v656
      %689 = vst [vmem:[#allocation2 + $0x88] sm:$0xff] %v657
      %690 = vst [vmem:[#allocation2 + $0x90] sm:$0xff] %v658
      %691 = vst [vmem:[#allocation2 + $0x98] sm:$0xff] %v659
      %692 = vst [vmem:[#allocation2 + $0xa0] sm:$0xff] %v660
      %693 = vst [vmem:[#allocation2 + $0xa8] sm:$0xff] %v661
      %694 = vst [vmem:[#allocation2 + $0xb0] sm:$0xff] %v662
      %695 = vst [vmem:[#allocation2 + $0xb8] sm:$0xff] %v663
      %696 = vst [vmem:[#allocation2 + $0xc0] sm:$0xff] %v664
      %697 = vst [vmem:[#allocation2 + $0xc8] sm:$0xff] %v665
      %698 = vst [vmem:[#allocation2 + $0xd0] sm:$0xff] %v666
      %699 = vst [vmem:[#allocation2 + $0xd8] sm:$0xff] %v667
      %700 = vst [vmem:[#allocation2 + $0xe0] sm:$0xff] %v668
      %701 = vst [vmem:[#allocation2 + $0xe8] sm:$0xff] %v669
      %702 = vst [vmem:[#allocation2 + $0xf0] sm:$0xff] %v670
      %703 = vst [vmem:[#allocation2 + $0xf8] sm:$0xff] %v671
      %v704 = vld [vmem:[%s206] sm:$0xf]
      %v705 = vld [vmem:[%s206 + $0x4] sm:$0xf]
      %v706 = vld [vmem:[%s206 + $0x8] sm:$0x1]
      %v707 = vld [vmem:[%s206 + $0xc] sm:$0xf]
      %v708 = vld [vmem:[%s206 + $0x10] sm:$0xf]
      %v709 = vld [vmem:[%s206 + $0x14] sm:$0x1]
      %v710 = vld [vmem:[%s206 + $0x18] sm:$0xf]
      %v711 = vld [vmem:[%s206 + $0x1c] sm:$0xf]
      %v712 = vld [vmem:[%s206 + $0x20] sm:$0x1]
      %v713 = vld [vmem:[%s206 + $0x24] sm:$0xf]
      %v714 = vld [vmem:[%s206 + $0x28] sm:$0xf]
      %v715 = vld [vmem:[%s206 + $0x2c] sm:$0x1]
      %v716 = vld [vmem:[%s206 + $0x30] sm:$0xf]
      %v717 = vld [vmem:[%s206 + $0x34] sm:$0xf]
      %v718 = vld [vmem:[%s206 + $0x38] sm:$0x1]
      %v719 = vld [vmem:[%s206 + $0x3c] sm:$0xf]
      %v720 = vld [vmem:[%s206 + $0x40] sm:$0xf]
      %v721 = vld [vmem:[%s206 + $0x44] sm:$0x1]
      %v722 = vld [vmem:[%s206 + $0x48] sm:$0xf]
      %v723 = vld [vmem:[%s206 + $0x4c] sm:$0xf]
      %v724 = vld [vmem:[%s206 + $0x50] sm:$0x1]
      %v725 = vld [vmem:[%s206 + $0x54] sm:$0xf]
      %v726 = vld [vmem:[%s206 + $0x58] sm:$0xf]
      %v727 = vld [vmem:[%s206 + $0x5c] sm:$0x1]
      %v728 = vld [vmem:[%s206 + $0x60] sm:$0xf]
      %v729 = vld [vmem:[%s206 + $0x64] sm:$0xf]
      %v730 = vld [vmem:[%s206 + $0x68] sm:$0x1]
      %v731 = vld [vmem:[%s206 + $0x6c] sm:$0xf]
      %v732 = vld [vmem:[%s206 + $0x70] sm:$0xf]
      %v733 = vld [vmem:[%s206 + $0x74] sm:$0x1]
      %v734 = vld [vmem:[%s206 + $0x78] sm:$0xf]
      %v735 = vld [vmem:[%s206 + $0x7c] sm:$0xf]
      %v736 = vld [vmem:[%s206 + $0x80] sm:$0x1]
      %v737 = vld [vmem:[%s206 + $0x84] sm:$0xf]
      %v738 = vld [vmem:[%s206 + $0x88] sm:$0xf]
      %v739 = vld [vmem:[%s206 + $0x8c] sm:$0x1]
      %v740 = vld [vmem:[%s206 + $0x90] sm:$0xf]
      %v741 = vld [vmem:[%s206 + $0x94] sm:$0xf]
      %v742 = vld [vmem:[%s206 + $0x98] sm:$0x1]
      %v743 = vld [vmem:[%s206 + $0x9c] sm:$0xf]
      %v744 = vld [vmem:[%s206 + $0xa0] sm:$0xf]
      %v745 = vld [vmem:[%s206 + $0xa4] sm:$0x1]
      %v746 = vld [vmem:[%s206 + $0xa8] sm:$0xf]
      %v747 = vld [vmem:[%s206 + $0xac] sm:$0xf]
      %v748 = vld [vmem:[%s206 + $0xb0] sm:$0x1]
      %v749 = vld [vmem:[%s206 + $0xb4] sm:$0xf]
      %v750 = vld [vmem:[%s206 + $0xb8] sm:$0xf]
      %v751 = vld [vmem:[%s206 + $0xbc] sm:$0x1]
      %v752 = vld [vmem:[#allocation2] sm:$0xff]
      %v753 = vld [vmem:[#allocation2 + $0x8] sm:$0xff]
      %v754 = vld [vmem:[#allocation2 + $0x10] sm:$0xff]
      %v755 = vld [vmem:[#allocation2 + $0x18] sm:$0xff]
      %v756 = vld [vmem:[#allocation2 + $0x20] sm:$0xff]
      %v757 = vld [vmem:[#allocation2 + $0x28] sm:$0xff]
      %v758 = vld [vmem:[#allocation2 + $0x30] sm:$0xff]
      %v759 = vld [vmem:[#allocation2 + $0x38] sm:$0xff]
      %v760 = vld [vmem:[#allocation2 + $0x40] sm:$0xff]
      %v761 = vld [vmem:[#allocation2 + $0x48] sm:$0xff]
      %v762 = vld [vmem:[#allocation2 + $0x50] sm:$0xff]
      %v763 = vld [vmem:[#allocation2 + $0x58] sm:$0xff]
      %v764 = vld [vmem:[#allocation2 + $0x60] sm:$0xff]
      %v765 = vld [vmem:[#allocation2 + $0x68] sm:$0xff]
      %v766 = vld [vmem:[#allocation2 + $0x70] sm:$0xff]
      %v767 = vld [vmem:[#allocation2 + $0x78] sm:$0xff]
      %v768 = vld [vmem:[#allocation2 + $0x80] sm:$0xff]
      %v769 = vld [vmem:[#allocation2 + $0x88] sm:$0xff]
      %v770 = vld [vmem:[#allocation2 + $0x90] sm:$0xff]
      %v771 = vld [vmem:[#allocation2 + $0x98] sm:$0xff]
      %v772 = vld [vmem:[#allocation2 + $0xa0] sm:$0xff]
      %v773 = vld [vmem:[#allocation2 + $0xa8] sm:$0xff]
      %v774 = vld [vmem:[#allocation2 + $0xb0] sm:$0xff]
      %v775 = vld [vmem:[#allocation2 + $0xb8] sm:$0xff]
      %v776 = vld [vmem:[#allocation2 + $0xc0] sm:$0xff]
      %v777 = vld [vmem:[#allocation2 + $0xc8] sm:$0xff]
      %v778 = vld [vmem:[#allocation2 + $0xd0] sm:$0xff]
      %v779 = vld [vmem:[#allocation2 + $0xd8] sm:$0xff]
      %v780 = vld [vmem:[#allocation2 + $0xe0] sm:$0xff]
      %v781 = vld [vmem:[#allocation2 + $0xe8] sm:$0xff]
      %v782 = vld [vmem:[#allocation2 + $0xf0] sm:$0xff]
      %v783 = vld [vmem:[#allocation2 + $0xf8] sm:$0xff]
      %vm784 = vsmask.f32 3328
      %vm785 = vsmask.f32 7440
      %vm786 = vmor %vm784, %vm785
      %v788 = vshrl.u32 %v704, 16
      %v790 = vrot.slane %v788, 4
      %v791 = vshll.u32 %v704, 16
      %v793 = vrot.slane %v791, 5
      %v794 = vor.u32 %v790, %v793
      %v795 = vrot.slane %v794, 4
      %v797 = vshll.u32 %v705, 16
      %v799 = vrot.slane %v797, 5
      %v800 = vsel %vm786, %v795, %v799
      %v801 = vshrl.u32 %v705, 16
      %v803 = vrot.slane %v801, 4
      %v804 = vor.u32 %v803, %v799
      %v805 = vrot.slane %v804, 4
      %v807 = vshll.u32 %v706, 16
      %v809 = vrot.slane %v807, 5
      %v810 = vsel %vm786, %v805, %v809
      %v812 = vshrl.u32 %v707, 16
      %v814 = vrot.slane %v812, 4
      %v815 = vshll.u32 %v707, 16
      %v817 = vrot.slane %v815, 5
      %v818 = vor.u32 %v814, %v817
      %v819 = vrot.slane %v818, 4
      %v821 = vshll.u32 %v708, 16
      %v823 = vrot.slane %v821, 5
      %v824 = vsel %vm786, %v819, %v823
      %v825 = vshrl.u32 %v708, 16
      %v827 = vrot.slane %v825, 4
      %v828 = vor.u32 %v827, %v823
      %v829 = vrot.slane %v828, 4
      %v831 = vshll.u32 %v709, 16
      %v833 = vrot.slane %v831, 5
      %v834 = vsel %vm786, %v829, %v833
      %v836 = vshrl.u32 %v710, 16
      %v838 = vrot.slane %v836, 4
      %v839 = vshll.u32 %v710, 16
      %v841 = vrot.slane %v839, 5
      %v842 = vor.u32 %v838, %v841
      %v843 = vrot.slane %v842, 4
      %v845 = vshll.u32 %v711, 16
      %v847 = vrot.slane %v845, 5
      %v848 = vsel %vm786, %v843, %v847
      %v849 = vshrl.u32 %v711, 16
      %v851 = vrot.slane %v849, 4
      %v852 = vor.u32 %v851, %v847
      %v853 = vrot.slane %v852, 4
      %v855 = vshll.u32 %v712, 16
      %v857 = vrot.slane %v855, 5
      %v858 = vsel %vm786, %v853, %v857
      %v860 = vshrl.u32 %v713, 16
      %v862 = vrot.slane %v860, 4
      %v863 = vshll.u32 %v713, 16
      %v865 = vrot.slane %v863, 5
      %v866 = vor.u32 %v862, %v865
      %v867 = vrot.slane %v866, 4
      %v869 = vshll.u32 %v714, 16
      %v871 = vrot.slane %v869, 5
      %v872 = vsel %vm786, %v867, %v871
      %v873 = vshrl.u32 %v714, 16
      %v875 = vrot.slane %v873, 4
      %v876 = vor.u32 %v875, %v871
      %v877 = vrot.slane %v876, 4
      %v879 = vshll.u32 %v715, 16
      %v881 = vrot.slane %v879, 5
      %v882 = vsel %vm786, %v877, %v881
      %v884 = vshrl.u32 %v716, 16
      %v886 = vrot.slane %v884, 4
      %v887 = vshll.u32 %v716, 16
      %v889 = vrot.slane %v887, 5
      %v890 = vor.u32 %v886, %v889
      %v891 = vrot.slane %v890, 4
      %v893 = vshll.u32 %v717, 16
      %v895 = vrot.slane %v893, 5
      %v896 = vsel %vm786, %v891, %v895
      %v897 = vshrl.u32 %v717, 16
      %v899 = vrot.slane %v897, 4
      %v900 = vor.u32 %v899, %v895
      %v901 = vrot.slane %v900, 4
      %v903 = vshll.u32 %v718, 16
      %v905 = vrot.slane %v903, 5
      %v906 = vsel %vm786, %v901, %v905
      %v908 = vshrl.u32 %v719, 16
      %v910 = vrot.slane %v908, 4
      %v911 = vshll.u32 %v719, 16
      %v913 = vrot.slane %v911, 5
      %v914 = vor.u32 %v910, %v913
      %v915 = vrot.slane %v914, 4
      %v917 = vshll.u32 %v720, 16
      %v919 = vrot.slane %v917, 5
      %v920 = vsel %vm786, %v915, %v919
      %v921 = vshrl.u32 %v720, 16
      %v923 = vrot.slane %v921, 4
      %v924 = vor.u32 %v923, %v919
      %v925 = vrot.slane %v924, 4
      %v927 = vshll.u32 %v721, 16
      %v929 = vrot.slane %v927, 5
      %v930 = vsel %vm786, %v925, %v929
      %v932 = vshrl.u32 %v722, 16
      %v934 = vrot.slane %v932, 4
      %v935 = vshll.u32 %v722, 16
      %v937 = vrot.slane %v935, 5
      %v938 = vor.u32 %v934, %v937
      %v939 = vrot.slane %v938, 4
      %v941 = vshll.u32 %v723, 16
      %v943 = vrot.slane %v941, 5
      %v944 = vsel %vm786, %v939, %v943
      %v945 = vshrl.u32 %v723, 16
      %v947 = vrot.slane %v945, 4
      %v948 = vor.u32 %v947, %v943
      %v949 = vrot.slane %v948, 4
      %v951 = vshll.u32 %v724, 16
      %v953 = vrot.slane %v951, 5
      %v954 = vsel %vm786, %v949, %v953
      %v956 = vshrl.u32 %v725, 16
      %v958 = vrot.slane %v956, 4
      %v959 = vshll.u32 %v725, 16
      %v961 = vrot.slane %v959, 5
      %v962 = vor.u32 %v958, %v961
      %v963 = vrot.slane %v962, 4
      %v965 = vshll.u32 %v726, 16
      %v967 = vrot.slane %v965, 5
      %v968 = vsel %vm786, %v963, %v967
      %v969 = vshrl.u32 %v726, 16
      %v971 = vrot.slane %v969, 4
      %v972 = vor.u32 %v971, %v967
      %v973 = vrot.slane %v972, 4
      %v975 = vshll.u32 %v727, 16
      %v977 = vrot.slane %v975, 5
      %v978 = vsel %vm786, %v973, %v977
      %v980 = vshrl.u32 %v728, 16
      %v982 = vrot.slane %v980, 4
      %v983 = vshll.u32 %v728, 16
      %v985 = vrot.slane %v983, 5
      %v986 = vor.u32 %v982, %v985
      %v987 = vrot.slane %v986, 4
      %v989 = vshll.u32 %v729, 16
      %v991 = vrot.slane %v989, 5
      %v992 = vsel %vm786, %v987, %v991
      %v993 = vshrl.u32 %v729, 16
      %v995 = vrot.slane %v993, 4
      %v996 = vor.u32 %v995, %v991
      %v997 = vrot.slane %v996, 4
      %v999 = vshll.u32 %v730, 16
      %v1001 = vrot.slane %v999, 5
      %v1002 = vsel %vm786, %v997, %v1001
      %v1004 = vshrl.u32 %v731, 16
      %v1006 = vrot.slane %v1004, 4
      %v1007 = vshll.u32 %v731, 16
      %v1009 = vrot.slane %v1007, 5
      %v1010 = vor.u32 %v1006, %v1009
      %v1011 = vrot.slane %v1010, 4
      %v1013 = vshll.u32 %v732, 16
      %v1015 = vrot.slane %v1013, 5
      %v1016 = vsel %vm786, %v1011, %v1015
      %v1017 = vshrl.u32 %v732, 16
      %v1019 = vrot.slane %v1017, 4
      %v1020 = vor.u32 %v1019, %v1015
      %v1021 = vrot.slane %v1020, 4
      %v1023 = vshll.u32 %v733, 16
      %v1025 = vrot.slane %v1023, 5
      %v1026 = vsel %vm786, %v1021, %v1025
      %v1028 = vshrl.u32 %v734, 16
      %v1030 = vrot.slane %v1028, 4
      %v1031 = vshll.u32 %v734, 16
      %v1033 = vrot.slane %v1031, 5
      %v1034 = vor.u32 %v1030, %v1033
      %v1035 = vrot.slane %v1034, 4
      %v1037 = vshll.u32 %v735, 16
      %v1039 = vrot.slane %v1037, 5
      %v1040 = vsel %vm786, %v1035, %v1039
      %v1041 = vshrl.u32 %v735, 16
      %v1043 = vrot.slane %v1041, 4
      %v1044 = vor.u32 %v1043, %v1039
      %v1045 = vrot.slane %v1044, 4
      %v1047 = vshll.u32 %v736, 16
      %v1049 = vrot.slane %v1047, 5
      %v1050 = vsel %vm786, %v1045, %v1049
      %v1052 = vshrl.u32 %v737, 16
      %v1054 = vrot.slane %v1052, 4
      %v1055 = vshll.u32 %v737, 16
      %v1057 = vrot.slane %v1055, 5
      %v1058 = vor.u32 %v1054, %v1057
      %v1059 = vrot.slane %v1058, 4
      %v1061 = vshll.u32 %v738, 16
      %v1063 = vrot.slane %v1061, 5
      %v1064 = vsel %vm786, %v1059, %v1063
      %v1065 = vshrl.u32 %v738, 16
      %v1067 = vrot.slane %v1065, 4
      %v1068 = vor.u32 %v1067, %v1063
      %v1069 = vrot.slane %v1068, 4
      %v1071 = vshll.u32 %v739, 16
      %v1073 = vrot.slane %v1071, 5
      %v1074 = vsel %vm786, %v1069, %v1073
      %v1076 = vshrl.u32 %v740, 16
      %v1078 = vrot.slane %v1076, 4
      %v1079 = vshll.u32 %v740, 16
      %v1081 = vrot.slane %v1079, 5
      %v1082 = vor.u32 %v1078, %v1081
      %v1083 = vrot.slane %v1082, 4
      %v1085 = vshll.u32 %v741, 16
      %v1087 = vrot.slane %v1085, 5
      %v1088 = vsel %vm786, %v1083, %v1087
      %v1089 = vshrl.u32 %v741, 16
      %v1091 = vrot.slane %v1089, 4
      %v1092 = vor.u32 %v1091, %v1087
      %v1093 = vrot.slane %v1092, 4
      %v1095 = vshll.u32 %v742, 16
      %v1097 = vrot.slane %v1095, 5
      %v1098 = vsel %vm786, %v1093, %v1097
      %v1100 = vshrl.u32 %v743, 16
      %v1102 = vrot.slane %v1100, 4
      %v1103 = vshll.u32 %v743, 16
      %v1105 = vrot.slane %v1103, 5
      %v1106 = vor.u32 %v1102, %v1105
      %v1107 = vrot.slane %v1106, 4
      %v1109 = vshll.u32 %v744, 16
      %v1111 = vrot.slane %v1109, 5
      %v1112 = vsel %vm786, %v1107, %v1111
      %v1113 = vshrl.u32 %v744, 16
      %v1115 = vrot.slane %v1113, 4
      %v1116 = vor.u32 %v1115, %v1111
      %v1117 = vrot.slane %v1116, 4
      %v1119 = vshll.u32 %v745, 16
      %v1121 = vrot.slane %v1119, 5
      %v1122 = vsel %vm786, %v1117, %v1121
      %v1124 = vshrl.u32 %v746, 16
      %v1126 = vrot.slane %v1124, 4
      %v1127 = vshll.u32 %v746, 16
      %v1129 = vrot.slane %v1127, 5
      %v1130 = vor.u32 %v1126, %v1129
      %v1131 = vrot.slane %v1130, 4
      %v1133 = vshll.u32 %v747, 16
      %v1135 = vrot.slane %v1133, 5
      %v1136 = vsel %vm786, %v1131, %v1135
      %v1137 = vshrl.u32 %v747, 16
      %v1139 = vrot.slane %v1137, 4
      %v1140 = vor.u32 %v1139, %v1135
      %v1141 = vrot.slane %v1140, 4
      %v1143 = vshll.u32 %v748, 16
      %v1145 = vrot.slane %v1143, 5
      %v1146 = vsel %vm786, %v1141, %v1145
      %v1148 = vshrl.u32 %v749, 16
      %v1150 = vrot.slane %v1148, 4
      %v1151 = vshll.u32 %v749, 16
      %v1153 = vrot.slane %v1151, 5
      %v1154 = vor.u32 %v1150, %v1153
      %v1155 = vrot.slane %v1154, 4
      %v1157 = vshll.u32 %v750, 16
      %v1159 = vrot.slane %v1157, 5
      %v1160 = vsel %vm786, %v1155, %v1159
      %v1161 = vshrl.u32 %v750, 16
      %v1163 = vrot.slane %v1161, 4
      %v1164 = vor.u32 %v1163, %v1159
      %v1165 = vrot.slane %v1164, 4
      %v1167 = vshll.u32 %v751, 16
      %v1169 = vrot.slane %v1167, 5
      %v1170 = vsel %vm786, %v1165, %v1169
      %s1171 = scalar_lea.vmem %s210, 64
      %v1172 = vld [vmem:[%s1171] sm:$0xf]
      %v1173 = vld [vmem:[%s1171 + $0x4] sm:$0xf]
      %v1174 = vld [vmem:[%s1171 + $0x8] sm:$0xf]
      %v1175 = vld [vmem:[%s1171 + $0xc] sm:$0xf]
      %v1176 = vld [vmem:[%s1171 + $0x10] sm:$0xf]
      %v1177 = vld [vmem:[%s1171 + $0x14] sm:$0xf]
      %v1178 = vld [vmem:[%s1171 + $0x18] sm:$0xf]
      %v1179 = vld [vmem:[%s1171 + $0x1c] sm:$0xf]
      %v1180 = vld [vmem:[%s1171 + $0x20] sm:$0xf]
      %v1181 = vld [vmem:[%s1171 + $0x24] sm:$0xf]
      %v1182 = vld [vmem:[%s1171 + $0x28] sm:$0xf]
      %v1183 = vld [vmem:[%s1171 + $0x2c] sm:$0xf]
      %v1184 = vld [vmem:[%s1171 + $0x30] sm:$0xf]
      %v1185 = vld [vmem:[%s1171 + $0x34] sm:$0xf]
      %v1186 = vld [vmem:[%s1171 + $0x38] sm:$0xf]
      %v1187 = vld [vmem:[%s1171 + $0x3c] sm:$0xf]
      %v1188 = vunpack.c.l.b16 %v800
      %v1189 = vunpack.c.l.b16 %v810
      %v1190 = vunpack.c.l.b16 %v824
      %v1191 = vunpack.c.l.b16 %v834
      %v1192 = vunpack.c.l.b16 %v848
      %v1193 = vunpack.c.l.b16 %v858
      %v1194 = vunpack.c.l.b16 %v872
      %v1195 = vunpack.c.l.b16 %v882
      %v1196 = vunpack.c.l.b16 %v896
      %v1197 = vunpack.c.l.b16 %v906
      %v1198 = vunpack.c.l.b16 %v920
      %v1199 = vunpack.c.l.b16 %v930
      %v1200 = vunpack.c.l.b16 %v944
      %v1201 = vunpack.c.l.b16 %v954
      %v1202 = vunpack.c.l.b16 %v968
      %v1203 = vunpack.c.l.b16 %v978
      %v1204 = vunpack.c.l.b16 %v992
      %v1205 = vunpack.c.l.b16 %v1002
      %v1206 = vunpack.c.l.b16 %v1016
      %v1207 = vunpack.c.l.b16 %v1026
      %v1208 = vunpack.c.l.b16 %v1040
      %v1209 = vunpack.c.l.b16 %v1050
      %v1210 = vunpack.c.l.b16 %v1064
      %v1211 = vunpack.c.l.b16 %v1074
      %v1212 = vunpack.c.l.b16 %v1088
      %v1213 = vunpack.c.l.b16 %v1098
      %v1214 = vunpack.c.l.b16 %v1112
      %v1215 = vunpack.c.l.b16 %v1122
      %v1216 = vunpack.c.l.b16 %v1136
      %v1217 = vunpack.c.l.b16 %v1146
      %v1218 = vunpack.c.l.b16 %v1160
      %v1219 = vunpack.c.l.b16 %v1170
      %v1220 = vpack.c.b16 %v1189, %v1188
      %v1221 = vpack.c.b16 %v1191, %v1190
      %v1222 = vpack.c.b16 %v1193, %v1192
      %v1223 = vpack.c.b16 %v1195, %v1194
      %v1224 = vpack.c.b16 %v1197, %v1196
      %v1225 = vpack.c.b16 %v1199, %v1198
      %v1226 = vpack.c.b16 %v1201, %v1200
      %v1227 = vpack.c.b16 %v1203, %v1202
      %v1228 = vpack.c.b16 %v1205, %v1204
      %v1229 = vpack.c.b16 %v1207, %v1206
      %v1230 = vpack.c.b16 %v1209, %v1208
      %v1231 = vpack.c.b16 %v1211, %v1210
      %v1232 = vpack.c.b16 %v1213, %v1212
      %v1233 = vpack.c.b16 %v1215, %v1214
      %v1234 = vpack.c.b16 %v1217, %v1216
      %v1235 = vpack.c.b16 %v1219, %v1218
      %v1268 = vunpack.c.l.b16 %v1172
      %v1269 = vunpack.c.l.b16 %v1173
      %v1270 = vunpack.c.l.b16 %v1174
      %v1271 = vunpack.c.l.b16 %v1175
      %v1272 = vunpack.c.l.b16 %v1176
      %v1273 = vunpack.c.l.b16 %v1177
      %v1274 = vunpack.c.l.b16 %v1178
      %v1275 = vunpack.c.l.b16 %v1179
      %v1276 = vunpack.c.l.b16 %v1180
      %v1277 = vunpack.c.l.b16 %v1181
      %v1278 = vunpack.c.l.b16 %v1182
      %v1279 = vunpack.c.l.b16 %v1183
      %v1280 = vunpack.c.l.b16 %v1184
      %v1281 = vunpack.c.l.b16 %v1185
      %v1282 = vunpack.c.l.b16 %v1186
      %v1283 = vunpack.c.l.b16 %v1187
      %v1284 = vpack.c.b16 %v1269, %v1268
      %v1285 = vpack.c.b16 %v1271, %v1270
      %v1286 = vpack.c.b16 %v1273, %v1272
      %v1287 = vpack.c.b16 %v1275, %v1274
      %v1288 = vpack.c.b16 %v1277, %v1276
      %v1289 = vpack.c.b16 %v1279, %v1278
      %v1290 = vpack.c.b16 %v1281, %v1280
      %v1291 = vpack.c.b16 %v1283, %v1282
      %1300 = vmatprep.subr.bf16.mxu0 0
      %1301 = vmatpush1.bf16.msra.mxu0 %v1291
      %1302 = vmatprep.subr.bf16.mxu0 0
      %1303 = vmatpush1.bf16.msra.mxu0 %v1290
      %1304 = vmatprep.subr.bf16.mxu0 0
      %1305 = vmatpush1.bf16.msra.mxu0 %v1289
      %1306 = vmatprep.subr.bf16.mxu0 0
      %1307 = vmatpush1.bf16.msra.mxu0 %v1288
      %1308 = vmatprep.subr.bf16.mxu0 0
      %1309 = vmatpush1.bf16.msra.mxu0 %v1287
      %1310 = vmatprep.subr.bf16.mxu0 0
      %1311 = vmatpush1.bf16.msra.mxu0 %v1286
      %1312 = vmatprep.subr.bf16.mxu0 0
      %1313 = vmatpush1.bf16.msra.mxu0 %v1285
      %1314 = vmatprep.subr.bf16.mxu0 0
      %1315 = vmatpush1.bf16.msra.mxu0 %v1284
      %1316 = vmatprep.subr.bf16.mxu0 0
      %1317 = vmatpush2.bf16.msra.mxu0 0
      %1318 = vmatprep.subr.bf16.mxu0 0
      %1319 = vmatpush2.bf16.msra.mxu0 0
      %1320 = vmatprep.subr.bf16.mxu0 0
      %1321 = vmatpush2.bf16.msra.mxu0 0
      %1322 = vmatprep.subr.bf16.mxu0 0
      %1323 = vmatpush2.bf16.msra.mxu0 0
      %1324 = vmatprep.subr.bf16.mxu0 0
      %1325 = vmatpush2.bf16.msra.mxu0 0
      %1326 = vmatprep.subr.bf16.mxu0 0
      %1327 = vmatpush2.bf16.msra.mxu0 0
      %1328 = vmatprep.subr.bf16.mxu0 0
      %1329 = vmatpush2.bf16.msra.mxu0 0
      %1330 = vmatprep.subr.bf16.mxu0 0
      %1331 = vmatpush2.bf16.msra.mxu0 0
      %1332 = vmatprep.mubr.bf16.mxu0 0
      %1333 = vmatmul.mubr.bf16.gmra.mxu0 %v1220
      %v1334 = vpop.f32.mrf.mxu0
      %v1335 = vadd.f32 0.0, %v1334
      %v1336 = vpop.f32.mrf.mxu0
      %v1337 = vpop.f32.mrf.mxu0
      %v1338 = vadd.f32 0.0, %v1337
      %v1339 = vpop.f32.mrf.mxu0
      %1340 = vmatprep.mubr.bf16.mxu0 0
      %1341 = vmatmul.mubr.bf16.gmra.mxu0 %v1221
      %v1342 = vpop.f32.mrf.mxu0
      %v1343 = vadd.f32 0.0, %v1342
      %v1344 = vpop.f32.mrf.mxu0
      %v1345 = vpop.f32.mrf.mxu0
      %v1346 = vadd.f32 0.0, %v1345
      %v1347 = vpop.f32.mrf.mxu0
      %1348 = vmatprep.mubr.bf16.mxu0 0
      %1349 = vmatmul.mubr.bf16.gmra.mxu0 %v1222
      %v1350 = vpop.f32.mrf.mxu0
      %v1351 = vadd.f32 0.0, %v1350
      %v1352 = vpop.f32.mrf.mxu0
      %v1353 = vpop.f32.mrf.mxu0
      %v1354 = vadd.f32 0.0, %v1353
      %v1355 = vpop.f32.mrf.mxu0
      %1356 = vmatprep.mubr.bf16.mxu0 0
      %1357 = vmatmul.mubr.bf16.gmra.mxu0 %v1223
      %v1358 = vpop.f32.mrf.mxu0
      %v1359 = vadd.f32 0.0, %v1358
      %v1360 = vpop.f32.mrf.mxu0
      %v1361 = vpop.f32.mrf.mxu0
      %v1362 = vadd.f32 0.0, %v1361
      %v1363 = vpop.f32.mrf.mxu0
      %1364 = vmatprep.mubr.bf16.mxu0 0
      %1365 = vmatmul.mubr.bf16.gmra.mxu0 %v1224
      %v1366 = vpop.f32.mrf.mxu0
      %v1367 = vadd.f32 0.0, %v1366
      %v1368 = vpop.f32.mrf.mxu0
      %v1369 = vpop.f32.mrf.mxu0
      %v1370 = vadd.f32 0.0, %v1369
      %v1371 = vpop.f32.mrf.mxu0
      %1372 = vmatprep.mubr.bf16.mxu0 0
      %1373 = vmatmul.mubr.bf16.gmra.mxu0 %v1225
      %v1374 = vpop.f32.mrf.mxu0
      %v1375 = vadd.f32 0.0, %v1374
      %v1376 = vpop.f32.mrf.mxu0
      %v1377 = vpop.f32.mrf.mxu0
      %v1378 = vadd.f32 0.0, %v1377
      %v1379 = vpop.f32.mrf.mxu0
      %1380 = vmatprep.mubr.bf16.mxu0 0
      %1381 = vmatmul.mubr.bf16.gmra.mxu0 %v1226
      %v1382 = vpop.f32.mrf.mxu0
      %v1383 = vadd.f32 0.0, %v1382
      %v1384 = vpop.f32.mrf.mxu0
      %v1385 = vpop.f32.mrf.mxu0
      %v1386 = vadd.f32 0.0, %v1385
      %v1387 = vpop.f32.mrf.mxu0
      %1388 = vmatprep.mubr.bf16.mxu0 0
      %1389 = vmatmul.mubr.bf16.gmra.mxu0 %v1227
      %v1390 = vpop.f32.mrf.mxu0
      %v1391 = vadd.f32 0.0, %v1390
      %v1392 = vpop.f32.mrf.mxu0
      %v1393 = vpop.f32.mrf.mxu0
      %v1394 = vadd.f32 0.0, %v1393
      %v1395 = vpop.f32.mrf.mxu0
      %1396 = vmatprep.mubr.bf16.mxu0 0
      %1397 = vmatmul.mubr.bf16.gmra.mxu0 %v1228
      %v1398 = vpop.f32.mrf.mxu0
      %v1399 = vadd.f32 0.0, %v1398
      %v1400 = vpop.f32.mrf.mxu0
      %v1401 = vpop.f32.mrf.mxu0
      %v1402 = vadd.f32 0.0, %v1401
      %v1403 = vpop.f32.mrf.mxu0
      %1404 = vmatprep.mubr.bf16.mxu0 0
      %1405 = vmatmul.mubr.bf16.gmra.mxu0 %v1229
      %v1406 = vpop.f32.mrf.mxu0
      %v1407 = vadd.f32 0.0, %v1406
      %v1408 = vpop.f32.mrf.mxu0
      %v1409 = vpop.f32.mrf.mxu0
      %v1410 = vadd.f32 0.0, %v1409
      %v1411 = vpop.f32.mrf.mxu0
      %1412 = vmatprep.mubr.bf16.mxu0 0
      %1413 = vmatmul.mubr.bf16.gmra.mxu0 %v1230
      %v1414 = vpop.f32.mrf.mxu0
      %v1415 = vadd.f32 0.0, %v1414
      %v1416 = vpop.f32.mrf.mxu0
      %v1417 = vpop.f32.mrf.mxu0
      %v1418 = vadd.f32 0.0, %v1417
      %v1419 = vpop.f32.mrf.mxu0
      %1420 = vmatprep.mubr.bf16.mxu0 0
      %1421 = vmatmul.mubr.bf16.gmra.mxu0 %v1231
      %v1422 = vpop.f32.mrf.mxu0
      %v1423 = vadd.f32 0.0, %v1422
      %v1424 = vpop.f32.mrf.mxu0
      %v1425 = vpop.f32.mrf.mxu0
      %v1426 = vadd.f32 0.0, %v1425
      %v1427 = vpop.f32.mrf.mxu0
      %1428 = vmatprep.mubr.bf16.mxu0 0
      %1429 = vmatmul.mubr.bf16.gmra.mxu0 %v1232
      %v1430 = vpop.f32.mrf.mxu0
      %v1431 = vadd.f32 0.0, %v1430
      %v1432 = vpop.f32.mrf.mxu0
      %v1433 = vpop.f32.mrf.mxu0
      %v1434 = vadd.f32 0.0, %v1433
      %v1435 = vpop.f32.mrf.mxu0
      %1436 = vmatprep.mubr.bf16.mxu0 0
      %1437 = vmatmul.mubr.bf16.gmra.mxu0 %v1233
      %v1438 = vpop.f32.mrf.mxu0
      %v1439 = vadd.f32 0.0, %v1438
      %v1440 = vpop.f32.mrf.mxu0
      %v1441 = vpop.f32.mrf.mxu0
      %v1442 = vadd.f32 0.0, %v1441
      %v1443 = vpop.f32.mrf.mxu0
      %1444 = vmatprep.mubr.bf16.mxu0 0
      %1445 = vmatmul.mubr.bf16.gmra.mxu0 %v1234
      %v1446 = vpop.f32.mrf.mxu0
      %v1447 = vadd.f32 0.0, %v1446
      %v1448 = vpop.f32.mrf.mxu0
      %v1449 = vpop.f32.mrf.mxu0
      %v1450 = vadd.f32 0.0, %v1449
      %v1451 = vpop.f32.mrf.mxu0
      %1452 = vmatprep.mubr.bf16.mxu0 0
      %1453 = vmatmul.mubr.bf16.gmra.mxu0 %v1235
      %v1454 = vpop.f32.mrf.mxu0
      %v1455 = vadd.f32 0.0, %v1454
      %v1456 = vpop.f32.mrf.mxu0
      %v1457 = vpop.f32.mrf.mxu0
      %v1458 = vadd.f32 0.0, %v1457
      %v1459 = vpop.f32.mrf.mxu0
      %1460 = vdwg.mxu0
      %v1461 = vadd.f32 %v752, %v1335
      %v1462 = vadd.f32 %v753, %v1338
      %v1463 = vadd.f32 %v754, %v1343
      %v1464 = vadd.f32 %v755, %v1346
      %v1465 = vadd.f32 %v756, %v1351
      %v1466 = vadd.f32 %v757, %v1354
      %v1467 = vadd.f32 %v758, %v1359
      %v1468 = vadd.f32 %v759, %v1362
      %v1469 = vadd.f32 %v760, %v1367
      %v1470 = vadd.f32 %v761, %v1370
      %v1471 = vadd.f32 %v762, %v1375
      %v1472 = vadd.f32 %v763, %v1378
      %v1473 = vadd.f32 %v764, %v1383
      %v1474 = vadd.f32 %v765, %v1386
      %v1475 = vadd.f32 %v766, %v1391
      %v1476 = vadd.f32 %v767, %v1394
      %v1477 = vadd.f32 %v768, %v1399
      %v1478 = vadd.f32 %v769, %v1402
      %v1479 = vadd.f32 %v770, %v1407
      %v1480 = vadd.f32 %v771, %v1410
      %v1481 = vadd.f32 %v772, %v1415
      %v1482 = vadd.f32 %v773, %v1418
      %v1483 = vadd.f32 %v774, %v1423
      %v1484 = vadd.f32 %v775, %v1426
      %v1485 = vadd.f32 %v776, %v1431
      %v1486 = vadd.f32 %v777, %v1434
      %v1487 = vadd.f32 %v778, %v1439
      %v1488 = vadd.f32 %v779, %v1442
      %v1489 = vadd.f32 %v780, %v1447
      %v1490 = vadd.f32 %v781, %v1450
      %v1491 = vadd.f32 %v782, %v1455
      %v1492 = vadd.f32 %v783, %v1458
      %1493 = vst [vmem:[#allocation2] sm:$0xff] %v1461
      %1494 = vst [vmem:[#allocation2 + $0x8] sm:$0xff] %v1462
      %1495 = vst [vmem:[#allocation2 + $0x10] sm:$0xff] %v1463
      %1496 = vst [vmem:[#allocation2 + $0x18] sm:$0xff] %v1464
      %1497 = vst [vmem:[#allocation2 + $0x20] sm:$0xff] %v1465
      %1498 = vst [vmem:[#allocation2 + $0x28] sm:$0xff] %v1466
      %1499 = vst [vmem:[#allocation2 + $0x30] sm:$0xff] %v1467
      %1500 = vst [vmem:[#allocation2 + $0x38] sm:$0xff] %v1468
      %1501 = vst [vmem:[#allocation2 + $0x40] sm:$0xff] %v1469
      %1502 = vst [vmem:[#allocation2 + $0x48] sm:$0xff] %v1470
      %1503 = vst [vmem:[#allocation2 + $0x50] sm:$0xff] %v1471
      %1504 = vst [vmem:[#allocation2 + $0x58] sm:$0xff] %v1472
      %1505 = vst [vmem:[#allocation2 + $0x60] sm:$0xff] %v1473
      %1506 = vst [vmem:[#allocation2 + $0x68] sm:$0xff] %v1474
      %1507 = vst [vmem:[#allocation2 + $0x70] sm:$0xff] %v1475
      %1508 = vst [vmem:[#allocation2 + $0x78] sm:$0xff] %v1476
      %1509 = vst [vmem:[#allocation2 + $0x80] sm:$0xff] %v1477
      %1510 = vst [vmem:[#allocation2 + $0x88] sm:$0xff] %v1478
      %1511 = vst [vmem:[#allocation2 + $0x90] sm:$0xff] %v1479
      %1512 = vst [vmem:[#allocation2 + $0x98] sm:$0xff] %v1480
      %1513 = vst [vmem:[#allocation2 + $0xa0] sm:$0xff] %v1481
      %1514 = vst [vmem:[#allocation2 + $0xa8] sm:$0xff] %v1482
      %1515 = vst [vmem:[#allocation2 + $0xb0] sm:$0xff] %v1483
      %1516 = vst [vmem:[#allocation2 + $0xb8] sm:$0xff] %v1484
      %1517 = vst [vmem:[#allocation2 + $0xc0] sm:$0xff] %v1485
      %1518 = vst [vmem:[#allocation2 + $0xc8] sm:$0xff] %v1486
      %1519 = vst [vmem:[#allocation2 + $0xd0] sm:$0xff] %v1487
      %1520 = vst [vmem:[#allocation2 + $0xd8] sm:$0xff] %v1488
      %1521 = vst [vmem:[#allocation2 + $0xe0] sm:$0xff] %v1489
      %1522 = vst [vmem:[#allocation2 + $0xe8] sm:$0xff] %v1490
      %1523 = vst [vmem:[#allocation2 + $0xf0] sm:$0xff] %v1491
      %1524 = vst [vmem:[#allocation2 + $0xf8] sm:$0xff] %v1492
      %v1525 = vld [vmem:[%s206] sm:$0xe]
      %v1526 = vld [vmem:[%s206 + $0x4] sm:$0xf]
      %v1527 = vld [vmem:[%s206 + $0x8] sm:$0x1]
      %v1528 = vld [vmem:[%s206 + $0xc] sm:$0xe]
      %v1529 = vld [vmem:[%s206 + $0x10] sm:$0xf]
      %v1530 = vld [vmem:[%s206 + $0x14] sm:$0x1]
      %v1531 = vld [vmem:[%s206 + $0x18] sm:$0xe]
      %v1532 = vld [vmem:[%s206 + $0x1c] sm:$0xf]
      %v1533 = vld [vmem:[%s206 + $0x20] sm:$0x1]
      %v1534 = vld [vmem:[%s206 + $0x24] sm:$0xe]
      %v1535 = vld [vmem:[%s206 + $0x28] sm:$0xf]
      %v1536 = vld [vmem:[%s206 + $0x2c] sm:$0x1]
      %v1537 = vld [vmem:[%s206 + $0x30] sm:$0xe]
      %v1538 = vld [vmem:[%s206 + $0x34] sm:$0xf]
      %v1539 = vld [vmem:[%s206 + $0x38] sm:$0x1]
      %v1540 = vld [vmem:[%s206 + $0x3c] sm:$0xe]
      %v1541 = vld [vmem:[%s206 + $0x40] sm:$0xf]
      %v1542 = vld [vmem:[%s206 + $0x44] sm:$0x1]
      %v1543 = vld [vmem:[%s206 + $0x48] sm:$0xe]
      %v1544 = vld [vmem:[%s206 + $0x4c] sm:$0xf]
      %v1545 = vld [vmem:[%s206 + $0x50] sm:$0x1]
      %v1546 = vld [vmem:[%s206 + $0x54] sm:$0xe]
      %v1547 = vld [vmem:[%s206 + $0x58] sm:$0xf]
      %v1548 = vld [vmem:[%s206 + $0x5c] sm:$0x1]
      %v1549 = vld [vmem:[%s206 + $0x60] sm:$0xe]
      %v1550 = vld [vmem:[%s206 + $0x64] sm:$0xf]
      %v1551 = vld [vmem:[%s206 + $0x68] sm:$0x1]
      %v1552 = vld [vmem:[%s206 + $0x6c] sm:$0xe]
      %v1553 = vld [vmem:[%s206 + $0x70] sm:$0xf]
      %v1554 = vld [vmem:[%s206 + $0x74] sm:$0x1]
      %v1555 = vld [vmem:[%s206 + $0x78] sm:$0xe]
      %v1556 = vld [vmem:[%s206 + $0x7c] sm:$0xf]
      %v1557 = vld [vmem:[%s206 + $0x80] sm:$0x1]
      %v1558 = vld [vmem:[%s206 + $0x84] sm:$0xe]
      %v1559 = vld [vmem:[%s206 + $0x88] sm:$0xf]
      %v1560 = vld [vmem:[%s206 + $0x8c] sm:$0x1]
      %v1561 = vld [vmem:[%s206 + $0x90] sm:$0xe]
      %v1562 = vld [vmem:[%s206 + $0x94] sm:$0xf]
      %v1563 = vld [vmem:[%s206 + $0x98] sm:$0x1]
      %v1564 = vld [vmem:[%s206 + $0x9c] sm:$0xe]
      %v1565 = vld [vmem:[%s206 + $0xa0] sm:$0xf]
      %v1566 = vld [vmem:[%s206 + $0xa4] sm:$0x1]
      %v1567 = vld [vmem:[%s206 + $0xa8] sm:$0xe]
      %v1568 = vld [vmem:[%s206 + $0xac] sm:$0xf]
      %v1569 = vld [vmem:[%s206 + $0xb0] sm:$0x1]
      %v1570 = vld [vmem:[%s206 + $0xb4] sm:$0xe]
      %v1571 = vld [vmem:[%s206 + $0xb8] sm:$0xf]
      %v1572 = vld [vmem:[%s206 + $0xbc] sm:$0x1]
      %v1573 = vld [vmem:[#allocation2] sm:$0xff]
      %v1574 = vld [vmem:[#allocation2 + $0x8] sm:$0xff]
      %v1575 = vld [vmem:[#allocation2 + $0x10] sm:$0xff]
      %v1576 = vld [vmem:[#allocation2 + $0x18] sm:$0xff]
      %v1577 = vld [vmem:[#allocation2 + $0x20] sm:$0xff]
      %v1578 = vld [vmem:[#allocation2 + $0x28] sm:$0xff]
      %v1579 = vld [vmem:[#allocation2 + $0x30] sm:$0xff]
      %v1580 = vld [vmem:[#allocation2 + $0x38] sm:$0xff]
      %v1581 = vld [vmem:[#allocation2 + $0x40] sm:$0xff]
      %v1582 = vld [vmem:[#allocation2 + $0x48] sm:$0xff]
      %v1583 = vld [vmem:[#allocation2 + $0x50] sm:$0xff]
      %v1584 = vld [vmem:[#allocation2 + $0x58] sm:$0xff]
      %v1585 = vld [vmem:[#allocation2 + $0x60] sm:$0xff]
      %v1586 = vld [vmem:[#allocation2 + $0x68] sm:$0xff]
      %v1587 = vld [vmem:[#allocation2 + $0x70] sm:$0xff]
      %v1588 = vld [vmem:[#allocation2 + $0x78] sm:$0xff]
      %v1589 = vld [vmem:[#allocation2 + $0x80] sm:$0xff]
      %v1590 = vld [vmem:[#allocation2 + $0x88] sm:$0xff]
      %v1591 = vld [vmem:[#allocation2 + $0x90] sm:$0xff]
      %v1592 = vld [vmem:[#allocation2 + $0x98] sm:$0xff]
      %v1593 = vld [vmem:[#allocation2 + $0xa0] sm:$0xff]
      %v1594 = vld [vmem:[#allocation2 + $0xa8] sm:$0xff]
      %v1595 = vld [vmem:[#allocation2 + $0xb0] sm:$0xff]
      %v1596 = vld [vmem:[#allocation2 + $0xb8] sm:$0xff]
      %v1597 = vld [vmem:[#allocation2 + $0xc0] sm:$0xff]
      %v1598 = vld [vmem:[#allocation2 + $0xc8] sm:$0xff]
      %v1599 = vld [vmem:[#allocation2 + $0xd0] sm:$0xff]
      %v1600 = vld [vmem:[#allocation2 + $0xd8] sm:$0xff]
      %v1601 = vld [vmem:[#allocation2 + $0xe0] sm:$0xff]
      %v1602 = vld [vmem:[#allocation2 + $0xe8] sm:$0xff]
      %v1603 = vld [vmem:[#allocation2 + $0xf0] sm:$0xff]
      %v1604 = vld [vmem:[#allocation2 + $0xf8] sm:$0xff]
      %vm1653 = vcmask 1042432
      %vm1654 = vcmask 1046532
      %vm1655 = vmor %vm1653, %vm1654
      %v1656 = vrot.slane %v1525, 5
      %v1657 = vrot.slane %v1656, 4
      %v1658 = vrot.slane %v1526, 5
      %v1659 = vsel %vm1655, %v1657, %v1658
      %v1660 = vrot.slane %v1658, 4
      %v1661 = vrot.slane %v1527, 5
      %v1662 = vsel %vm1655, %v1660, %v1661
      %v1663 = vrot.slane %v1528, 5
      %v1664 = vrot.slane %v1663, 4
      %v1665 = vrot.slane %v1529, 5
      %v1666 = vsel %vm1655, %v1664, %v1665
      %v1667 = vrot.slane %v1665, 4
      %v1668 = vrot.slane %v1530, 5
      %v1669 = vsel %vm1655, %v1667, %v1668
      %v1670 = vrot.slane %v1531, 5
      %v1671 = vrot.slane %v1670, 4
      %v1672 = vrot.slane %v1532, 5
      %v1673 = vsel %vm1655, %v1671, %v1672
      %v1674 = vrot.slane %v1672, 4
      %v1675 = vrot.slane %v1533, 5
      %v1676 = vsel %vm1655, %v1674, %v1675
      %v1677 = vrot.slane %v1534, 5
      %v1678 = vrot.slane %v1677, 4
      %v1679 = vrot.slane %v1535, 5
      %v1680 = vsel %vm1655, %v1678, %v1679
      %v1681 = vrot.slane %v1679, 4
      %v1682 = vrot.slane %v1536, 5
      %v1683 = vsel %vm1655, %v1681, %v1682
      %v1684 = vrot.slane %v1537, 5
      %v1685 = vrot.slane %v1684, 4
      %v1686 = vrot.slane %v1538, 5
      %v1687 = vsel %vm1655, %v1685, %v1686
      %v1688 = vrot.slane %v1686, 4
      %v1689 = vrot.slane %v1539, 5
      %v1690 = vsel %vm1655, %v1688, %v1689
      %v1691 = vrot.slane %v1540, 5
      %v1692 = vrot.slane %v1691, 4
      %v1693 = vrot.slane %v1541, 5
      %v1694 = vsel %vm1655, %v1692, %v1693
      %v1695 = vrot.slane %v1693, 4
      %v1696 = vrot.slane %v1542, 5
      %v1697 = vsel %vm1655, %v1695, %v1696
      %v1698 = vrot.slane %v1543, 5
      %v1699 = vrot.slane %v1698, 4
      %v1700 = vrot.slane %v1544, 5
      %v1701 = vsel %vm1655, %v1699, %v1700
      %v1702 = vrot.slane %v1700, 4
      %v1703 = vrot.slane %v1545, 5
      %v1704 = vsel %vm1655, %v1702, %v1703
      %v1705 = vrot.slane %v1546, 5
      %v1706 = vrot.slane %v1705, 4
      %v1707 = vrot.slane %v1547, 5
      %v1708 = vsel %vm1655, %v1706, %v1707
      %v1709 = vrot.slane %v1707, 4
      %v1710 = vrot.slane %v1548, 5
      %v1711 = vsel %vm1655, %v1709, %v1710
      %v1712 = vrot.slane %v1549, 5
      %v1713 = vrot.slane %v1712, 4
      %v1714 = vrot.slane %v1550, 5
      %v1715 = vsel %vm1655, %v1713, %v1714
      %v1716 = vrot.slane %v1714, 4
      %v1717 = vrot.slane %v1551, 5
      %v1718 = vsel %vm1655, %v1716, %v1717
      %v1719 = vrot.slane %v1552, 5
      %v1720 = vrot.slane %v1719, 4
      %v1721 = vrot.slane %v1553, 5
      %v1722 = vsel %vm1655, %v1720, %v1721
      %v1723 = vrot.slane %v1721, 4
      %v1724 = vrot.slane %v1554, 5
      %v1725 = vsel %vm1655, %v1723, %v1724
      %v1726 = vrot.slane %v1555, 5
      %v1727 = vrot.slane %v1726, 4
      %v1728 = vrot.slane %v1556, 5
      %v1729 = vsel %vm1655, %v1727, %v1728
      %v1730 = vrot.slane %v1728, 4
      %v1731 = vrot.slane %v1557, 5
      %v1732 = vsel %vm1655, %v1730, %v1731
      %v1733 = vrot.slane %v1558, 5
      %v1734 = vrot.slane %v1733, 4
      %v1735 = vrot.slane %v1559, 5
      %v1736 = vsel %vm1655, %v1734, %v1735
      %v1737 = vrot.slane %v1735, 4
      %v1738 = vrot.slane %v1560, 5
      %v1739 = vsel %vm1655, %v1737, %v1738
      %v1740 = vrot.slane %v1561, 5
      %v1741 = vrot.slane %v1740, 4
      %v1742 = vrot.slane %v1562, 5
      %v1743 = vsel %vm1655, %v1741, %v1742
      %v1744 = vrot.slane %v1742, 4
      %v1745 = vrot.slane %v1563, 5
      %v1746 = vsel %vm1655, %v1744, %v1745
      %v1747 = vrot.slane %v1564, 5
      %v1748 = vrot.slane %v1747, 4
      %v1749 = vrot.slane %v1565, 5
      %v1750 = vsel %vm1655, %v1748, %v1749
      %v1751 = vrot.slane %v1749, 4
      %v1752 = vrot.slane %v1566, 5
      %v1753 = vsel %vm1655, %v1751, %v1752
      %v1754 = vrot.slane %v1567, 5
      %v1755 = vrot.slane %v1754, 4
      %v1756 = vrot.slane %v1568, 5
      %v1757 = vsel %vm1655, %v1755, %v1756
      %v1758 = vrot.slane %v1756, 4
      %v1759 = vrot.slane %v1569, 5
      %v1760 = vsel %vm1655, %v1758, %v1759
      %v1761 = vrot.slane %v1570, 5
      %v1762 = vrot.slane %v1761, 4
      %v1763 = vrot.slane %v1571, 5
      %v1764 = vsel %vm1655, %v1762, %v1763
      %v1765 = vrot.slane %v1763, 4
      %v1766 = vrot.slane %v1572, 5
      %v1767 = vsel %vm1655, %v1765, %v1766
      %s1768 = scalar_lea.vmem %s210, 128
      %v1769 = vld [vmem:[%s1768] sm:$0xf]
      %v1770 = vld [vmem:[%s1768 + $0x4] sm:$0xf]
      %v1771 = vld [vmem:[%s1768 + $0x8] sm:$0xf]
      %v1772 = vld [vmem:[%s1768 + $0xc] sm:$0xf]
      %v1773 = vld [vmem:[%s1768 + $0x10] sm:$0xf]
      %v1774 = vld [vmem:[%s1768 + $0x14] sm:$0xf]
      %v1775 = vld [vmem:[%s1768 + $0x18] sm:$0xf]
      %v1776 = vld [vmem:[%s1768 + $0x1c] sm:$0xf]
      %v1777 = vld [vmem:[%s1768 + $0x20] sm:$0xf]
      %v1778 = vld [vmem:[%s1768 + $0x24] sm:$0xf]
      %v1779 = vld [vmem:[%s1768 + $0x28] sm:$0xf]
      %v1780 = vld [vmem:[%s1768 + $0x2c] sm:$0xf]
      %v1781 = vld [vmem:[%s1768 + $0x30] sm:$0xf]
      %v1782 = vld [vmem:[%s1768 + $0x34] sm:$0xf]
      %v1783 = vld [vmem:[%s1768 + $0x38] sm:$0xf]
      %v1784 = vld [vmem:[%s1768 + $0x3c] sm:$0xf]
      %v1785 = vunpack.c.l.b16 %v1659
      %v1786 = vunpack.c.l.b16 %v1662
      %v1787 = vunpack.c.l.b16 %v1666
      %v1788 = vunpack.c.l.b16 %v1669
      %v1789 = vunpack.c.l.b16 %v1673
      %v1790 = vunpack.c.l.b16 %v1676
      %v1791 = vunpack.c.l.b16 %v1680
      %v1792 = vunpack.c.l.b16 %v1683
      %v1793 = vunpack.c.l.b16 %v1687
      %v1794 = vunpack.c.l.b16 %v1690
      %v1795 = vunpack.c.l.b16 %v1694
      %v1796 = vunpack.c.l.b16 %v1697
      %v1797 = vunpack.c.l.b16 %v1701
      %v1798 = vunpack.c.l.b16 %v1704
      %v1799 = vunpack.c.l.b16 %v1708
      %v1800 = vunpack.c.l.b16 %v1711
      %v1801 = vunpack.c.l.b16 %v1715
      %v1802 = vunpack.c.l.b16 %v1718
      %v1803 = vunpack.c.l.b16 %v1722
      %v1804 = vunpack.c.l.b16 %v1725
      %v1805 = vunpack.c.l.b16 %v1729
      %v1806 = vunpack.c.l.b16 %v1732
      %v1807 = vunpack.c.l.b16 %v1736
      %v1808 = vunpack.c.l.b16 %v1739
      %v1809 = vunpack.c.l.b16 %v1743
      %v1810 = vunpack.c.l.b16 %v1746
      %v1811 = vunpack.c.l.b16 %v1750
      %v1812 = vunpack.c.l.b16 %v1753
      %v1813 = vunpack.c.l.b16 %v1757
      %v1814 = vunpack.c.l.b16 %v1760
      %v1815 = vunpack.c.l.b16 %v1764
      %v1816 = vunpack.c.l.b16 %v1767
      %v1817 = vpack.c.b16 %v1786, %v1785
      %v1818 = vpack.c.b16 %v1788, %v1787
      %v1819 = vpack.c.b16 %v1790, %v1789
      %v1820 = vpack.c.b16 %v1792, %v1791
      %v1821 = vpack.c.b16 %v1794, %v1793
      %v1822 = vpack.c.b16 %v1796, %v1795
      %v1823 = vpack.c.b16 %v1798, %v1797
      %v1824 = vpack.c.b16 %v1800, %v1799
      %v1825 = vpack.c.b16 %v1802, %v1801
      %v1826 = vpack.c.b16 %v1804, %v1803
      %v1827 = vpack.c.b16 %v1806, %v1805
      %v1828 = vpack.c.b16 %v1808, %v1807
      %v1829 = vpack.c.b16 %v1810, %v1809
      %v1830 = vpack.c.b16 %v1812, %v1811
      %v1831 = vpack.c.b16 %v1814, %v1813
      %v1832 = vpack.c.b16 %v1816, %v1815
      %v1865 = vunpack.c.l.b16 %v1769
      %v1866 = vunpack.c.l.b16 %v1770
      %v1867 = vunpack.c.l.b16 %v1771
      %v1868 = vunpack.c.l.b16 %v1772
      %v1869 = vunpack.c.l.b16 %v1773
      %v1870 = vunpack.c.l.b16 %v1774
      %v1871 = vunpack.c.l.b16 %v1775
      %v1872 = vunpack.c.l.b16 %v1776
      %v1873 = vunpack.c.l.b16 %v1777
      %v1874 = vunpack.c.l.b16 %v1778
      %v1875 = vunpack.c.l.b16 %v1779
      %v1876 = vunpack.c.l.b16 %v1780
      %v1877 = vunpack.c.l.b16 %v1781
      %v1878 = vunpack.c.l.b16 %v1782
      %v1879 = vunpack.c.l.b16 %v1783
      %v1880 = vunpack.c.l.b16 %v1784
      %v1881 = vpack.c.b16 %v1866, %v1865
      %v1882 = vpack.c.b16 %v1868, %v1867
      %v1883 = vpack.c.b16 %v1870, %v1869
      %v1884 = vpack.c.b16 %v1872, %v1871
      %v1885 = vpack.c.b16 %v1874, %v1873
      %v1886 = vpack.c.b16 %v1876, %v1875
      %v1887 = vpack.c.b16 %v1878, %v1877
      %v1888 = vpack.c.b16 %v1880, %v1879
      %1897 = vmatprep.subr.bf16.mxu0 0
      %1898 = vmatpush1.bf16.msra.mxu0 %v1888
      %1899 = vmatprep.subr.bf16.mxu0 0
      %1900 = vmatpush1.bf16.msra.mxu0 %v1887
      %1901 = vmatprep.subr.bf16.mxu0 0
      %1902 = vmatpush1.bf16.msra.mxu0 %v1886
      %1903 = vmatprep.subr.bf16.mxu0 0
      %1904 = vmatpush1.bf16.msra.mxu0 %v1885
      %1905 = vmatprep.subr.bf16.mxu0 0
      %1906 = vmatpush1.bf16.msra.mxu0 %v1884
      %1907 = vmatprep.subr.bf16.mxu0 0
      %1908 = vmatpush1.bf16.msra.mxu0 %v1883
      %1909 = vmatprep.subr.bf16.mxu0 0
      %1910 = vmatpush1.bf16.msra.mxu0 %v1882
      %1911 = vmatprep.subr.bf16.mxu0 0
      %1912 = vmatpush1.bf16.msra.mxu0 %v1881
      %1913 = vmatprep.subr.bf16.mxu0 0
      %1914 = vmatpush2.bf16.msra.mxu0 0
      %1915 = vmatprep.subr.bf16.mxu0 0
      %1916 = vmatpush2.bf16.msra.mxu0 0
      %1917 = vmatprep.subr.bf16.mxu0 0
      %1918 = vmatpush2.bf16.msra.mxu0 0
      %1919 = vmatprep.subr.bf16.mxu0 0
      %1920 = vmatpush2.bf16.msra.mxu0 0
      %1921 = vmatprep.subr.bf16.mxu0 0
      %1922 = vmatpush2.bf16.msra.mxu0 0
      %1923 = vmatprep.subr.bf16.mxu0 0
      %1924 = vmatpush2.bf16.msra.mxu0 0
      %1925 = vmatprep.subr.bf16.mxu0 0
      %1926 = vmatpush2.bf16.msra.mxu0 0
      %1927 = vmatprep.subr.bf16.mxu0 0
      %1928 = vmatpush2.bf16.msra.mxu0 0
      %1929 = vmatprep.mubr.bf16.mxu0 0
      %1930 = vmatmul.mubr.bf16.gmra.mxu0 %v1817
      %v1931 = vpop.f32.mrf.mxu0
      %v1932 = vadd.f32 0.0, %v1931
      %v1933 = vpop.f32.mrf.mxu0
      %v1934 = vpop.f32.mrf.mxu0
      %v1935 = vadd.f32 0.0, %v1934
      %v1936 = vpop.f32.mrf.mxu0
      %1937 = vmatprep.mubr.bf16.mxu0 0
      %1938 = vmatmul.mubr.bf16.gmra.mxu0 %v1818
      %v1939 = vpop.f32.mrf.mxu0
      %v1940 = vadd.f32 0.0, %v1939
      %v1941 = vpop.f32.mrf.mxu0
      %v1942 = vpop.f32.mrf.mxu0
      %v1943 = vadd.f32 0.0, %v1942
      %v1944 = vpop.f32.mrf.mxu0
      %1945 = vmatprep.mubr.bf16.mxu0 0
      %1946 = vmatmul.mubr.bf16.gmra.mxu0 %v1819
      %v1947 = vpop.f32.mrf.mxu0
      %v1948 = vadd.f32 0.0, %v1947
      %v1949 = vpop.f32.mrf.mxu0
      %v1950 = vpop.f32.mrf.mxu0
      %v1951 = vadd.f32 0.0, %v1950
      %v1952 = vpop.f32.mrf.mxu0
      %1953 = vmatprep.mubr.bf16.mxu0 0
      %1954 = vmatmul.mubr.bf16.gmra.mxu0 %v1820
      %v1955 = vpop.f32.mrf.mxu0
      %v1956 = vadd.f32 0.0, %v1955
      %v1957 = vpop.f32.mrf.mxu0
      %v1958 = vpop.f32.mrf.mxu0
      %v1959 = vadd.f32 0.0, %v1958
      %v1960 = vpop.f32.mrf.mxu0
      %1961 = vmatprep.mubr.bf16.mxu0 0
      %1962 = vmatmul.mubr.bf16.gmra.mxu0 %v1821
      %v1963 = vpop.f32.mrf.mxu0
      %v1964 = vadd.f32 0.0, %v1963
      %v1965 = vpop.f32.mrf.mxu0
      %v1966 = vpop.f32.mrf.mxu0
      %v1967 = vadd.f32 0.0, %v1966
      %v1968 = vpop.f32.mrf.mxu0
      %1969 = vmatprep.mubr.bf16.mxu0 0
      %1970 = vmatmul.mubr.bf16.gmra.mxu0 %v1822
      %v1971 = vpop.f32.mrf.mxu0
      %v1972 = vadd.f32 0.0, %v1971
      %v1973 = vpop.f32.mrf.mxu0
      %v1974 = vpop.f32.mrf.mxu0
      %v1975 = vadd.f32 0.0, %v1974
      %v1976 = vpop.f32.mrf.mxu0
      %1977 = vmatprep.mubr.bf16.mxu0 0
      %1978 = vmatmul.mubr.bf16.gmra.mxu0 %v1823
      %v1979 = vpop.f32.mrf.mxu0
      %v1980 = vadd.f32 0.0, %v1979
      %v1981 = vpop.f32.mrf.mxu0
      %v1982 = vpop.f32.mrf.mxu0
      %v1983 = vadd.f32 0.0, %v1982
      %v1984 = vpop.f32.mrf.mxu0
      %1985 = vmatprep.mubr.bf16.mxu0 0
      %1986 = vmatmul.mubr.bf16.gmra.mxu0 %v1824
      %v1987 = vpop.f32.mrf.mxu0
      %v1988 = vadd.f32 0.0, %v1987
      %v1989 = vpop.f32.mrf.mxu0
      %v1990 = vpop.f32.mrf.mxu0
      %v1991 = vadd.f32 0.0, %v1990
      %v1992 = vpop.f32.mrf.mxu0
      %1993 = vmatprep.mubr.bf16.mxu0 0
      %1994 = vmatmul.mubr.bf16.gmra.mxu0 %v1825
      %v1995 = vpop.f32.mrf.mxu0
      %v1996 = vadd.f32 0.0, %v1995
      %v1997 = vpop.f32.mrf.mxu0
      %v1998 = vpop.f32.mrf.mxu0
      %v1999 = vadd.f32 0.0, %v1998
      %v2000 = vpop.f32.mrf.mxu0
      %2001 = vmatprep.mubr.bf16.mxu0 0
      %2002 = vmatmul.mubr.bf16.gmra.mxu0 %v1826
      %v2003 = vpop.f32.mrf.mxu0
      %v2004 = vadd.f32 0.0, %v2003
      %v2005 = vpop.f32.mrf.mxu0
      %v2006 = vpop.f32.mrf.mxu0
      %v2007 = vadd.f32 0.0, %v2006
      %v2008 = vpop.f32.mrf.mxu0
      %2009 = vmatprep.mubr.bf16.mxu0 0
      %2010 = vmatmul.mubr.bf16.gmra.mxu0 %v1827
      %v2011 = vpop.f32.mrf.mxu0
      %v2012 = vadd.f32 0.0, %v2011
      %v2013 = vpop.f32.mrf.mxu0
      %v2014 = vpop.f32.mrf.mxu0
      %v2015 = vadd.f32 0.0, %v2014
      %v2016 = vpop.f32.mrf.mxu0
      %2017 = vmatprep.mubr.bf16.mxu0 0
      %2018 = vmatmul.mubr.bf16.gmra.mxu0 %v1828
      %v2019 = vpop.f32.mrf.mxu0
      %v2020 = vadd.f32 0.0, %v2019
      %v2021 = vpop.f32.mrf.mxu0
      %v2022 = vpop.f32.mrf.mxu0
      %v2023 = vadd.f32 0.0, %v2022
      %v2024 = vpop.f32.mrf.mxu0
      %2025 = vmatprep.mubr.bf16.mxu0 0
      %2026 = vmatmul.mubr.bf16.gmra.mxu0 %v1829
      %v2027 = vpop.f32.mrf.mxu0
      %v2028 = vadd.f32 0.0, %v2027
      %v2029 = vpop.f32.mrf.mxu0
      %v2030 = vpop.f32.mrf.mxu0
      %v2031 = vadd.f32 0.0, %v2030
      %v2032 = vpop.f32.mrf.mxu0
      %2033 = vmatprep.mubr.bf16.mxu0 0
      %2034 = vmatmul.mubr.bf16.gmra.mxu0 %v1830
      %v2035 = vpop.f32.mrf.mxu0
      %v2036 = vadd.f32 0.0, %v2035
      %v2037 = vpop.f32.mrf.mxu0
      %v2038 = vpop.f32.mrf.mxu0
      %v2039 = vadd.f32 0.0, %v2038
      %v2040 = vpop.f32.mrf.mxu0
      %2041 = vmatprep.mubr.bf16.mxu0 0
      %2042 = vmatmul.mubr.bf16.gmra.mxu0 %v1831
      %v2043 = vpop.f32.mrf.mxu0
      %v2044 = vadd.f32 0.0, %v2043
      %v2045 = vpop.f32.mrf.mxu0
      %v2046 = vpop.f32.mrf.mxu0
      %v2047 = vadd.f32 0.0, %v2046
      %v2048 = vpop.f32.mrf.mxu0
      %2049 = vmatprep.mubr.bf16.mxu0 0
      %2050 = vmatmul.mubr.bf16.gmra.mxu0 %v1832
      %v2051 = vpop.f32.mrf.mxu0
      %v2052 = vadd.f32 0.0, %v2051
      %v2053 = vpop.f32.mrf.mxu0
      %v2054 = vpop.f32.mrf.mxu0
      %v2055 = vadd.f32 0.0, %v2054
      %v2056 = vpop.f32.mrf.mxu0
      %2057 = vdwg.mxu0
      %v2058 = vadd.f32 %v1573, %v1932
      %v2059 = vadd.f32 %v1574, %v1935
      %v2060 = vadd.f32 %v1575, %v1940
      %v2061 = vadd.f32 %v1576, %v1943
      %v2062 = vadd.f32 %v1577, %v1948
      %v2063 = vadd.f32 %v1578, %v1951
      %v2064 = vadd.f32 %v1579, %v1956
      %v2065 = vadd.f32 %v1580, %v1959
      %v2066 = vadd.f32 %v1581, %v1964
      %v2067 = vadd.f32 %v1582, %v1967
      %v2068 = vadd.f32 %v1583, %v1972
      %v2069 = vadd.f32 %v1584, %v1975
      %v2070 = vadd.f32 %v1585, %v1980
      %v2071 = vadd.f32 %v1586, %v1983
      %v2072 = vadd.f32 %v1587, %v1988
      %v2073 = vadd.f32 %v1588, %v1991
      %v2074 = vadd.f32 %v1589, %v1996
      %v2075 = vadd.f32 %v1590, %v1999
      %v2076 = vadd.f32 %v1591, %v2004
      %v2077 = vadd.f32 %v1592, %v2007
      %v2078 = vadd.f32 %v1593, %v2012
      %v2079 = vadd.f32 %v1594, %v2015
      %v2080 = vadd.f32 %v1595, %v2020
      %v2081 = vadd.f32 %v1596, %v2023
      %v2082 = vadd.f32 %v1597, %v2028
      %v2083 = vadd.f32 %v1598, %v2031
      %v2084 = vadd.f32 %v1599, %v2036
      %v2085 = vadd.f32 %v1600, %v2039
      %v2086 = vadd.f32 %v1601, %v2044
      %v2087 = vadd.f32 %v1602, %v2047
      %v2088 = vadd.f32 %v1603, %v2052
      %v2089 = vadd.f32 %v1604, %v2055
      %2090 = vst [vmem:[#allocation2] sm:$0xff] %v2058
      %2091 = vst [vmem:[#allocation2 + $0x8] sm:$0xff] %v2059
      %2092 = vst [vmem:[#allocation2 + $0x10] sm:$0xff] %v2060
      %2093 = vst [vmem:[#allocation2 + $0x18] sm:$0xff] %v2061
      %2094 = vst [vmem:[#allocation2 + $0x20] sm:$0xff] %v2062
      %2095 = vst [vmem:[#allocation2 + $0x28] sm:$0xff] %v2063
      %2096 = vst [vmem:[#allocation2 + $0x30] sm:$0xff] %v2064
      %2097 = vst [vmem:[#allocation2 + $0x38] sm:$0xff] %v2065
      %2098 = vst [vmem:[#allocation2 + $0x40] sm:$0xff] %v2066
      %2099 = vst [vmem:[#allocation2 + $0x48] sm:$0xff] %v2067
      %2100 = vst [vmem:[#allocation2 + $0x50] sm:$0xff] %v2068
      %2101 = vst [vmem:[#allocation2 + $0x58] sm:$0xff] %v2069
      %2102 = vst [vmem:[#allocation2 + $0x60] sm:$0xff] %v2070
      %2103 = vst [vmem:[#allocation2 + $0x68] sm:$0xff] %v2071
      %2104 = vst [vmem:[#allocation2 + $0x70] sm:$0xff] %v2072
      %2105 = vst [vmem:[#allocation2 + $0x78] sm:$0xff] %v2073
      %2106 = vst [vmem:[#allocation2 + $0x80] sm:$0xff] %v2074
      %2107 = vst [vmem:[#allocation2 + $0x88] sm:$0xff] %v2075
      %2108 = vst [vmem:[#allocation2 + $0x90] sm:$0xff] %v2076
      %2109 = vst [vmem:[#allocation2 + $0x98] sm:$0xff] %v2077
      %2110 = vst [vmem:[#allocation2 + $0xa0] sm:$0xff] %v2078
      %2111 = vst [vmem:[#allocation2 + $0xa8] sm:$0xff] %v2079
      %2112 = vst [vmem:[#allocation2 + $0xb0] sm:$0xff] %v2080
      %2113 = vst [vmem:[#allocation2 + $0xb8] sm:$0xff] %v2081
      %2114 = vst [vmem:[#allocation2 + $0xc0] sm:$0xff] %v2082
      %2115 = vst [vmem:[#allocation2 + $0xc8] sm:$0xff] %v2083
      %2116 = vst [vmem:[#allocation2 + $0xd0] sm:$0xff] %v2084
      %2117 = vst [vmem:[#allocation2 + $0xd8] sm:$0xff] %v2085
      %2118 = vst [vmem:[#allocation2 + $0xe0] sm:$0xff] %v2086
      %2119 = vst [vmem:[#allocation2 + $0xe8] sm:$0xff] %v2087
      %2120 = vst [vmem:[#allocation2 + $0xf0] sm:$0xff] %v2088
      %2121 = vst [vmem:[#allocation2 + $0xf8] sm:$0xff] %v2089
      %s2122 = scalar_lea.vmem %s206, 12
      %v2123 = vld [vmem:[%s2122] sm:$0xf]
      %v2124 = vld [vmem:[%s2122 + $0x4] sm:$0xf]
      %v2125 = vld [vmem:[%s2122 + $0xc] sm:$0xf]
      %v2126 = vld [vmem:[%s2122 + $0x10] sm:$0xf]
      %v2127 = vld [vmem:[%s2122 + $0x18] sm:$0xf]
      %v2128 = vld [vmem:[%s2122 + $0x1c] sm:$0xf]
      %v2129 = vld [vmem:[%s2122 + $0x24] sm:$0xf]
      %v2130 = vld [vmem:[%s2122 + $0x28] sm:$0xf]
      %v2131 = vld [vmem:[%s2122 + $0x30] sm:$0xf]
      %v2132 = vld [vmem:[%s2122 + $0x34] sm:$0xf]
      %v2133 = vld [vmem:[%s2122 + $0x3c] sm:$0xf]
      %v2134 = vld [vmem:[%s2122 + $0x40] sm:$0xf]
      %v2135 = vld [vmem:[%s2122 + $0x48] sm:$0xf]
      %v2136 = vld [vmem:[%s2122 + $0x4c] sm:$0xf]
      %v2137 = vld [vmem:[%s2122 + $0x54] sm:$0xf]
      %v2138 = vld [vmem:[%s2122 + $0x58] sm:$0xf]
      %v2139 = vld [vmem:[%s2122 + $0x60] sm:$0xf]
      %v2140 = vld [vmem:[%s2122 + $0x64] sm:$0xf]
      %v2141 = vld [vmem:[%s2122 + $0x6c] sm:$0xf]
      %v2142 = vld [vmem:[%s2122 + $0x70] sm:$0xf]
      %v2143 = vld [vmem:[%s2122 + $0x78] sm:$0xf]
      %v2144 = vld [vmem:[%s2122 + $0x7c] sm:$0xf]
      %v2145 = vld [vmem:[%s2122 + $0x84] sm:$0xf]
      %v2146 = vld [vmem:[%s2122 + $0x88] sm:$0xf]
      %v2147 = vld [vmem:[%s2122 + $0x90] sm:$0xf]
      %v2148 = vld [vmem:[%s2122 + $0x94] sm:$0xf]
      %v2149 = vld [vmem:[%s2122 + $0x9c] sm:$0xf]
      %v2150 = vld [vmem:[%s2122 + $0xa0] sm:$0xf]
      %v2151 = vld [vmem:[%s2122 + $0xa8] sm:$0xf]
      %v2152 = vld [vmem:[%s2122 + $0xac] sm:$0xf]
      %v2153 = vld [vmem:[%s2122 + $0xb4] sm:$0xf]
      %v2154 = vld [vmem:[%s2122 + $0xb8] sm:$0xf]
      %v2155 = vld [vmem:[#allocation2] sm:$0xff]
      %v2156 = vld [vmem:[#allocation2 + $0x8] sm:$0xff]
      %v2157 = vld [vmem:[#allocation2 + $0x10] sm:$0xff]
      %v2158 = vld [vmem:[#allocation2 + $0x18] sm:$0xff]
      %v2159 = vld [vmem:[#allocation2 + $0x20] sm:$0xff]
      %v2160 = vld [vmem:[#allocation2 + $0x28] sm:$0xff]
      %v2161 = vld [vmem:[#allocation2 + $0x30] sm:$0xff]
      %v2162 = vld [vmem:[#allocation2 + $0x38] sm:$0xff]
      %v2163 = vld [vmem:[#allocation2 + $0x40] sm:$0xff]
      %v2164 = vld [vmem:[#allocation2 + $0x48] sm:$0xff]
      %v2165 = vld [vmem:[#allocation2 + $0x50] sm:$0xff]
      %v2166 = vld [vmem:[#allocation2 + $0x58] sm:$0xff]
      %v2167 = vld [vmem:[#allocation2 + $0x60] sm:$0xff]
      %v2168 = vld [vmem:[#allocation2 + $0x68] sm:$0xff]
      %v2169 = vld [vmem:[#allocation2 + $0x70] sm:$0xff]
      %v2170 = vld [vmem:[#allocation2 + $0x78] sm:$0xff]
      %v2171 = vld [vmem:[#allocation2 + $0x80] sm:$0xff]
      %v2172 = vld [vmem:[#allocation2 + $0x88] sm:$0xff]
      %v2173 = vld [vmem:[#allocation2 + $0x90] sm:$0xff]
      %v2174 = vld [vmem:[#allocation2 + $0x98] sm:$0xff]
      %v2175 = vld [vmem:[#allocation2 + $0xa0] sm:$0xff]
      %v2176 = vld [vmem:[#allocation2 + $0xa8] sm:$0xff]
      %v2177 = vld [vmem:[#allocation2 + $0xb0] sm:$0xff]
      %v2178 = vld [vmem:[#allocation2 + $0xb8] sm:$0xff]
      %v2179 = vld [vmem:[#allocation2 + $0xc0] sm:$0xff]
      %v2180 = vld [vmem:[#allocation2 + $0xc8] sm:$0xff]
      %v2181 = vld [vmem:[#allocation2 + $0xd0] sm:$0xff]
      %v2182 = vld [vmem:[#allocation2 + $0xd8] sm:$0xff]
      %v2183 = vld [vmem:[#allocation2 + $0xe0] sm:$0xff]
      %v2184 = vld [vmem:[#allocation2 + $0xe8] sm:$0xff]
      %v2185 = vld [vmem:[#allocation2 + $0xf0] sm:$0xff]
      %v2186 = vld [vmem:[#allocation2 + $0xf8] sm:$0xff]
      %s2187 = scalar_lea.vmem %s210, 192
      %v2188 = vld [vmem:[%s2187] sm:$0xf]
      %v2189 = vld [vmem:[%s2187 + $0x4] sm:$0xf]
      %v2190 = vld [vmem:[%s2187 + $0x8] sm:$0xf]
      %v2191 = vld [vmem:[%s2187 + $0xc] sm:$0xf]
      %v2192 = vld [vmem:[%s2187 + $0x10] sm:$0xf]
      %v2193 = vld [vmem:[%s2187 + $0x14] sm:$0xf]
      %v2194 = vld [vmem:[%s2187 + $0x18] sm:$0xf]
      %v2195 = vld [vmem:[%s2187 + $0x1c] sm:$0xf]
      %v2196 = vld [vmem:[%s2187 + $0x20] sm:$0xf]
      %v2197 = vld [vmem:[%s2187 + $0x24] sm:$0xf]
      %v2198 = vld [vmem:[%s2187 + $0x28] sm:$0xf]
      %v2199 = vld [vmem:[%s2187 + $0x2c] sm:$0xf]
      %v2200 = vld [vmem:[%s2187 + $0x30] sm:$0xf]
      %v2201 = vld [vmem:[%s2187 + $0x34] sm:$0xf]
      %v2202 = vld [vmem:[%s2187 + $0x38] sm:$0xf]
      %v2203 = vld [vmem:[%s2187 + $0x3c] sm:$0xf]
      %v2236 = vunpack.c.l.b16 %v2123
      %v2237 = vunpack.c.l.b16 %v2124
      %v2238 = vunpack.c.l.b16 %v2125
      %v2239 = vunpack.c.l.b16 %v2126
      %v2240 = vunpack.c.l.b16 %v2127
      %v2241 = vunpack.c.l.b16 %v2128
      %v2242 = vunpack.c.l.b16 %v2129
      %v2243 = vunpack.c.l.b16 %v2130
      %v2244 = vunpack.c.l.b16 %v2131
      %v2245 = vunpack.c.l.b16 %v2132
      %v2246 = vunpack.c.l.b16 %v2133
      %v2247 = vunpack.c.l.b16 %v2134
      %v2248 = vunpack.c.l.b16 %v2135
      %v2249 = vunpack.c.l.b16 %v2136
      %v2250 = vunpack.c.l.b16 %v2137
      %v2251 = vunpack.c.l.b16 %v2138
      %v2252 = vunpack.c.l.b16 %v2139
      %v2253 = vunpack.c.l.b16 %v2140
      %v2254 = vunpack.c.l.b16 %v2141
      %v2255 = vunpack.c.l.b16 %v2142
      %v2256 = vunpack.c.l.b16 %v2143
      %v2257 = vunpack.c.l.b16 %v2144
      %v2258 = vunpack.c.l.b16 %v2145
      %v2259 = vunpack.c.l.b16 %v2146
      %v2260 = vunpack.c.l.b16 %v2147
      %v2261 = vunpack.c.l.b16 %v2148
      %v2262 = vunpack.c.l.b16 %v2149
      %v2263 = vunpack.c.l.b16 %v2150
      %v2264 = vunpack.c.l.b16 %v2151
      %v2265 = vunpack.c.l.b16 %v2152
      %v2266 = vunpack.c.l.b16 %v2153
      %v2267 = vunpack.c.l.b16 %v2154
      %v2268 = vpack.c.b16 %v2237, %v2236
      %v2269 = vpack.c.b16 %v2239, %v2238
      %v2270 = vpack.c.b16 %v2241, %v2240
      %v2271 = vpack.c.b16 %v2243, %v2242
      %v2272 = vpack.c.b16 %v2245, %v2244
      %v2273 = vpack.c.b16 %v2247, %v2246
      %v2274 = vpack.c.b16 %v2249, %v2248
      %v2275 = vpack.c.b16 %v2251, %v2250
      %v2276 = vpack.c.b16 %v2253, %v2252
      %v2277 = vpack.c.b16 %v2255, %v2254
      %v2278 = vpack.c.b16 %v2257, %v2256
      %v2279 = vpack.c.b16 %v2259, %v2258
      %v2280 = vpack.c.b16 %v2261, %v2260
      %v2281 = vpack.c.b16 %v2263, %v2262
      %v2282 = vpack.c.b16 %v2265, %v2264
      %v2283 = vpack.c.b16 %v2267, %v2266
      %v2316 = vunpack.c.l.b16 %v2188
      %v2317 = vunpack.c.l.b16 %v2189
      %v2318 = vunpack.c.l.b16 %v2190
      %v2319 = vunpack.c.l.b16 %v2191
      %v2320 = vunpack.c.l.b16 %v2192
      %v2321 = vunpack.c.l.b16 %v2193
      %v2322 = vunpack.c.l.b16 %v2194
      %v2323 = vunpack.c.l.b16 %v2195
      %v2324 = vunpack.c.l.b16 %v2196
      %v2325 = vunpack.c.l.b16 %v2197
      %v2326 = vunpack.c.l.b16 %v2198
      %v2327 = vunpack.c.l.b16 %v2199
      %v2328 = vunpack.c.l.b16 %v2200
      %v2329 = vunpack.c.l.b16 %v2201
      %v2330 = vunpack.c.l.b16 %v2202
      %v2331 = vunpack.c.l.b16 %v2203
      %v2332 = vpack.c.b16 %v2317, %v2316
      %v2333 = vpack.c.b16 %v2319, %v2318
      %v2334 = vpack.c.b16 %v2321, %v2320
      %v2335 = vpack.c.b16 %v2323, %v2322
      %v2336 = vpack.c.b16 %v2325, %v2324
      %v2337 = vpack.c.b16 %v2327, %v2326
      %v2338 = vpack.c.b16 %v2329, %v2328
      %v2339 = vpack.c.b16 %v2331, %v2330
      %2348 = vmatprep.subr.bf16.mxu0 0
      %2349 = vmatpush1.bf16.msra.mxu0 %v2339
      %2350 = vmatprep.subr.bf16.mxu0 0
      %2351 = vmatpush1.bf16.msra.mxu0 %v2338
      %2352 = vmatprep.subr.bf16.mxu0 0
      %2353 = vmatpush1.bf16.msra.mxu0 %v2337
      %2354 = vmatprep.subr.bf16.mxu0 0
      %2355 = vmatpush1.bf16.msra.mxu0 %v2336
      %2356 = vmatprep.subr.bf16.mxu0 0
      %2357 = vmatpush1.bf16.msra.mxu0 %v2335
      %2358 = vmatprep.subr.bf16.mxu0 0
      %2359 = vmatpush1.bf16.msra.mxu0 %v2334
      %2360 = vmatprep.subr.bf16.mxu0 0
      %2361 = vmatpush1.bf16.msra.mxu0 %v2333
      %2362 = vmatprep.subr.bf16.mxu0 0
      %2363 = vmatpush1.bf16.msra.mxu0 %v2332
      %2364 = vmatprep.subr.bf16.mxu0 0
      %2365 = vmatpush2.bf16.msra.mxu0 0
      %2366 = vmatprep.subr.bf16.mxu0 0
      %2367 = vmatpush2.bf16.msra.mxu0 0
      %2368 = vmatprep.subr.bf16.mxu0 0
      %2369 = vmatpush2.bf16.msra.mxu0 0
      %2370 = vmatprep.subr.bf16.mxu0 0
      %2371 = vmatpush2.bf16.msra.mxu0 0
      %2372 = vmatprep.subr.bf16.mxu0 0
      %2373 = vmatpush2.bf16.msra.mxu0 0
      %2374 = vmatprep.subr.bf16.mxu0 0
      %2375 = vmatpush2.bf16.msra.mxu0 0
      %2376 = vmatprep.subr.bf16.mxu0 0
      %2377 = vmatpush2.bf16.msra.mxu0 0
      %2378 = vmatprep.subr.bf16.mxu0 0
      %2379 = vmatpush2.bf16.msra.mxu0 0
      %2380 = vmatprep.mubr.bf16.mxu0 0
      %2381 = vmatmul.mubr.bf16.gmra.mxu0 %v2268
      %v2382 = vpop.f32.mrf.mxu0
      %v2383 = vadd.f32 0.0, %v2382
      %v2384 = vpop.f32.mrf.mxu0
      %v2385 = vpop.f32.mrf.mxu0
      %v2386 = vadd.f32 0.0, %v2385
      %v2387 = vpop.f32.mrf.mxu0
      %2388 = vmatprep.mubr.bf16.mxu0 0
      %2389 = vmatmul.mubr.bf16.gmra.mxu0 %v2269
      %v2390 = vpop.f32.mrf.mxu0
      %v2391 = vadd.f32 0.0, %v2390
      %v2392 = vpop.f32.mrf.mxu0
      %v2393 = vpop.f32.mrf.mxu0
      %v2394 = vadd.f32 0.0, %v2393
      %v2395 = vpop.f32.mrf.mxu0
      %2396 = vmatprep.mubr.bf16.mxu0 0
      %2397 = vmatmul.mubr.bf16.gmra.mxu0 %v2270
      %v2398 = vpop.f32.mrf.mxu0
      %v2399 = vadd.f32 0.0, %v2398
      %v2400 = vpop.f32.mrf.mxu0
      %v2401 = vpop.f32.mrf.mxu0
      %v2402 = vadd.f32 0.0, %v2401
      %v2403 = vpop.f32.mrf.mxu0
      %2404 = vmatprep.mubr.bf16.mxu0 0
      %2405 = vmatmul.mubr.bf16.gmra.mxu0 %v2271
      %v2406 = vpop.f32.mrf.mxu0
      %v2407 = vadd.f32 0.0, %v2406
      %v2408 = vpop.f32.mrf.mxu0
      %v2409 = vpop.f32.mrf.mxu0
      %v2410 = vadd.f32 0.0, %v2409
      %v2411 = vpop.f32.mrf.mxu0
      %2412 = vmatprep.mubr.bf16.mxu0 0
      %2413 = vmatmul.mubr.bf16.gmra.mxu0 %v2272
      %v2414 = vpop.f32.mrf.mxu0
      %v2415 = vadd.f32 0.0, %v2414
      %v2416 = vpop.f32.mrf.mxu0
      %v2417 = vpop.f32.mrf.mxu0
      %v2418 = vadd.f32 0.0, %v2417
      %v2419 = vpop.f32.mrf.mxu0
      %2420 = vmatprep.mubr.bf16.mxu0 0
      %2421 = vmatmul.mubr.bf16.gmra.mxu0 %v2273
      %v2422 = vpop.f32.mrf.mxu0
      %v2423 = vadd.f32 0.0, %v2422
      %v2424 = vpop.f32.mrf.mxu0
      %v2425 = vpop.f32.mrf.mxu0
      %v2426 = vadd.f32 0.0, %v2425
      %v2427 = vpop.f32.mrf.mxu0
      %2428 = vmatprep.mubr.bf16.mxu0 0
      %2429 = vmatmul.mubr.bf16.gmra.mxu0 %v2274
      %v2430 = vpop.f32.mrf.mxu0
      %v2431 = vadd.f32 0.0, %v2430
      %v2432 = vpop.f32.mrf.mxu0
      %v2433 = vpop.f32.mrf.mxu0
      %v2434 = vadd.f32 0.0, %v2433
      %v2435 = vpop.f32.mrf.mxu0
      %2436 = vmatprep.mubr.bf16.mxu0 0
      %2437 = vmatmul.mubr.bf16.gmra.mxu0 %v2275
      %v2438 = vpop.f32.mrf.mxu0
      %v2439 = vadd.f32 0.0, %v2438
      %v2440 = vpop.f32.mrf.mxu0
      %v2441 = vpop.f32.mrf.mxu0
      %v2442 = vadd.f32 0.0, %v2441
      %v2443 = vpop.f32.mrf.mxu0
      %2444 = vmatprep.mubr.bf16.mxu0 0
      %2445 = vmatmul.mubr.bf16.gmra.mxu0 %v2276
      %v2446 = vpop.f32.mrf.mxu0
      %v2447 = vadd.f32 0.0, %v2446
      %v2448 = vpop.f32.mrf.mxu0
      %v2449 = vpop.f32.mrf.mxu0
      %v2450 = vadd.f32 0.0, %v2449
      %v2451 = vpop.f32.mrf.mxu0
      %2452 = vmatprep.mubr.bf16.mxu0 0
      %2453 = vmatmul.mubr.bf16.gmra.mxu0 %v2277
      %v2454 = vpop.f32.mrf.mxu0
      %v2455 = vadd.f32 0.0, %v2454
      %v2456 = vpop.f32.mrf.mxu0
      %v2457 = vpop.f32.mrf.mxu0
      %v2458 = vadd.f32 0.0, %v2457
      %v2459 = vpop.f32.mrf.mxu0
      %2460 = vmatprep.mubr.bf16.mxu0 0
      %2461 = vmatmul.mubr.bf16.gmra.mxu0 %v2278
      %v2462 = vpop.f32.mrf.mxu0
      %v2463 = vadd.f32 0.0, %v2462
      %v2464 = vpop.f32.mrf.mxu0
      %v2465 = vpop.f32.mrf.mxu0
      %v2466 = vadd.f32 0.0, %v2465
      %v2467 = vpop.f32.mrf.mxu0
      %2468 = vmatprep.mubr.bf16.mxu0 0
      %2469 = vmatmul.mubr.bf16.gmra.mxu0 %v2279
      %v2470 = vpop.f32.mrf.mxu0
      %v2471 = vadd.f32 0.0, %v2470
      %v2472 = vpop.f32.mrf.mxu0
      %v2473 = vpop.f32.mrf.mxu0
      %v2474 = vadd.f32 0.0, %v2473
      %v2475 = vpop.f32.mrf.mxu0
      %2476 = vmatprep.mubr.bf16.mxu0 0
      %2477 = vmatmul.mubr.bf16.gmra.mxu0 %v2280
      %v2478 = vpop.f32.mrf.mxu0
      %v2479 = vadd.f32 0.0, %v2478
      %v2480 = vpop.f32.mrf.mxu0
      %v2481 = vpop.f32.mrf.mxu0
      %v2482 = vadd.f32 0.0, %v2481
      %v2483 = vpop.f32.mrf.mxu0
      %2484 = vmatprep.mubr.bf16.mxu0 0
      %2485 = vmatmul.mubr.bf16.gmra.mxu0 %v2281
      %v2486 = vpop.f32.mrf.mxu0
      %v2487 = vadd.f32 0.0, %v2486
      %v2488 = vpop.f32.mrf.mxu0
      %v2489 = vpop.f32.mrf.mxu0
      %v2490 = vadd.f32 0.0, %v2489
      %v2491 = vpop.f32.mrf.mxu0
      %2492 = vmatprep.mubr.bf16.mxu0 0
      %2493 = vmatmul.mubr.bf16.gmra.mxu0 %v2282
      %v2494 = vpop.f32.mrf.mxu0
      %v2495 = vadd.f32 0.0, %v2494
      %v2496 = vpop.f32.mrf.mxu0
      %v2497 = vpop.f32.mrf.mxu0
      %v2498 = vadd.f32 0.0, %v2497
      %v2499 = vpop.f32.mrf.mxu0
      %2500 = vmatprep.mubr.bf16.mxu0 0
      %2501 = vmatmul.mubr.bf16.gmra.mxu0 %v2283
      %v2502 = vpop.f32.mrf.mxu0
      %v2503 = vadd.f32 0.0, %v2502
      %v2504 = vpop.f32.mrf.mxu0
      %v2505 = vpop.f32.mrf.mxu0
      %v2506 = vadd.f32 0.0, %v2505
      %v2507 = vpop.f32.mrf.mxu0
      %2508 = vdwg.mxu0
      %v2509 = vadd.f32 %v2155, %v2383
      %v2510 = vadd.f32 %v2156, %v2386
      %v2511 = vadd.f32 %v2157, %v2391
      %v2512 = vadd.f32 %v2158, %v2394
      %v2513 = vadd.f32 %v2159, %v2399
      %v2514 = vadd.f32 %v2160, %v2402
      %v2515 = vadd.f32 %v2161, %v2407
      %v2516 = vadd.f32 %v2162, %v2410
      %v2517 = vadd.f32 %v2163, %v2415
      %v2518 = vadd.f32 %v2164, %v2418
      %v2519 = vadd.f32 %v2165, %v2423
      %v2520 = vadd.f32 %v2166, %v2426
      %v2521 = vadd.f32 %v2167, %v2431
      %v2522 = vadd.f32 %v2168, %v2434
      %v2523 = vadd.f32 %v2169, %v2439
      %v2524 = vadd.f32 %v2170, %v2442
      %v2525 = vadd.f32 %v2171, %v2447
      %v2526 = vadd.f32 %v2172, %v2450
      %v2527 = vadd.f32 %v2173, %v2455
      %v2528 = vadd.f32 %v2174, %v2458
      %v2529 = vadd.f32 %v2175, %v2463
      %v2530 = vadd.f32 %v2176, %v2466
      %v2531 = vadd.f32 %v2177, %v2471
      %v2532 = vadd.f32 %v2178, %v2474
      %v2533 = vadd.f32 %v2179, %v2479
      %v2534 = vadd.f32 %v2180, %v2482
      %v2535 = vadd.f32 %v2181, %v2487
      %v2536 = vadd.f32 %v2182, %v2490
      %v2537 = vadd.f32 %v2183, %v2495
      %v2538 = vadd.f32 %v2184, %v2498
      %v2539 = vadd.f32 %v2185, %v2503
      %v2540 = vadd.f32 %v2186, %v2506
      %2541 = vst [vmem:[#allocation2] sm:$0xff] %v2509
      %2542 = vst [vmem:[#allocation2 + $0x8] sm:$0xff] %v2510
      %2543 = vst [vmem:[#allocation2 + $0x10] sm:$0xff] %v2511
      %2544 = vst [vmem:[#allocation2 + $0x18] sm:$0xff] %v2512
      %2545 = vst [vmem:[#allocation2 + $0x20] sm:$0xff] %v2513
      %2546 = vst [vmem:[#allocation2 + $0x28] sm:$0xff] %v2514
      %2547 = vst [vmem:[#allocation2 + $0x30] sm:$0xff] %v2515
      %2548 = vst [vmem:[#allocation2 + $0x38] sm:$0xff] %v2516
      %2549 = vst [vmem:[#allocation2 + $0x40] sm:$0xff] %v2517
      %2550 = vst [vmem:[#allocation2 + $0x48] sm:$0xff] %v2518
      %2551 = vst [vmem:[#allocation2 + $0x50] sm:$0xff] %v2519
      %2552 = vst [vmem:[#allocation2 + $0x58] sm:$0xff] %v2520
      %2553 = vst [vmem:[#allocation2 + $0x60] sm:$0xff] %v2521
      %2554 = vst [vmem:[#allocation2 + $0x68] sm:$0xff] %v2522
      %2555 = vst [vmem:[#allocation2 + $0x70] sm:$0xff] %v2523
      %2556 = vst [vmem:[#allocation2 + $0x78] sm:$0xff] %v2524
      %2557 = vst [vmem:[#allocation2 + $0x80] sm:$0xff] %v2525
      %2558 = vst [vmem:[#allocation2 + $0x88] sm:$0xff] %v2526
      %2559 = vst [vmem:[#allocation2 + $0x90] sm:$0xff] %v2527
      %2560 = vst [vmem:[#allocation2 + $0x98] sm:$0xff] %v2528
      %2561 = vst [vmem:[#allocation2 + $0xa0] sm:$0xff] %v2529
      %2562 = vst [vmem:[#allocation2 + $0xa8] sm:$0xff] %v2530
      %2563 = vst [vmem:[#allocation2 + $0xb0] sm:$0xff] %v2531
      %2564 = vst [vmem:[#allocation2 + $0xb8] sm:$0xff] %v2532
      %2565 = vst [vmem:[#allocation2 + $0xc0] sm:$0xff] %v2533
      %2566 = vst [vmem:[#allocation2 + $0xc8] sm:$0xff] %v2534
      %2567 = vst [vmem:[#allocation2 + $0xd0] sm:$0xff] %v2535
      %2568 = vst [vmem:[#allocation2 + $0xd8] sm:$0xff] %v2536
      %2569 = vst [vmem:[#allocation2 + $0xe0] sm:$0xff] %v2537
      %2570 = vst [vmem:[#allocation2 + $0xe8] sm:$0xff] %v2538
      %2571 = vst [vmem:[#allocation2 + $0xf0] sm:$0xff] %v2539
      %2572 = vst [vmem:[#allocation2 + $0xf8] sm:$0xff] %v2540
      %v2573 = vld [vmem:[%s2122] sm:$0xf]
      %v2574 = vld [vmem:[%s2122 + $0x4] sm:$0xf]
      %v2575 = vld [vmem:[%s2122 + $0x8] sm:$0x1]
      %v2576 = vld [vmem:[%s2122 + $0xc] sm:$0xf]
      %v2577 = vld [vmem:[%s2122 + $0x10] sm:$0xf]
      %v2578 = vld [vmem:[%s2122 + $0x14] sm:$0x1]
      %v2579 = vld [vmem:[%s2122 + $0x18] sm:$0xf]
      %v2580 = vld [vmem:[%s2122 + $0x1c] sm:$0xf]
      %v2581 = vld [vmem:[%s2122 + $0x20] sm:$0x1]
      %v2582 = vld [vmem:[%s2122 + $0x24] sm:$0xf]
      %v2583 = vld [vmem:[%s2122 + $0x28] sm:$0xf]
      %v2584 = vld [vmem:[%s2122 + $0x2c] sm:$0x1]
      %v2585 = vld [vmem:[%s2122 + $0x30] sm:$0xf]
      %v2586 = vld [vmem:[%s2122 + $0x34] sm:$0xf]
      %v2587 = vld [vmem:[%s2122 + $0x38] sm:$0x1]
      %v2588 = vld [vmem:[%s2122 + $0x3c] sm:$0xf]
      %v2589 = vld [vmem:[%s2122 + $0x40] sm:$0xf]
      %v2590 = vld [vmem:[%s2122 + $0x44] sm:$0x1]
      %v2591 = vld [vmem:[%s2122 + $0x48] sm:$0xf]
      %v2592 = vld [vmem:[%s2122 + $0x4c] sm:$0xf]
      %v2593 = vld [vmem:[%s2122 + $0x50] sm:$0x1]
      %v2594 = vld [vmem:[%s2122 + $0x54] sm:$0xf]
      %v2595 = vld [vmem:[%s2122 + $0x58] sm:$0xf]
      %v2596 = vld [vmem:[%s2122 + $0x5c] sm:$0x1]
      %v2597 = vld [vmem:[%s2122 + $0x60] sm:$0xf]
      %v2598 = vld [vmem:[%s2122 + $0x64] sm:$0xf]
      %v2599 = vld [vmem:[%s2122 + $0x68] sm:$0x1]
      %v2600 = vld [vmem:[%s2122 + $0x6c] sm:$0xf]
      %v2601 = vld [vmem:[%s2122 + $0x70] sm:$0xf]
      %v2602 = vld [vmem:[%s2122 + $0x74] sm:$0x1]
      %v2603 = vld [vmem:[%s2122 + $0x78] sm:$0xf]
      %v2604 = vld [vmem:[%s2122 + $0x7c] sm:$0xf]
      %v2605 = vld [vmem:[%s2122 + $0x80] sm:$0x1]
      %v2606 = vld [vmem:[%s2122 + $0x84] sm:$0xf]
      %v2607 = vld [vmem:[%s2122 + $0x88] sm:$0xf]
      %v2608 = vld [vmem:[%s2122 + $0x8c] sm:$0x1]
      %v2609 = vld [vmem:[%s2122 + $0x90] sm:$0xf]
      %v2610 = vld [vmem:[%s2122 + $0x94] sm:$0xf]
      %v2611 = vld [vmem:[%s2122 + $0x98] sm:$0x1]
      %v2612 = vld [vmem:[%s2122 + $0x9c] sm:$0xf]
      %v2613 = vld [vmem:[%s2122 + $0xa0] sm:$0xf]
      %v2614 = vld [vmem:[%s2122 + $0xa4] sm:$0x1]
      %v2615 = vld [vmem:[%s2122 + $0xa8] sm:$0xf]
      %v2616 = vld [vmem:[%s2122 + $0xac] sm:$0xf]
      %v2617 = vld [vmem:[%s2122 + $0xb0] sm:$0x1]
      %v2618 = vld [vmem:[%s2122 + $0xb4] sm:$0xf]
      %v2619 = vld [vmem:[%s2122 + $0xb8] sm:$0xf]
      %v2620 = vld [vmem:[%s2122 + $0xbc] sm:$0x1]
      %v2621 = vld [vmem:[#allocation2] sm:$0xff]
      %v2622 = vld [vmem:[#allocation2 + $0x8] sm:$0xff]
      %v2623 = vld [vmem:[#allocation2 + $0x10] sm:$0xff]
      %v2624 = vld [vmem:[#allocation2 + $0x18] sm:$0xff]
      %v2625 = vld [vmem:[#allocation2 + $0x20] sm:$0xff]
      %v2626 = vld [vmem:[#allocation2 + $0x28] sm:$0xff]
      %v2627 = vld [vmem:[#allocation2 + $0x30] sm:$0xff]
      %v2628 = vld [vmem:[#allocation2 + $0x38] sm:$0xff]
      %v2629 = vld [vmem:[#allocation2 + $0x40] sm:$0xff]
      %v2630 = vld [vmem:[#allocation2 + $0x48] sm:$0xff]
      %v2631 = vld [vmem:[#allocation2 + $0x50] sm:$0xff]
      %v2632 = vld [vmem:[#allocation2 + $0x58] sm:$0xff]
      %v2633 = vld [vmem:[#allocation2 + $0x60] sm:$0xff]
      %v2634 = vld [vmem:[#allocation2 + $0x68] sm:$0xff]
      %v2635 = vld [vmem:[#allocation2 + $0x70] sm:$0xff]
      %v2636 = vld [vmem:[#allocation2 + $0x78] sm:$0xff]
      %v2637 = vld [vmem:[#allocation2 + $0x80] sm:$0xff]
      %v2638 = vld [vmem:[#allocation2 + $0x88] sm:$0xff]
      %v2639 = vld [vmem:[#allocation2 + $0x90] sm:$0xff]
      %v2640 = vld [vmem:[#allocation2 + $0x98] sm:$0xff]
      %v2641 = vld [vmem:[#allocation2 + $0xa0] sm:$0xff]
      %v2642 = vld [vmem:[#allocation2 + $0xa8] sm:$0xff]
      %v2643 = vld [vmem:[#allocation2 + $0xb0] sm:$0xff]
      %v2644 = vld [vmem:[#allocation2 + $0xb8] sm:$0xff]
      %v2645 = vld [vmem:[#allocation2 + $0xc0] sm:$0xff]
      %v2646 = vld [vmem:[#allocation2 + $0xc8] sm:$0xff]
      %v2647 = vld [vmem:[#allocation2 + $0xd0] sm:$0xff]
      %v2648 = vld [vmem:[#allocation2 + $0xd8] sm:$0xff]
      %v2649 = vld [vmem:[#allocation2 + $0xe0] sm:$0xff]
      %v2650 = vld [vmem:[#allocation2 + $0xe8] sm:$0xff]
      %v2651 = vld [vmem:[#allocation2 + $0xf0] sm:$0xff]
      %v2652 = vld [vmem:[#allocation2 + $0xf8] sm:$0xff]
      %v2654 = vshrl.u32 %v2573, 16
      %v2656 = vrot.slane %v2654, 4
      %v2657 = vshll.u32 %v2573, 16
      %v2659 = vrot.slane %v2657, 5
      %v2660 = vor.u32 %v2656, %v2659
      %v2661 = vrot.slane %v2660, 4
      %v2663 = vshll.u32 %v2574, 16
      %v2665 = vrot.slane %v2663, 5
      %v2666 = vsel %vm786, %v2661, %v2665
      %v2667 = vshrl.u32 %v2574, 16
      %v2669 = vrot.slane %v2667, 4
      %v2670 = vor.u32 %v2669, %v2665
      %v2671 = vrot.slane %v2670, 4
      %v2673 = vshll.u32 %v2575, 16
      %v2675 = vrot.slane %v2673, 5
      %v2676 = vsel %vm786, %v2671, %v2675
      %v2678 = vshrl.u32 %v2576, 16
      %v2680 = vrot.slane %v2678, 4
      %v2681 = vshll.u32 %v2576, 16
      %v2683 = vrot.slane %v2681, 5
      %v2684 = vor.u32 %v2680, %v2683
      %v2685 = vrot.slane %v2684, 4
      %v2687 = vshll.u32 %v2577, 16
      %v2689 = vrot.slane %v2687, 5
      %v2690 = vsel %vm786, %v2685, %v2689
      %v2691 = vshrl.u32 %v2577, 16
      %v2693 = vrot.slane %v2691, 4
      %v2694 = vor.u32 %v2693, %v2689
      %v2695 = vrot.slane %v2694, 4
      %v2697 = vshll.u32 %v2578, 16
      %v2699 = vrot.slane %v2697, 5
      %v2700 = vsel %vm786, %v2695, %v2699
      %v2702 = vshrl.u32 %v2579, 16
      %v2704 = vrot.slane %v2702, 4
      %v2705 = vshll.u32 %v2579, 16
      %v2707 = vrot.slane %v2705, 5
      %v2708 = vor.u32 %v2704, %v2707
      %v2709 = vrot.slane %v2708, 4
      %v2711 = vshll.u32 %v2580, 16
      %v2713 = vrot.slane %v2711, 5
      %v2714 = vsel %vm786, %v2709, %v2713
      %v2715 = vshrl.u32 %v2580, 16
      %v2717 = vrot.slane %v2715, 4
      %v2718 = vor.u32 %v2717, %v2713
      %v2719 = vrot.slane %v2718, 4
      %v2721 = vshll.u32 %v2581, 16
      %v2723 = vrot.slane %v2721, 5
      %v2724 = vsel %vm786, %v2719, %v2723
      %v2726 = vshrl.u32 %v2582, 16
      %v2728 = vrot.slane %v2726, 4
      %v2729 = vshll.u32 %v2582, 16
      %v2731 = vrot.slane %v2729, 5
      %v2732 = vor.u32 %v2728, %v2731
      %v2733 = vrot.slane %v2732, 4
      %v2735 = vshll.u32 %v2583, 16
      %v2737 = vrot.slane %v2735, 5
      %v2738 = vsel %vm786, %v2733, %v2737
      %v2739 = vshrl.u32 %v2583, 16
      %v2741 = vrot.slane %v2739, 4
      %v2742 = vor.u32 %v2741, %v2737
      %v2743 = vrot.slane %v2742, 4
      %v2745 = vshll.u32 %v2584, 16
      %v2747 = vrot.slane %v2745, 5
      %v2748 = vsel %vm786, %v2743, %v2747
      %v2750 = vshrl.u32 %v2585, 16
      %v2752 = vrot.slane %v2750, 4
      %v2753 = vshll.u32 %v2585, 16
      %v2755 = vrot.slane %v2753, 5
      %v2756 = vor.u32 %v2752, %v2755
      %v2757 = vrot.slane %v2756, 4
      %v2759 = vshll.u32 %v2586, 16
      %v2761 = vrot.slane %v2759, 5
      %v2762 = vsel %vm786, %v2757, %v2761
      %v2763 = vshrl.u32 %v2586, 16
      %v2765 = vrot.slane %v2763, 4
      %v2766 = vor.u32 %v2765, %v2761
      %v2767 = vrot.slane %v2766, 4
      %v2769 = vshll.u32 %v2587, 16
      %v2771 = vrot.slane %v2769, 5
      %v2772 = vsel %vm786, %v2767, %v2771
      %v2774 = vshrl.u32 %v2588, 16
      %v2776 = vrot.slane %v2774, 4
      %v2777 = vshll.u32 %v2588, 16
      %v2779 = vrot.slane %v2777, 5
      %v2780 = vor.u32 %v2776, %v2779
      %v2781 = vrot.slane %v2780, 4
      %v2783 = vshll.u32 %v2589, 16
      %v2785 = vrot.slane %v2783, 5
      %v2786 = vsel %vm786, %v2781, %v2785
      %v2787 = vshrl.u32 %v2589, 16
      %v2789 = vrot.slane %v2787, 4
      %v2790 = vor.u32 %v2789, %v2785
      %v2791 = vrot.slane %v2790, 4
      %v2793 = vshll.u32 %v2590, 16
      %v2795 = vrot.slane %v2793, 5
      %v2796 = vsel %vm786, %v2791, %v2795
      %v2798 = vshrl.u32 %v2591, 16
      %v2800 = vrot.slane %v2798, 4
      %v2801 = vshll.u32 %v2591, 16
      %v2803 = vrot.slane %v2801, 5
      %v2804 = vor.u32 %v2800, %v2803
      %v2805 = vrot.slane %v2804, 4
      %v2807 = vshll.u32 %v2592, 16
      %v2809 = vrot.slane %v2807, 5
      %v2810 = vsel %vm786, %v2805, %v2809
      %v2811 = vshrl.u32 %v2592, 16
      %v2813 = vrot.slane %v2811, 4
      %v2814 = vor.u32 %v2813, %v2809
      %v2815 = vrot.slane %v2814, 4
      %v2817 = vshll.u32 %v2593, 16
      %v2819 = vrot.slane %v2817, 5
      %v2820 = vsel %vm786, %v2815, %v2819
      %v2822 = vshrl.u32 %v2594, 16
      %v2824 = vrot.slane %v2822, 4
      %v2825 = vshll.u32 %v2594, 16
      %v2827 = vrot.slane %v2825, 5
      %v2828 = vor.u32 %v2824, %v2827
      %v2829 = vrot.slane %v2828, 4
      %v2831 = vshll.u32 %v2595, 16
      %v2833 = vrot.slane %v2831, 5
      %v2834 = vsel %vm786, %v2829, %v2833
      %v2835 = vshrl.u32 %v2595, 16
      %v2837 = vrot.slane %v2835, 4
      %v2838 = vor.u32 %v2837, %v2833
      %v2839 = vrot.slane %v2838, 4
      %v2841 = vshll.u32 %v2596, 16
      %v2843 = vrot.slane %v2841, 5
      %v2844 = vsel %vm786, %v2839, %v2843
      %v2846 = vshrl.u32 %v2597, 16
      %v2848 = vrot.slane %v2846, 4
      %v2849 = vshll.u32 %v2597, 16
      %v2851 = vrot.slane %v2849, 5
      %v2852 = vor.u32 %v2848, %v2851
      %v2853 = vrot.slane %v2852, 4
      %v2855 = vshll.u32 %v2598, 16
      %v2857 = vrot.slane %v2855, 5
      %v2858 = vsel %vm786, %v2853, %v2857
      %v2859 = vshrl.u32 %v2598, 16
      %v2861 = vrot.slane %v2859, 4
      %v2862 = vor.u32 %v2861, %v2857
      %v2863 = vrot.slane %v2862, 4
      %v2865 = vshll.u32 %v2599, 16
      %v2867 = vrot.slane %v2865, 5
      %v2868 = vsel %vm786, %v2863, %v2867
      %v2870 = vshrl.u32 %v2600, 16
      %v2872 = vrot.slane %v2870, 4
      %v2873 = vshll.u32 %v2600, 16
      %v2875 = vrot.slane %v2873, 5
      %v2876 = vor.u32 %v2872, %v2875
      %v2877 = vrot.slane %v2876, 4
      %v2879 = vshll.u32 %v2601, 16
      %v2881 = vrot.slane %v2879, 5
      %v2882 = vsel %vm786, %v2877, %v2881
      %v2883 = vshrl.u32 %v2601, 16
      %v2885 = vrot.slane %v2883, 4
      %v2886 = vor.u32 %v2885, %v2881
      %v2887 = vrot.slane %v2886, 4
      %v2889 = vshll.u32 %v2602, 16
      %v2891 = vrot.slane %v2889, 5
      %v2892 = vsel %vm786, %v2887, %v2891
      %v2894 = vshrl.u32 %v2603, 16
      %v2896 = vrot.slane %v2894, 4
      %v2897 = vshll.u32 %v2603, 16
      %v2899 = vrot.slane %v2897, 5
      %v2900 = vor.u32 %v2896, %v2899
      %v2901 = vrot.slane %v2900, 4
      %v2903 = vshll.u32 %v2604, 16
      %v2905 = vrot.slane %v2903, 5
      %v2906 = vsel %vm786, %v2901, %v2905
      %v2907 = vshrl.u32 %v2604, 16
      %v2909 = vrot.slane %v2907, 4
      %v2910 = vor.u32 %v2909, %v2905
      %v2911 = vrot.slane %v2910, 4
      %v2913 = vshll.u32 %v2605, 16
      %v2915 = vrot.slane %v2913, 5
      %v2916 = vsel %vm786, %v2911, %v2915
      %v2918 = vshrl.u32 %v2606, 16
      %v2920 = vrot.slane %v2918, 4
      %v2921 = vshll.u32 %v2606, 16
      %v2923 = vrot.slane %v2921, 5
      %v2924 = vor.u32 %v2920, %v2923
      %v2925 = vrot.slane %v2924, 4
      %v2927 = vshll.u32 %v2607, 16
      %v2929 = vrot.slane %v2927, 5
      %v2930 = vsel %vm786, %v2925, %v2929
      %v2931 = vshrl.u32 %v2607, 16
      %v2933 = vrot.slane %v2931, 4
      %v2934 = vor.u32 %v2933, %v2929
      %v2935 = vrot.slane %v2934, 4
      %v2937 = vshll.u32 %v2608, 16
      %v2939 = vrot.slane %v2937, 5
      %v2940 = vsel %vm786, %v2935, %v2939
      %v2942 = vshrl.u32 %v2609, 16
      %v2944 = vrot.slane %v2942, 4
      %v2945 = vshll.u32 %v2609, 16
      %v2947 = vrot.slane %v2945, 5
      %v2948 = vor.u32 %v2944, %v2947
      %v2949 = vrot.slane %v2948, 4
      %v2951 = vshll.u32 %v2610, 16
      %v2953 = vrot.slane %v2951, 5
      %v2954 = vsel %vm786, %v2949, %v2953
      %v2955 = vshrl.u32 %v2610, 16
      %v2957 = vrot.slane %v2955, 4
      %v2958 = vor.u32 %v2957, %v2953
      %v2959 = vrot.slane %v2958, 4
      %v2961 = vshll.u32 %v2611, 16
      %v2963 = vrot.slane %v2961, 5
      %v2964 = vsel %vm786, %v2959, %v2963
      %v2966 = vshrl.u32 %v2612, 16
      %v2968 = vrot.slane %v2966, 4
      %v2969 = vshll.u32 %v2612, 16
      %v2971 = vrot.slane %v2969, 5
      %v2972 = vor.u32 %v2968, %v2971
      %v2973 = vrot.slane %v2972, 4
      %v2975 = vshll.u32 %v2613, 16
      %v2977 = vrot.slane %v2975, 5
      %v2978 = vsel %vm786, %v2973, %v2977
      %v2979 = vshrl.u32 %v2613, 16
      %v2981 = vrot.slane %v2979, 4
      %v2982 = vor.u32 %v2981, %v2977
      %v2983 = vrot.slane %v2982, 4
      %v2985 = vshll.u32 %v2614, 16
      %v2987 = vrot.slane %v2985, 5
      %v2988 = vsel %vm786, %v2983, %v2987
      %v2990 = vshrl.u32 %v2615, 16
      %v2992 = vrot.slane %v2990, 4
      %v2993 = vshll.u32 %v2615, 16
      %v2995 = vrot.slane %v2993, 5
      %v2996 = vor.u32 %v2992, %v2995
      %v2997 = vrot.slane %v2996, 4
      %v2999 = vshll.u32 %v2616, 16
      %v3001 = vrot.slane %v2999, 5
      %v3002 = vsel %vm786, %v2997, %v3001
      %v3003 = vshrl.u32 %v2616, 16
      %v3005 = vrot.slane %v3003, 4
      %v3006 = vor.u32 %v3005, %v3001
      %v3007 = vrot.slane %v3006, 4
      %v3009 = vshll.u32 %v2617, 16
      %v3011 = vrot.slane %v3009, 5
      %v3012 = vsel %vm786, %v3007, %v3011
      %v3014 = vshrl.u32 %v2618, 16
      %v3016 = vrot.slane %v3014, 4
      %v3017 = vshll.u32 %v2618, 16
      %v3019 = vrot.slane %v3017, 5
      %v3020 = vor.u32 %v3016, %v3019
      %v3021 = vrot.slane %v3020, 4
      %v3023 = vshll.u32 %v2619, 16
      %v3025 = vrot.slane %v3023, 5
      %v3026 = vsel %vm786, %v3021, %v3025
      %v3027 = vshrl.u32 %v2619, 16
      %v3029 = vrot.slane %v3027, 4
      %v3030 = vor.u32 %v3029, %v3025
      %v3031 = vrot.slane %v3030, 4
      %v3033 = vshll.u32 %v2620, 16
      %v3035 = vrot.slane %v3033, 5
      %v3036 = vsel %vm786, %v3031, %v3035
      %s3037 = scalar_lea.vmem %s210, 256
      %v3038 = vld [vmem:[%s3037] sm:$0xf]
      %v3039 = vld [vmem:[%s3037 + $0x4] sm:$0xf]
      %v3040 = vld [vmem:[%s3037 + $0x8] sm:$0xf]
      %v3041 = vld [vmem:[%s3037 + $0xc] sm:$0xf]
      %v3042 = vld [vmem:[%s3037 + $0x10] sm:$0xf]
      %v3043 = vld [vmem:[%s3037 + $0x14] sm:$0xf]
      %v3044 = vld [vmem:[%s3037 + $0x18] sm:$0xf]
      %v3045 = vld [vmem:[%s3037 + $0x1c] sm:$0xf]
      %v3046 = vld [vmem:[%s3037 + $0x20] sm:$0xf]
      %v3047 = vld [vmem:[%s3037 + $0x24] sm:$0xf]
      %v3048 = vld [vmem:[%s3037 + $0x28] sm:$0xf]
      %v3049 = vld [vmem:[%s3037 + $0x2c] sm:$0xf]
      %v3050 = vld [vmem:[%s3037 + $0x30] sm:$0xf]
      %v3051 = vld [vmem:[%s3037 + $0x34] sm:$0xf]
      %v3052 = vld [vmem:[%s3037 + $0x38] sm:$0xf]
      %v3053 = vld [vmem:[%s3037 + $0x3c] sm:$0xf]
      %v3054 = vunpack.c.l.b16 %v2666
      %v3055 = vunpack.c.l.b16 %v2676
      %v3056 = vunpack.c.l.b16 %v2690
      %v3057 = vunpack.c.l.b16 %v2700
      %v3058 = vunpack.c.l.b16 %v2714
      %v3059 = vunpack.c.l.b16 %v2724
      %v3060 = vunpack.c.l.b16 %v2738
      %v3061 = vunpack.c.l.b16 %v2748
      %v3062 = vunpack.c.l.b16 %v2762
      %v3063 = vunpack.c.l.b16 %v2772
      %v3064 = vunpack.c.l.b16 %v2786
      %v3065 = vunpack.c.l.b16 %v2796
      %v3066 = vunpack.c.l.b16 %v2810
      %v3067 = vunpack.c.l.b16 %v2820
      %v3068 = vunpack.c.l.b16 %v2834
      %v3069 = vunpack.c.l.b16 %v2844
      %v3070 = vunpack.c.l.b16 %v2858
      %v3071 = vunpack.c.l.b16 %v2868
      %v3072 = vunpack.c.l.b16 %v2882
      %v3073 = vunpack.c.l.b16 %v2892
      %v3074 = vunpack.c.l.b16 %v2906
      %v3075 = vunpack.c.l.b16 %v2916
      %v3076 = vunpack.c.l.b16 %v2930
      %v3077 = vunpack.c.l.b16 %v2940
      %v3078 = vunpack.c.l.b16 %v2954
      %v3079 = vunpack.c.l.b16 %v2964
      %v3080 = vunpack.c.l.b16 %v2978
      %v3081 = vunpack.c.l.b16 %v2988
      %v3082 = vunpack.c.l.b16 %v3002
      %v3083 = vunpack.c.l.b16 %v3012
      %v3084 = vunpack.c.l.b16 %v3026
      %v3085 = vunpack.c.l.b16 %v3036
      %v3086 = vpack.c.b16 %v3055, %v3054
      %v3087 = vpack.c.b16 %v3057, %v3056
      %v3088 = vpack.c.b16 %v3059, %v3058
      %v3089 = vpack.c.b16 %v3061, %v3060
      %v3090 = vpack.c.b16 %v3063, %v3062
      %v3091 = vpack.c.b16 %v3065, %v3064
      %v3092 = vpack.c.b16 %v3067, %v3066
      %v3093 = vpack.c.b16 %v3069, %v3068
      %v3094 = vpack.c.b16 %v3071, %v3070
      %v3095 = vpack.c.b16 %v3073, %v3072
      %v3096 = vpack.c.b16 %v3075, %v3074
      %v3097 = vpack.c.b16 %v3077, %v3076
      %v3098 = vpack.c.b16 %v3079, %v3078
      %v3099 = vpack.c.b16 %v3081, %v3080
      %v3100 = vpack.c.b16 %v3083, %v3082
      %v3101 = vpack.c.b16 %v3085, %v3084
      %v3134 = vunpack.c.l.b16 %v3038
      %v3135 = vunpack.c.l.b16 %v3039
      %v3136 = vunpack.c.l.b16 %v3040
      %v3137 = vunpack.c.l.b16 %v3041
      %v3138 = vunpack.c.l.b16 %v3042
      %v3139 = vunpack.c.l.b16 %v3043
      %v3140 = vunpack.c.l.b16 %v3044
      %v3141 = vunpack.c.l.b16 %v3045
      %v3142 = vunpack.c.l.b16 %v3046
      %v3143 = vunpack.c.l.b16 %v3047
      %v3144 = vunpack.c.l.b16 %v3048
      %v3145 = vunpack.c.l.b16 %v3049
      %v3146 = vunpack.c.l.b16 %v3050
      %v3147 = vunpack.c.l.b16 %v3051
      %v3148 = vunpack.c.l.b16 %v3052
      %v3149 = vunpack.c.l.b16 %v3053
      %v3150 = vpack.c.b16 %v3135, %v3134
      %v3151 = vpack.c.b16 %v3137, %v3136
      %v3152 = vpack.c.b16 %v3139, %v3138
      %v3153 = vpack.c.b16 %v3141, %v3140
      %v3154 = vpack.c.b16 %v3143, %v3142
      %v3155 = vpack.c.b16 %v3145, %v3144
      %v3156 = vpack.c.b16 %v3147, %v3146
      %v3157 = vpack.c.b16 %v3149, %v3148
      %3166 = vmatprep.subr.bf16.mxu0 0
      %3167 = vmatpush1.bf16.msra.mxu0 %v3157
      %3168 = vmatprep.subr.bf16.mxu0 0
      %3169 = vmatpush1.bf16.msra.mxu0 %v3156
      %3170 = vmatprep.subr.bf16.mxu0 0
      %3171 = vmatpush1.bf16.msra.mxu0 %v3155
      %3172 = vmatprep.subr.bf16.mxu0 0
      %3173 = vmatpush1.bf16.msra.mxu0 %v3154
      %3174 = vmatprep.subr.bf16.mxu0 0
      %3175 = vmatpush1.bf16.msra.mxu0 %v3153
      %3176 = vmatprep.subr.bf16.mxu0 0
      %3177 = vmatpush1.bf16.msra.mxu0 %v3152
      %3178 = vmatprep.subr.bf16.mxu0 0
      %3179 = vmatpush1.bf16.msra.mxu0 %v3151
      %3180 = vmatprep.subr.bf16.mxu0 0
      %3181 = vmatpush1.bf16.msra.mxu0 %v3150
      %3182 = vmatprep.subr.bf16.mxu0 0
      %3183 = vmatpush2.bf16.msra.mxu0 0
      %3184 = vmatprep.subr.bf16.mxu0 0
      %3185 = vmatpush2.bf16.msra.mxu0 0
      %3186 = vmatprep.subr.bf16.mxu0 0
      %3187 = vmatpush2.bf16.msra.mxu0 0
      %3188 = vmatprep.subr.bf16.mxu0 0
      %3189 = vmatpush2.bf16.msra.mxu0 0
      %3190 = vmatprep.subr.bf16.mxu0 0
      %3191 = vmatpush2.bf16.msra.mxu0 0
      %3192 = vmatprep.subr.bf16.mxu0 0
      %3193 = vmatpush2.bf16.msra.mxu0 0
      %3194 = vmatprep.subr.bf16.mxu0 0
      %3195 = vmatpush2.bf16.msra.mxu0 0
      %3196 = vmatprep.subr.bf16.mxu0 0
      %3197 = vmatpush2.bf16.msra.mxu0 0
      %3198 = vmatprep.mubr.bf16.mxu0 0
      %3199 = vmatmul.mubr.bf16.gmra.mxu0 %v3086
      %v3200 = vpop.f32.mrf.mxu0
      %v3201 = vadd.f32 0.0, %v3200
      %v3202 = vpop.f32.mrf.mxu0
      %v3203 = vpop.f32.mrf.mxu0
      %v3204 = vadd.f32 0.0, %v3203
      %v3205 = vpop.f32.mrf.mxu0
      %3206 = vmatprep.mubr.bf16.mxu0 0
      %3207 = vmatmul.mubr.bf16.gmra.mxu0 %v3087
      %v3208 = vpop.f32.mrf.mxu0
      %v3209 = vadd.f32 0.0, %v3208
      %v3210 = vpop.f32.mrf.mxu0
      %v3211 = vpop.f32.mrf.mxu0
      %v3212 = vadd.f32 0.0, %v3211
      %v3213 = vpop.f32.mrf.mxu0
      %3214 = vmatprep.mubr.bf16.mxu0 0
      %3215 = vmatmul.mubr.bf16.gmra.mxu0 %v3088
      %v3216 = vpop.f32.mrf.mxu0
      %v3217 = vadd.f32 0.0, %v3216
      %v3218 = vpop.f32.mrf.mxu0
      %v3219 = vpop.f32.mrf.mxu0
      %v3220 = vadd.f32 0.0, %v3219
      %v3221 = vpop.f32.mrf.mxu0
      %3222 = vmatprep.mubr.bf16.mxu0 0
      %3223 = vmatmul.mubr.bf16.gmra.mxu0 %v3089
      %v3224 = vpop.f32.mrf.mxu0
      %v3225 = vadd.f32 0.0, %v3224
      %v3226 = vpop.f32.mrf.mxu0
      %v3227 = vpop.f32.mrf.mxu0
      %v3228 = vadd.f32 0.0, %v3227
      %v3229 = vpop.f32.mrf.mxu0
      %3230 = vmatprep.mubr.bf16.mxu0 0
      %3231 = vmatmul.mubr.bf16.gmra.mxu0 %v3090
      %v3232 = vpop.f32.mrf.mxu0
      %v3233 = vadd.f32 0.0, %v3232
      %v3234 = vpop.f32.mrf.mxu0
      %v3235 = vpop.f32.mrf.mxu0
      %v3236 = vadd.f32 0.0, %v3235
      %v3237 = vpop.f32.mrf.mxu0
      %3238 = vmatprep.mubr.bf16.mxu0 0
      %3239 = vmatmul.mubr.bf16.gmra.mxu0 %v3091
      %v3240 = vpop.f32.mrf.mxu0
      %v3241 = vadd.f32 0.0, %v3240
      %v3242 = vpop.f32.mrf.mxu0
      %v3243 = vpop.f32.mrf.mxu0
      %v3244 = vadd.f32 0.0, %v3243
      %v3245 = vpop.f32.mrf.mxu0
      %3246 = vmatprep.mubr.bf16.mxu0 0
      %3247 = vmatmul.mubr.bf16.gmra.mxu0 %v3092
      %v3248 = vpop.f32.mrf.mxu0
      %v3249 = vadd.f32 0.0, %v3248
      %v3250 = vpop.f32.mrf.mxu0
      %v3251 = vpop.f32.mrf.mxu0
      %v3252 = vadd.f32 0.0, %v3251
      %v3253 = vpop.f32.mrf.mxu0
      %3254 = vmatprep.mubr.bf16.mxu0 0
      %3255 = vmatmul.mubr.bf16.gmra.mxu0 %v3093
      %v3256 = vpop.f32.mrf.mxu0
      %v3257 = vadd.f32 0.0, %v3256
      %v3258 = vpop.f32.mrf.mxu0
      %v3259 = vpop.f32.mrf.mxu0
      %v3260 = vadd.f32 0.0, %v3259
      %v3261 = vpop.f32.mrf.mxu0
      %3262 = vmatprep.mubr.bf16.mxu0 0
      %3263 = vmatmul.mubr.bf16.gmra.mxu0 %v3094
      %v3264 = vpop.f32.mrf.mxu0
      %v3265 = vadd.f32 0.0, %v3264
      %v3266 = vpop.f32.mrf.mxu0
      %v3267 = vpop.f32.mrf.mxu0
      %v3268 = vadd.f32 0.0, %v3267
      %v3269 = vpop.f32.mrf.mxu0
      %3270 = vmatprep.mubr.bf16.mxu0 0
      %3271 = vmatmul.mubr.bf16.gmra.mxu0 %v3095
      %v3272 = vpop.f32.mrf.mxu0
      %v3273 = vadd.f32 0.0, %v3272
      %v3274 = vpop.f32.mrf.mxu0
      %v3275 = vpop.f32.mrf.mxu0
      %v3276 = vadd.f32 0.0, %v3275
      %v3277 = vpop.f32.mrf.mxu0
      %3278 = vmatprep.mubr.bf16.mxu0 0
      %3279 = vmatmul.mubr.bf16.gmra.mxu0 %v3096
      %v3280 = vpop.f32.mrf.mxu0
      %v3281 = vadd.f32 0.0, %v3280
      %v3282 = vpop.f32.mrf.mxu0
      %v3283 = vpop.f32.mrf.mxu0
      %v3284 = vadd.f32 0.0, %v3283
      %v3285 = vpop.f32.mrf.mxu0
      %3286 = vmatprep.mubr.bf16.mxu0 0
      %3287 = vmatmul.mubr.bf16.gmra.mxu0 %v3097
      %v3288 = vpop.f32.mrf.mxu0
      %v3289 = vadd.f32 0.0, %v3288
      %v3290 = vpop.f32.mrf.mxu0
      %v3291 = vpop.f32.mrf.mxu0
      %v3292 = vadd.f32 0.0, %v3291
      %v3293 = vpop.f32.mrf.mxu0
      %3294 = vmatprep.mubr.bf16.mxu0 0
      %3295 = vmatmul.mubr.bf16.gmra.mxu0 %v3098
      %v3296 = vpop.f32.mrf.mxu0
      %v3297 = vadd.f32 0.0, %v3296
      %v3298 = vpop.f32.mrf.mxu0
      %v3299 = vpop.f32.mrf.mxu0
      %v3300 = vadd.f32 0.0, %v3299
      %v3301 = vpop.f32.mrf.mxu0
      %3302 = vmatprep.mubr.bf16.mxu0 0
      %3303 = vmatmul.mubr.bf16.gmra.mxu0 %v3099
      %v3304 = vpop.f32.mrf.mxu0
      %v3305 = vadd.f32 0.0, %v3304
      %v3306 = vpop.f32.mrf.mxu0
      %v3307 = vpop.f32.mrf.mxu0
      %v3308 = vadd.f32 0.0, %v3307
      %v3309 = vpop.f32.mrf.mxu0
      %3310 = vmatprep.mubr.bf16.mxu0 0
      %3311 = vmatmul.mubr.bf16.gmra.mxu0 %v3100
      %v3312 = vpop.f32.mrf.mxu0
      %v3313 = vadd.f32 0.0, %v3312
      %v3314 = vpop.f32.mrf.mxu0
      %v3315 = vpop.f32.mrf.mxu0
      %v3316 = vadd.f32 0.0, %v3315
      %v3317 = vpop.f32.mrf.mxu0
      %3318 = vmatprep.mubr.bf16.mxu0 0
      %3319 = vmatmul.mubr.bf16.gmra.mxu0 %v3101
      %v3320 = vpop.f32.mrf.mxu0
      %v3321 = vadd.f32 0.0, %v3320
      %v3322 = vpop.f32.mrf.mxu0
      %v3323 = vpop.f32.mrf.mxu0
      %v3324 = vadd.f32 0.0, %v3323
      %v3325 = vpop.f32.mrf.mxu0
      %3326 = vdwg.mxu0
      %v3327 = vadd.f32 %v2621, %v3201
      %v3328 = vadd.f32 %v2622, %v3204
      %v3329 = vadd.f32 %v2623, %v3209
      %v3330 = vadd.f32 %v2624, %v3212
      %v3331 = vadd.f32 %v2625, %v3217
      %v3332 = vadd.f32 %v2626, %v3220
      %v3333 = vadd.f32 %v2627, %v3225
      %v3334 = vadd.f32 %v2628, %v3228
      %v3335 = vadd.f32 %v2629, %v3233
      %v3336 = vadd.f32 %v2630, %v3236
      %v3337 = vadd.f32 %v2631, %v3241
      %v3338 = vadd.f32 %v2632, %v3244
      %v3339 = vadd.f32 %v2633, %v3249
      %v3340 = vadd.f32 %v2634, %v3252
      %v3341 = vadd.f32 %v2635, %v3257
      %v3342 = vadd.f32 %v2636, %v3260
      %v3343 = vadd.f32 %v2637, %v3265
      %v3344 = vadd.f32 %v2638, %v3268
      %v3345 = vadd.f32 %v2639, %v3273
      %v3346 = vadd.f32 %v2640, %v3276
      %v3347 = vadd.f32 %v2641, %v3281
      %v3348 = vadd.f32 %v2642, %v3284
      %v3349 = vadd.f32 %v2643, %v3289
      %v3350 = vadd.f32 %v2644, %v3292
      %v3351 = vadd.f32 %v2645, %v3297
      %v3352 = vadd.f32 %v2646, %v3300
      %v3353 = vadd.f32 %v2647, %v3305
      %v3354 = vadd.f32 %v2648, %v3308
      %v3355 = vadd.f32 %v2649, %v3313
      %v3356 = vadd.f32 %v2650, %v3316
      %v3357 = vadd.f32 %v2651, %v3321
      %v3358 = vadd.f32 %v2652, %v3324
      %3359 = vst [vmem:[#allocation2] sm:$0xff] %v3327
      %3360 = vst [vmem:[#allocation2 + $0x8] sm:$0xff] %v3328
      %3361 = vst [vmem:[#allocation2 + $0x10] sm:$0xff] %v3329
      %3362 = vst [vmem:[#allocation2 + $0x18] sm:$0xff] %v3330
      %3363 = vst [vmem:[#allocation2 + $0x20] sm:$0xff] %v3331
      %3364 = vst [vmem:[#allocation2 + $0x28] sm:$0xff] %v3332
      %3365 = vst [vmem:[#allocation2 + $0x30] sm:$0xff] %v3333
      %3366 = vst [vmem:[#allocation2 + $0x38] sm:$0xff] %v3334
      %3367 = vst [vmem:[#allocation2 + $0x40] sm:$0xff] %v3335
      %3368 = vst [vmem:[#allocation2 + $0x48] sm:$0xff] %v3336
      %3369 = vst [vmem:[#allocation2 + $0x50] sm:$0xff] %v3337
      %3370 = vst [vmem:[#allocation2 + $0x58] sm:$0xff] %v3338
      %3371 = vst [vmem:[#allocation2 + $0x60] sm:$0xff] %v3339
      %3372 = vst [vmem:[#allocation2 + $0x68] sm:$0xff] %v3340
      %3373 = vst [vmem:[#allocation2 + $0x70] sm:$0xff] %v3341
      %3374 = vst [vmem:[#allocation2 + $0x78] sm:$0xff] %v3342
      %3375 = vst [vmem:[#allocation2 + $0x80] sm:$0xff] %v3343
      %3376 = vst [vmem:[#allocation2 + $0x88] sm:$0xff] %v3344
      %3377 = vst [vmem:[#allocation2 + $0x90] sm:$0xff] %v3345
      %3378 = vst [vmem:[#allocation2 + $0x98] sm:$0xff] %v3346
      %3379 = vst [vmem:[#allocation2 + $0xa0] sm:$0xff] %v3347
      %3380 = vst [vmem:[#allocation2 + $0xa8] sm:$0xff] %v3348
      %3381 = vst [vmem:[#allocation2 + $0xb0] sm:$0xff] %v3349
      %3382 = vst [vmem:[#allocation2 + $0xb8] sm:$0xff] %v3350
      %3383 = vst [vmem:[#allocation2 + $0xc0] sm:$0xff] %v3351
      %3384 = vst [vmem:[#allocation2 + $0xc8] sm:$0xff] %v3352
      %3385 = vst [vmem:[#allocation2 + $0xd0] sm:$0xff] %v3353
      %3386 = vst [vmem:[#allocation2 + $0xd8] sm:$0xff] %v3354
      %3387 = vst [vmem:[#allocation2 + $0xe0] sm:$0xff] %v3355
      %3388 = vst [vmem:[#allocation2 + $0xe8] sm:$0xff] %v3356
      %3389 = vst [vmem:[#allocation2 + $0xf0] sm:$0xff] %v3357
      %3390 = vst [vmem:[#allocation2 + $0xf8] sm:$0xff] %v3358
      %v3391 = vld [vmem:[%s2122] sm:$0xe]
      %v3392 = vld [vmem:[%s2122 + $0x4] sm:$0xf]
      %v3393 = vld [vmem:[%s2122 + $0x8] sm:$0x1]
      %v3394 = vld [vmem:[%s2122 + $0xc] sm:$0xe]
      %v3395 = vld [vmem:[%s2122 + $0x10] sm:$0xf]
      %v3396 = vld [vmem:[%s2122 + $0x14] sm:$0x1]
      %v3397 = vld [vmem:[%s2122 + $0x18] sm:$0xe]
      %v3398 = vld [vmem:[%s2122 + $0x1c] sm:$0xf]
      %v3399 = vld [vmem:[%s2122 + $0x20] sm:$0x1]
      %v3400 = vld [vmem:[%s2122 + $0x24] sm:$0xe]
      %v3401 = vld [vmem:[%s2122 + $0x28] sm:$0xf]
      %v3402 = vld [vmem:[%s2122 + $0x2c] sm:$0x1]
      %v3403 = vld [vmem:[%s2122 + $0x30] sm:$0xe]
      %v3404 = vld [vmem:[%s2122 + $0x34] sm:$0xf]
      %v3405 = vld [vmem:[%s2122 + $0x38] sm:$0x1]
      %v3406 = vld [vmem:[%s2122 + $0x3c] sm:$0xe]
      %v3407 = vld [vmem:[%s2122 + $0x40] sm:$0xf]
      %v3408 = vld [vmem:[%s2122 + $0x44] sm:$0x1]
      %v3409 = vld [vmem:[%s2122 + $0x48] sm:$0xe]
      %v3410 = vld [vmem:[%s2122 + $0x4c] sm:$0xf]
      %v3411 = vld [vmem:[%s2122 + $0x50] sm:$0x1]
      %v3412 = vld [vmem:[%s2122 + $0x54] sm:$0xe]
      %v3413 = vld [vmem:[%s2122 + $0x58] sm:$0xf]
      %v3414 = vld [vmem:[%s2122 + $0x5c] sm:$0x1]
      %v3415 = vld [vmem:[%s2122 + $0x60] sm:$0xe]
      %v3416 = vld [vmem:[%s2122 + $0x64] sm:$0xf]
      %v3417 = vld [vmem:[%s2122 + $0x68] sm:$0x1]
      %v3418 = vld [vmem:[%s2122 + $0x6c] sm:$0xe]
      %v3419 = vld [vmem:[%s2122 + $0x70] sm:$0xf]
      %v3420 = vld [vmem:[%s2122 + $0x74] sm:$0x1]
      %v3421 = vld [vmem:[%s2122 + $0x78] sm:$0xe]
      %v3422 = vld [vmem:[%s2122 + $0x7c] sm:$0xf]
      %v3423 = vld [vmem:[%s2122 + $0x80] sm:$0x1]
      %v3424 = vld [vmem:[%s2122 + $0x84] sm:$0xe]
      %v3425 = vld [vmem:[%s2122 + $0x88] sm:$0xf]
      %v3426 = vld [vmem:[%s2122 + $0x8c] sm:$0x1]
      %v3427 = vld [vmem:[%s2122 + $0x90] sm:$0xe]
      %v3428 = vld [vmem:[%s2122 + $0x94] sm:$0xf]
      %v3429 = vld [vmem:[%s2122 + $0x98] sm:$0x1]
      %v3430 = vld [vmem:[%s2122 + $0x9c] sm:$0xe]
      %v3431 = vld [vmem:[%s2122 + $0xa0] sm:$0xf]
      %v3432 = vld [vmem:[%s2122 + $0xa4] sm:$0x1]
      %v3433 = vld [vmem:[%s2122 + $0xa8] sm:$0xe]
      %v3434 = vld [vmem:[%s2122 + $0xac] sm:$0xf]
      %v3435 = vld [vmem:[%s2122 + $0xb0] sm:$0x1]
      %v3436 = vld [vmem:[%s2122 + $0xb4] sm:$0xe]
      %v3437 = vld [vmem:[%s2122 + $0xb8] sm:$0xf]
      %v3438 = vld [vmem:[%s2122 + $0xbc] sm:$0x1]
      %v3439 = vld [vmem:[#allocation2] sm:$0xff]
      %v3440 = vld [vmem:[#allocation2 + $0x8] sm:$0xff]
      %v3441 = vld [vmem:[#allocation2 + $0x10] sm:$0xff]
      %v3442 = vld [vmem:[#allocation2 + $0x18] sm:$0xff]
      %v3443 = vld [vmem:[#allocation2 + $0x20] sm:$0xff]
      %v3444 = vld [vmem:[#allocation2 + $0x28] sm:$0xff]
      %v3445 = vld [vmem:[#allocation2 + $0x30] sm:$0xff]
      %v3446 = vld [vmem:[#allocation2 + $0x38] sm:$0xff]
      %v3447 = vld [vmem:[#allocation2 + $0x40] sm:$0xff]
      %v3448 = vld [vmem:[#allocation2 + $0x48] sm:$0xff]
      %v3449 = vld [vmem:[#allocation2 + $0x50] sm:$0xff]
      %v3450 = vld [vmem:[#allocation2 + $0x58] sm:$0xff]
      %v3451 = vld [vmem:[#allocation2 + $0x60] sm:$0xff]
      %v3452 = vld [vmem:[#allocation2 + $0x68] sm:$0xff]
      %v3453 = vld [vmem:[#allocation2 + $0x70] sm:$0xff]
      %v3454 = vld [vmem:[#allocation2 + $0x78] sm:$0xff]
      %v3455 = vld [vmem:[#allocation2 + $0x80] sm:$0xff]
      %v3456 = vld [vmem:[#allocation2 + $0x88] sm:$0xff]
      %v3457 = vld [vmem:[#allocation2 + $0x90] sm:$0xff]
      %v3458 = vld [vmem:[#allocation2 + $0x98] sm:$0xff]
      %v3459 = vld [vmem:[#allocation2 + $0xa0] sm:$0xff]
      %v3460 = vld [vmem:[#allocation2 + $0xa8] sm:$0xff]
      %v3461 = vld [vmem:[#allocation2 + $0xb0] sm:$0xff]
      %v3462 = vld [vmem:[#allocation2 + $0xb8] sm:$0xff]
      %v3463 = vld [vmem:[#allocation2 + $0xc0] sm:$0xff]
      %v3464 = vld [vmem:[#allocation2 + $0xc8] sm:$0xff]
      %v3465 = vld [vmem:[#allocation2 + $0xd0] sm:$0xff]
      %v3466 = vld [vmem:[#allocation2 + $0xd8] sm:$0xff]
      %v3467 = vld [vmem:[#allocation2 + $0xe0] sm:$0xff]
      %v3468 = vld [vmem:[#allocation2 + $0xe8] sm:$0xff]
      %v3469 = vld [vmem:[#allocation2 + $0xf0] sm:$0xff]
      %v3470 = vld [vmem:[#allocation2 + $0xf8] sm:$0xff]
      %v3519 = vrot.slane %v3391, 5
      %v3520 = vrot.slane %v3519, 4
      %v3521 = vrot.slane %v3392, 5
      %v3522 = vsel %vm1655, %v3520, %v3521
      %v3523 = vrot.slane %v3521, 4
      %v3524 = vrot.slane %v3393, 5
      %v3525 = vsel %vm1655, %v3523, %v3524
      %v3526 = vrot.slane %v3394, 5
      %v3527 = vrot.slane %v3526, 4
      %v3528 = vrot.slane %v3395, 5
      %v3529 = vsel %vm1655, %v3527, %v3528
      %v3530 = vrot.slane %v3528, 4
      %v3531 = vrot.slane %v3396, 5
      %v3532 = vsel %vm1655, %v3530, %v3531
      %v3533 = vrot.slane %v3397, 5
      %v3534 = vrot.slane %v3533, 4
      %v3535 = vrot.slane %v3398, 5
      %v3536 = vsel %vm1655, %v3534, %v3535
      %v3537 = vrot.slane %v3535, 4
      %v3538 = vrot.slane %v3399, 5
      %v3539 = vsel %vm1655, %v3537, %v3538
      %v3540 = vrot.slane %v3400, 5
      %v3541 = vrot.slane %v3540, 4
      %v3542 = vrot.slane %v3401, 5
      %v3543 = vsel %vm1655, %v3541, %v3542
      %v3544 = vrot.slane %v3542, 4
      %v3545 = vrot.slane %v3402, 5
      %v3546 = vsel %vm1655, %v3544, %v3545
      %v3547 = vrot.slane %v3403, 5
      %v3548 = vrot.slane %v3547, 4
      %v3549 = vrot.slane %v3404, 5
      %v3550 = vsel %vm1655, %v3548, %v3549
      %v3551 = vrot.slane %v3549, 4
      %v3552 = vrot.slane %v3405, 5
      %v3553 = vsel %vm1655, %v3551, %v3552
      %v3554 = vrot.slane %v3406, 5
      %v3555 = vrot.slane %v3554, 4
      %v3556 = vrot.slane %v3407, 5
      %v3557 = vsel %vm1655, %v3555, %v3556
      %v3558 = vrot.slane %v3556, 4
      %v3559 = vrot.slane %v3408, 5
      %v3560 = vsel %vm1655, %v3558, %v3559
      %v3561 = vrot.slane %v3409, 5
      %v3562 = vrot.slane %v3561, 4
      %v3563 = vrot.slane %v3410, 5
      %v3564 = vsel %vm1655, %v3562, %v3563
      %v3565 = vrot.slane %v3563, 4
      %v3566 = vrot.slane %v3411, 5
      %v3567 = vsel %vm1655, %v3565, %v3566
      %v3568 = vrot.slane %v3412, 5
      %v3569 = vrot.slane %v3568, 4
      %v3570 = vrot.slane %v3413, 5
      %v3571 = vsel %vm1655, %v3569, %v3570
      %v3572 = vrot.slane %v3570, 4
      %v3573 = vrot.slane %v3414, 5
      %v3574 = vsel %vm1655, %v3572, %v3573
      %v3575 = vrot.slane %v3415, 5
      %v3576 = vrot.slane %v3575, 4
      %v3577 = vrot.slane %v3416, 5
      %v3578 = vsel %vm1655, %v3576, %v3577
      %v3579 = vrot.slane %v3577, 4
      %v3580 = vrot.slane %v3417, 5
      %v3581 = vsel %vm1655, %v3579, %v3580
      %v3582 = vrot.slane %v3418, 5
      %v3583 = vrot.slane %v3582, 4
      %v3584 = vrot.slane %v3419, 5
      %v3585 = vsel %vm1655, %v3583, %v3584
      %v3586 = vrot.slane %v3584, 4
      %v3587 = vrot.slane %v3420, 5
      %v3588 = vsel %vm1655, %v3586, %v3587
      %v3589 = vrot.slane %v3421, 5
      %v3590 = vrot.slane %v3589, 4
      %v3591 = vrot.slane %v3422, 5
      %v3592 = vsel %vm1655, %v3590, %v3591
      %v3593 = vrot.slane %v3591, 4
      %v3594 = vrot.slane %v3423, 5
      %v3595 = vsel %vm1655, %v3593, %v3594
      %v3596 = vrot.slane %v3424, 5
      %v3597 = vrot.slane %v3596, 4
      %v3598 = vrot.slane %v3425, 5
      %v3599 = vsel %vm1655, %v3597, %v3598
      %v3600 = vrot.slane %v3598, 4
      %v3601 = vrot.slane %v3426, 5
      %v3602 = vsel %vm1655, %v3600, %v3601
      %v3603 = vrot.slane %v3427, 5
      %v3604 = vrot.slane %v3603, 4
      %v3605 = vrot.slane %v3428, 5
      %v3606 = vsel %vm1655, %v3604, %v3605
      %v3607 = vrot.slane %v3605, 4
      %v3608 = vrot.slane %v3429, 5
      %v3609 = vsel %vm1655, %v3607, %v3608
      %v3610 = vrot.slane %v3430, 5
      %v3611 = vrot.slane %v3610, 4
      %v3612 = vrot.slane %v3431, 5
      %v3613 = vsel %vm1655, %v3611, %v3612
      %v3614 = vrot.slane %v3612, 4
      %v3615 = vrot.slane %v3432, 5
      %v3616 = vsel %vm1655, %v3614, %v3615
      %v3617 = vrot.slane %v3433, 5
      %v3618 = vrot.slane %v3617, 4
      %v3619 = vrot.slane %v3434, 5
      %v3620 = vsel %vm1655, %v3618, %v3619
      %v3621 = vrot.slane %v3619, 4
      %v3622 = vrot.slane %v3435, 5
      %v3623 = vsel %vm1655, %v3621, %v3622
      %v3624 = vrot.slane %v3436, 5
      %v3625 = vrot.slane %v3624, 4
      %v3626 = vrot.slane %v3437, 5
      %v3627 = vsel %vm1655, %v3625, %v3626
      %v3628 = vrot.slane %v3626, 4
      %v3629 = vrot.slane %v3438, 5
      %v3630 = vsel %vm1655, %v3628, %v3629
      %s3631 = scalar_lea.vmem %s210, 320
      %v3632 = vld [vmem:[%s3631] sm:$0xf]
      %v3633 = vld [vmem:[%s3631 + $0x4] sm:$0xf]
      %v3634 = vld [vmem:[%s3631 + $0x8] sm:$0xf]
      %v3635 = vld [vmem:[%s3631 + $0xc] sm:$0xf]
      %v3636 = vld [vmem:[%s3631 + $0x10] sm:$0xf]
      %v3637 = vld [vmem:[%s3631 + $0x14] sm:$0xf]
      %v3638 = vld [vmem:[%s3631 + $0x18] sm:$0xf]
      %v3639 = vld [vmem:[%s3631 + $0x1c] sm:$0xf]
      %v3640 = vld [vmem:[%s3631 + $0x20] sm:$0xf]
      %v3641 = vld [vmem:[%s3631 + $0x24] sm:$0xf]
      %v3642 = vld [vmem:[%s3631 + $0x28] sm:$0xf]
      %v3643 = vld [vmem:[%s3631 + $0x2c] sm:$0xf]
      %v3644 = vld [vmem:[%s3631 + $0x30] sm:$0xf]
      %v3645 = vld [vmem:[%s3631 + $0x34] sm:$0xf]
      %v3646 = vld [vmem:[%s3631 + $0x38] sm:$0xf]
      %v3647 = vld [vmem:[%s3631 + $0x3c] sm:$0xf]
      %v3648 = vunpack.c.l.b16 %v3522
      %v3649 = vunpack.c.l.b16 %v3525
      %v3650 = vunpack.c.l.b16 %v3529
      %v3651 = vunpack.c.l.b16 %v3532
      %v3652 = vunpack.c.l.b16 %v3536
      %v3653 = vunpack.c.l.b16 %v3539
      %v3654 = vunpack.c.l.b16 %v3543
      %v3655 = vunpack.c.l.b16 %v3546
      %v3656 = vunpack.c.l.b16 %v3550
      %v3657 = vunpack.c.l.b16 %v3553
      %v3658 = vunpack.c.l.b16 %v3557
      %v3659 = vunpack.c.l.b16 %v3560
      %v3660 = vunpack.c.l.b16 %v3564
      %v3661 = vunpack.c.l.b16 %v3567
      %v3662 = vunpack.c.l.b16 %v3571
      %v3663 = vunpack.c.l.b16 %v3574
      %v3664 = vunpack.c.l.b16 %v3578
      %v3665 = vunpack.c.l.b16 %v3581
      %v3666 = vunpack.c.l.b16 %v3585
      %v3667 = vunpack.c.l.b16 %v3588
      %v3668 = vunpack.c.l.b16 %v3592
      %v3669 = vunpack.c.l.b16 %v3595
      %v3670 = vunpack.c.l.b16 %v3599
      %v3671 = vunpack.c.l.b16 %v3602
      %v3672 = vunpack.c.l.b16 %v3606
      %v3673 = vunpack.c.l.b16 %v3609
      %v3674 = vunpack.c.l.b16 %v3613
      %v3675 = vunpack.c.l.b16 %v3616
      %v3676 = vunpack.c.l.b16 %v3620
      %v3677 = vunpack.c.l.b16 %v3623
      %v3678 = vunpack.c.l.b16 %v3627
      %v3679 = vunpack.c.l.b16 %v3630
      %v3680 = vpack.c.b16 %v3649, %v3648
      %v3681 = vpack.c.b16 %v3651, %v3650
      %v3682 = vpack.c.b16 %v3653, %v3652
      %v3683 = vpack.c.b16 %v3655, %v3654
      %v3684 = vpack.c.b16 %v3657, %v3656
      %v3685 = vpack.c.b16 %v3659, %v3658
      %v3686 = vpack.c.b16 %v3661, %v3660
      %v3687 = vpack.c.b16 %v3663, %v3662
      %v3688 = vpack.c.b16 %v3665, %v3664
      %v3689 = vpack.c.b16 %v3667, %v3666
      %v3690 = vpack.c.b16 %v3669, %v3668
      %v3691 = vpack.c.b16 %v3671, %v3670
      %v3692 = vpack.c.b16 %v3673, %v3672
      %v3693 = vpack.c.b16 %v3675, %v3674
      %v3694 = vpack.c.b16 %v3677, %v3676
      %v3695 = vpack.c.b16 %v3679, %v3678
      %v3728 = vunpack.c.l.b16 %v3632
      %v3729 = vunpack.c.l.b16 %v3633
      %v3730 = vunpack.c.l.b16 %v3634
      %v3731 = vunpack.c.l.b16 %v3635
      %v3732 = vunpack.c.l.b16 %v3636
      %v3733 = vunpack.c.l.b16 %v3637
      %v3734 = vunpack.c.l.b16 %v3638
      %v3735 = vunpack.c.l.b16 %v3639
      %v3736 = vunpack.c.l.b16 %v3640
      %v3737 = vunpack.c.l.b16 %v3641
      %v3738 = vunpack.c.l.b16 %v3642
      %v3739 = vunpack.c.l.b16 %v3643
      %v3740 = vunpack.c.l.b16 %v3644
      %v3741 = vunpack.c.l.b16 %v3645
      %v3742 = vunpack.c.l.b16 %v3646
      %v3743 = vunpack.c.l.b16 %v3647
      %v3744 = vpack.c.b16 %v3729, %v3728
      %v3745 = vpack.c.b16 %v3731, %v3730
      %v3746 = vpack.c.b16 %v3733, %v3732
      %v3747 = vpack.c.b16 %v3735, %v3734
      %v3748 = vpack.c.b16 %v3737, %v3736
      %v3749 = vpack.c.b16 %v3739, %v3738
      %v3750 = vpack.c.b16 %v3741, %v3740
      %v3751 = vpack.c.b16 %v3743, %v3742
      %3760 = vmatprep.subr.bf16.mxu0 0
      %3761 = vmatpush1.bf16.msra.mxu0 %v3751
      %3762 = vmatprep.subr.bf16.mxu0 0
      %3763 = vmatpush1.bf16.msra.mxu0 %v3750
      %3764 = vmatprep.subr.bf16.mxu0 0
      %3765 = vmatpush1.bf16.msra.mxu0 %v3749
      %3766 = vmatprep.subr.bf16.mxu0 0
      %3767 = vmatpush1.bf16.msra.mxu0 %v3748
      %3768 = vmatprep.subr.bf16.mxu0 0
      %3769 = vmatpush1.bf16.msra.mxu0 %v3747
      %3770 = vmatprep.subr.bf16.mxu0 0
      %3771 = vmatpush1.bf16.msra.mxu0 %v3746
      %3772 = vmatprep.subr.bf16.mxu0 0
      %3773 = vmatpush1.bf16.msra.mxu0 %v3745
      %3774 = vmatprep.subr.bf16.mxu0 0
      %3775 = vmatpush1.bf16.msra.mxu0 %v3744
      %3776 = vmatprep.subr.bf16.mxu0 0
      %3777 = vmatpush2.bf16.msra.mxu0 0
      %3778 = vmatprep.subr.bf16.mxu0 0
      %3779 = vmatpush2.bf16.msra.mxu0 0
      %3780 = vmatprep.subr.bf16.mxu0 0
      %3781 = vmatpush2.bf16.msra.mxu0 0
      %3782 = vmatprep.subr.bf16.mxu0 0
      %3783 = vmatpush2.bf16.msra.mxu0 0
      %3784 = vmatprep.subr.bf16.mxu0 0
      %3785 = vmatpush2.bf16.msra.mxu0 0
      %3786 = vmatprep.subr.bf16.mxu0 0
      %3787 = vmatpush2.bf16.msra.mxu0 0
      %3788 = vmatprep.subr.bf16.mxu0 0
      %3789 = vmatpush2.bf16.msra.mxu0 0
      %3790 = vmatprep.subr.bf16.mxu0 0
      %3791 = vmatpush2.bf16.msra.mxu0 0
      %3792 = vmatprep.mubr.bf16.mxu0 0
      %3793 = vmatmul.mubr.bf16.gmra.mxu0 %v3680
      %v3794 = vpop.f32.mrf.mxu0
      %v3795 = vadd.f32 0.0, %v3794
      %v3796 = vpop.f32.mrf.mxu0
      %v3797 = vpop.f32.mrf.mxu0
      %v3798 = vadd.f32 0.0, %v3797
      %v3799 = vpop.f32.mrf.mxu0
      %3800 = vmatprep.mubr.bf16.mxu0 0
      %3801 = vmatmul.mubr.bf16.gmra.mxu0 %v3681
      %v3802 = vpop.f32.mrf.mxu0
      %v3803 = vadd.f32 0.0, %v3802
      %v3804 = vpop.f32.mrf.mxu0
      %v3805 = vpop.f32.mrf.mxu0
      %v3806 = vadd.f32 0.0, %v3805
      %v3807 = vpop.f32.mrf.mxu0
      %3808 = vmatprep.mubr.bf16.mxu0 0
      %3809 = vmatmul.mubr.bf16.gmra.mxu0 %v3682
      %v3810 = vpop.f32.mrf.mxu0
      %v3811 = vadd.f32 0.0, %v3810
      %v3812 = vpop.f32.mrf.mxu0
      %v3813 = vpop.f32.mrf.mxu0
      %v3814 = vadd.f32 0.0, %v3813
      %v3815 = vpop.f32.mrf.mxu0
      %3816 = vmatprep.mubr.bf16.mxu0 0
      %3817 = vmatmul.mubr.bf16.gmra.mxu0 %v3683
      %v3818 = vpop.f32.mrf.mxu0
      %v3819 = vadd.f32 0.0, %v3818
      %v3820 = vpop.f32.mrf.mxu0
      %v3821 = vpop.f32.mrf.mxu0
      %v3822 = vadd.f32 0.0, %v3821
      %v3823 = vpop.f32.mrf.mxu0
      %3824 = vmatprep.mubr.bf16.mxu0 0
      %3825 = vmatmul.mubr.bf16.gmra.mxu0 %v3684
      %v3826 = vpop.f32.mrf.mxu0
      %v3827 = vadd.f32 0.0, %v3826
      %v3828 = vpop.f32.mrf.mxu0
      %v3829 = vpop.f32.mrf.mxu0
      %v3830 = vadd.f32 0.0, %v3829
      %v3831 = vpop.f32.mrf.mxu0
      %3832 = vmatprep.mubr.bf16.mxu0 0
      %3833 = vmatmul.mubr.bf16.gmra.mxu0 %v3685
      %v3834 = vpop.f32.mrf.mxu0
      %v3835 = vadd.f32 0.0, %v3834
      %v3836 = vpop.f32.mrf.mxu0
      %v3837 = vpop.f32.mrf.mxu0
      %v3838 = vadd.f32 0.0, %v3837
      %v3839 = vpop.f32.mrf.mxu0
      %3840 = vmatprep.mubr.bf16.mxu0 0
      %3841 = vmatmul.mubr.bf16.gmra.mxu0 %v3686
      %v3842 = vpop.f32.mrf.mxu0
      %v3843 = vadd.f32 0.0, %v3842
      %v3844 = vpop.f32.mrf.mxu0
      %v3845 = vpop.f32.mrf.mxu0
      %v3846 = vadd.f32 0.0, %v3845
      %v3847 = vpop.f32.mrf.mxu0
      %3848 = vmatprep.mubr.bf16.mxu0 0
      %3849 = vmatmul.mubr.bf16.gmra.mxu0 %v3687
      %v3850 = vpop.f32.mrf.mxu0
      %v3851 = vadd.f32 0.0, %v3850
      %v3852 = vpop.f32.mrf.mxu0
      %v3853 = vpop.f32.mrf.mxu0
      %v3854 = vadd.f32 0.0, %v3853
      %v3855 = vpop.f32.mrf.mxu0
      %3856 = vmatprep.mubr.bf16.mxu0 0
      %3857 = vmatmul.mubr.bf16.gmra.mxu0 %v3688
      %v3858 = vpop.f32.mrf.mxu0
      %v3859 = vadd.f32 0.0, %v3858
      %v3860 = vpop.f32.mrf.mxu0
      %v3861 = vpop.f32.mrf.mxu0
      %v3862 = vadd.f32 0.0, %v3861
      %v3863 = vpop.f32.mrf.mxu0
      %3864 = vmatprep.mubr.bf16.mxu0 0
      %3865 = vmatmul.mubr.bf16.gmra.mxu0 %v3689
      %v3866 = vpop.f32.mrf.mxu0
      %v3867 = vadd.f32 0.0, %v3866
      %v3868 = vpop.f32.mrf.mxu0
      %v3869 = vpop.f32.mrf.mxu0
      %v3870 = vadd.f32 0.0, %v3869
      %v3871 = vpop.f32.mrf.mxu0
      %3872 = vmatprep.mubr.bf16.mxu0 0
      %3873 = vmatmul.mubr.bf16.gmra.mxu0 %v3690
      %v3874 = vpop.f32.mrf.mxu0
      %v3875 = vadd.f32 0.0, %v3874
      %v3876 = vpop.f32.mrf.mxu0
      %v3877 = vpop.f32.mrf.mxu0
      %v3878 = vadd.f32 0.0, %v3877
      %v3879 = vpop.f32.mrf.mxu0
      %3880 = vmatprep.mubr.bf16.mxu0 0
      %3881 = vmatmul.mubr.bf16.gmra.mxu0 %v3691
      %v3882 = vpop.f32.mrf.mxu0
      %v3883 = vadd.f32 0.0, %v3882
      %v3884 = vpop.f32.mrf.mxu0
      %v3885 = vpop.f32.mrf.mxu0
      %v3886 = vadd.f32 0.0, %v3885
      %v3887 = vpop.f32.mrf.mxu0
      %3888 = vmatprep.mubr.bf16.mxu0 0
      %3889 = vmatmul.mubr.bf16.gmra.mxu0 %v3692
      %v3890 = vpop.f32.mrf.mxu0
      %v3891 = vadd.f32 0.0, %v3890
      %v3892 = vpop.f32.mrf.mxu0
      %v3893 = vpop.f32.mrf.mxu0
      %v3894 = vadd.f32 0.0, %v3893
      %v3895 = vpop.f32.mrf.mxu0
      %3896 = vmatprep.mubr.bf16.mxu0 0
      %3897 = vmatmul.mubr.bf16.gmra.mxu0 %v3693
      %v3898 = vpop.f32.mrf.mxu0
      %v3899 = vadd.f32 0.0, %v3898
      %v3900 = vpop.f32.mrf.mxu0
      %v3901 = vpop.f32.mrf.mxu0
      %v3902 = vadd.f32 0.0, %v3901
      %v3903 = vpop.f32.mrf.mxu0
      %3904 = vmatprep.mubr.bf16.mxu0 0
      %3905 = vmatmul.mubr.bf16.gmra.mxu0 %v3694
      %v3906 = vpop.f32.mrf.mxu0
      %v3907 = vadd.f32 0.0, %v3906
      %v3908 = vpop.f32.mrf.mxu0
      %v3909 = vpop.f32.mrf.mxu0
      %v3910 = vadd.f32 0.0, %v3909
      %v3911 = vpop.f32.mrf.mxu0
      %3912 = vmatprep.mubr.bf16.mxu0 0
      %3913 = vmatmul.mubr.bf16.gmra.mxu0 %v3695
      %v3914 = vpop.f32.mrf.mxu0
      %v3915 = vadd.f32 0.0, %v3914
      %v3916 = vpop.f32.mrf.mxu0
      %v3917 = vpop.f32.mrf.mxu0
      %v3918 = vadd.f32 0.0, %v3917
      %v3919 = vpop.f32.mrf.mxu0
      %3920 = vdwg.mxu0
      %v3921 = vadd.f32 %v3439, %v3795
      %v3922 = vadd.f32 %v3440, %v3798
      %v3923 = vadd.f32 %v3441, %v3803
      %v3924 = vadd.f32 %v3442, %v3806
      %v3925 = vadd.f32 %v3443, %v3811
      %v3926 = vadd.f32 %v3444, %v3814
      %v3927 = vadd.f32 %v3445, %v3819
      %v3928 = vadd.f32 %v3446, %v3822
      %v3929 = vadd.f32 %v3447, %v3827
      %v3930 = vadd.f32 %v3448, %v3830
      %v3931 = vadd.f32 %v3449, %v3835
      %v3932 = vadd.f32 %v3450, %v3838
      %v3933 = vadd.f32 %v3451, %v3843
      %v3934 = vadd.f32 %v3452, %v3846
      %v3935 = vadd.f32 %v3453, %v3851
      %v3936 = vadd.f32 %v3454, %v3854
      %v3937 = vadd.f32 %v3455, %v3859
      %v3938 = vadd.f32 %v3456, %v3862
      %v3939 = vadd.f32 %v3457, %v3867
      %v3940 = vadd.f32 %v3458, %v3870
      %v3941 = vadd.f32 %v3459, %v3875
      %v3942 = vadd.f32 %v3460, %v3878
      %v3943 = vadd.f32 %v3461, %v3883
      %v3944 = vadd.f32 %v3462, %v3886
      %v3945 = vadd.f32 %v3463, %v3891
      %v3946 = vadd.f32 %v3464, %v3894
      %v3947 = vadd.f32 %v3465, %v3899
      %v3948 = vadd.f32 %v3466, %v3902
      %v3949 = vadd.f32 %v3467, %v3907
      %v3950 = vadd.f32 %v3468, %v3910
      %v3951 = vadd.f32 %v3469, %v3915
      %v3952 = vadd.f32 %v3470, %v3918
      %3953 = vst [vmem:[#allocation2] sm:$0xff] %v3921
      %3954 = vst [vmem:[#allocation2 + $0x8] sm:$0xff] %v3922
      %3955 = vst [vmem:[#allocation2 + $0x10] sm:$0xff] %v3923
      %3956 = vst [vmem:[#allocation2 + $0x18] sm:$0xff] %v3924
      %3957 = vst [vmem:[#allocation2 + $0x20] sm:$0xff] %v3925
      %3958 = vst [vmem:[#allocation2 + $0x28] sm:$0xff] %v3926
      %3959 = vst [vmem:[#allocation2 + $0x30] sm:$0xff] %v3927
      %3960 = vst [vmem:[#allocation2 + $0x38] sm:$0xff] %v3928
      %3961 = vst [vmem:[#allocation2 + $0x40] sm:$0xff] %v3929
      %3962 = vst [vmem:[#allocation2 + $0x48] sm:$0xff] %v3930
      %3963 = vst [vmem:[#allocation2 + $0x50] sm:$0xff] %v3931
      %3964 = vst [vmem:[#allocation2 + $0x58] sm:$0xff] %v3932
      %3965 = vst [vmem:[#allocation2 + $0x60] sm:$0xff] %v3933
      %3966 = vst [vmem:[#allocation2 + $0x68] sm:$0xff] %v3934
      %3967 = vst [vmem:[#allocation2 + $0x70] sm:$0xff] %v3935
      %3968 = vst [vmem:[#allocation2 + $0x78] sm:$0xff] %v3936
      %3969 = vst [vmem:[#allocation2 + $0x80] sm:$0xff] %v3937
      %3970 = vst [vmem:[#allocation2 + $0x88] sm:$0xff] %v3938
      %3971 = vst [vmem:[#allocation2 + $0x90] sm:$0xff] %v3939
      %3972 = vst [vmem:[#allocation2 + $0x98] sm:$0xff] %v3940
      %3973 = vst [vmem:[#allocation2 + $0xa0] sm:$0xff] %v3941
      %3974 = vst [vmem:[#allocation2 + $0xa8] sm:$0xff] %v3942
      %3975 = vst [vmem:[#allocation2 + $0xb0] sm:$0xff] %v3943
      %3976 = vst [vmem:[#allocation2 + $0xb8] sm:$0xff] %v3944
      %3977 = vst [vmem:[#allocation2 + $0xc0] sm:$0xff] %v3945
      %3978 = vst [vmem:[#allocation2 + $0xc8] sm:$0xff] %v3946
      %3979 = vst [vmem:[#allocation2 + $0xd0] sm:$0xff] %v3947
      %3980 = vst [vmem:[#allocation2 + $0xd8] sm:$0xff] %v3948
      %3981 = vst [vmem:[#allocation2 + $0xe0] sm:$0xff] %v3949
      %3982 = vst [vmem:[#allocation2 + $0xe8] sm:$0xff] %v3950
      %3983 = vst [vmem:[#allocation2 + $0xf0] sm:$0xff] %v3951
      %3984 = vst [vmem:[#allocation2 + $0xf8] sm:$0xff] %v3952
      %s3985 = scalar_lea.vmem %s206, 24
      %v3986 = vld [vmem:[%s3985] sm:$0xf]
      %v3987 = vld [vmem:[%s3985 + $0x4] sm:$0xf]
      %v3988 = vld [vmem:[%s3985 + $0xc] sm:$0xf]
      %v3989 = vld [vmem:[%s3985 + $0x10] sm:$0xf]
      %v3990 = vld [vmem:[%s3985 + $0x18] sm:$0xf]
      %v3991 = vld [vmem:[%s3985 + $0x1c] sm:$0xf]
      %v3992 = vld [vmem:[%s3985 + $0x24] sm:$0xf]
      %v3993 = vld [vmem:[%s3985 + $0x28] sm:$0xf]
      %v3994 = vld [vmem:[%s3985 + $0x30] sm:$0xf]
      %v3995 = vld [vmem:[%s3985 + $0x34] sm:$0xf]
      %v3996 = vld [vmem:[%s3985 + $0x3c] sm:$0xf]
      %v3997 = vld [vmem:[%s3985 + $0x40] sm:$0xf]
      %v3998 = vld [vmem:[%s3985 + $0x48] sm:$0xf]
      %v3999 = vld [vmem:[%s3985 + $0x4c] sm:$0xf]
      %v4000 = vld [vmem:[%s3985 + $0x54] sm:$0xf]
      %v4001 = vld [vmem:[%s3985 + $0x58] sm:$0xf]
      %v4002 = vld [vmem:[%s3985 + $0x60] sm:$0xf]
      %v4003 = vld [vmem:[%s3985 + $0x64] sm:$0xf]
      %v4004 = vld [vmem:[%s3985 + $0x6c] sm:$0xf]
      %v4005 = vld [vmem:[%s3985 + $0x70] sm:$0xf]
      %v4006 = vld [vmem:[%s3985 + $0x78] sm:$0xf]
      %v4007 = vld [vmem:[%s3985 + $0x7c] sm:$0xf]
      %v4008 = vld [vmem:[%s3985 + $0x84] sm:$0xf]
      %v4009 = vld [vmem:[%s3985 + $0x88] sm:$0xf]
      %v4010 = vld [vmem:[%s3985 + $0x90] sm:$0xf]
      %v4011 = vld [vmem:[%s3985 + $0x94] sm:$0xf]
      %v4012 = vld [vmem:[%s3985 + $0x9c] sm:$0xf]
      %v4013 = vld [vmem:[%s3985 + $0xa0] sm:$0xf]
      %v4014 = vld [vmem:[%s3985 + $0xa8] sm:$0xf]
      %v4015 = vld [vmem:[%s3985 + $0xac] sm:$0xf]
      %v4016 = vld [vmem:[%s3985 + $0xb4] sm:$0xf]
      %v4017 = vld [vmem:[%s3985 + $0xb8] sm:$0xf]
      %v4018 = vld [vmem:[#allocation2] sm:$0xff]
      %v4019 = vld [vmem:[#allocation2 + $0x8] sm:$0xff]
      %v4020 = vld [vmem:[#allocation2 + $0x10] sm:$0xff]
      %v4021 = vld [vmem:[#allocation2 + $0x18] sm:$0xff]
      %v4022 = vld [vmem:[#allocation2 + $0x20] sm:$0xff]
      %v4023 = vld [vmem:[#allocation2 + $0x28] sm:$0xff]
      %v4024 = vld [vmem:[#allocation2 + $0x30] sm:$0xff]
      %v4025 = vld [vmem:[#allocation2 + $0x38] sm:$0xff]
      %v4026 = vld [vmem:[#allocation2 + $0x40] sm:$0xff]
      %v4027 = vld [vmem:[#allocation2 + $0x48] sm:$0xff]
      %v4028 = vld [vmem:[#allocation2 + $0x50] sm:$0xff]
      %v4029 = vld [vmem:[#allocation2 + $0x58] sm:$0xff]
      %v4030 = vld [vmem:[#allocation2 + $0x60] sm:$0xff]
      %v4031 = vld [vmem:[#allocation2 + $0x68] sm:$0xff]
      %v4032 = vld [vmem:[#allocation2 + $0x70] sm:$0xff]
      %v4033 = vld [vmem:[#allocation2 + $0x78] sm:$0xff]
      %v4034 = vld [vmem:[#allocation2 + $0x80] sm:$0xff]
      %v4035 = vld [vmem:[#allocation2 + $0x88] sm:$0xff]
      %v4036 = vld [vmem:[#allocation2 + $0x90] sm:$0xff]
      %v4037 = vld [vmem:[#allocation2 + $0x98] sm:$0xff]
      %v4038 = vld [vmem:[#allocation2 + $0xa0] sm:$0xff]
      %v4039 = vld [vmem:[#allocation2 + $0xa8] sm:$0xff]
      %v4040 = vld [vmem:[#allocation2 + $0xb0] sm:$0xff]
      %v4041 = vld [vmem:[#allocation2 + $0xb8] sm:$0xff]
      %v4042 = vld [vmem:[#allocation2 + $0xc0] sm:$0xff]
      %v4043 = vld [vmem:[#allocation2 + $0xc8] sm:$0xff]
      %v4044 = vld [vmem:[#allocation2 + $0xd0] sm:$0xff]
      %v4045 = vld [vmem:[#allocation2 + $0xd8] sm:$0xff]
      %v4046 = vld [vmem:[#allocation2 + $0xe0] sm:$0xff]
      %v4047 = vld [vmem:[#allocation2 + $0xe8] sm:$0xff]
      %v4048 = vld [vmem:[#allocation2 + $0xf0] sm:$0xff]
      %v4049 = vld [vmem:[#allocation2 + $0xf8] sm:$0xff]
      %s4050 = scalar_lea.vmem %s210, 384
      %v4051 = vld [vmem:[%s4050] sm:$0xf]
      %v4052 = vld [vmem:[%s4050 + $0x4] sm:$0xf]
      %v4053 = vld [vmem:[%s4050 + $0x8] sm:$0xf]
      %v4054 = vld [vmem:[%s4050 + $0xc] sm:$0xf]
      %v4055 = vld [vmem:[%s4050 + $0x10] sm:$0xf]
      %v4056 = vld [vmem:[%s4050 + $0x14] sm:$0xf]
      %v4057 = vld [vmem:[%s4050 + $0x18] sm:$0xf]
      %v4058 = vld [vmem:[%s4050 + $0x1c] sm:$0xf]
      %v4059 = vld [vmem:[%s4050 + $0x20] sm:$0xf]
      %v4060 = vld [vmem:[%s4050 + $0x24] sm:$0xf]
      %v4061 = vld [vmem:[%s4050 + $0x28] sm:$0xf]
      %v4062 = vld [vmem:[%s4050 + $0x2c] sm:$0xf]
      %v4063 = vld [vmem:[%s4050 + $0x30] sm:$0xf]
      %v4064 = vld [vmem:[%s4050 + $0x34] sm:$0xf]
      %v4065 = vld [vmem:[%s4050 + $0x38] sm:$0xf]
      %v4066 = vld [vmem:[%s4050 + $0x3c] sm:$0xf]
      %v4099 = vunpack.c.l.b16 %v3986
      %v4100 = vunpack.c.l.b16 %v3987
      %v4101 = vunpack.c.l.b16 %v3988
      %v4102 = vunpack.c.l.b16 %v3989
      %v4103 = vunpack.c.l.b16 %v3990
      %v4104 = vunpack.c.l.b16 %v3991
      %v4105 = vunpack.c.l.b16 %v3992
      %v4106 = vunpack.c.l.b16 %v3993
      %v4107 = vunpack.c.l.b16 %v3994
      %v4108 = vunpack.c.l.b16 %v3995
      %v4109 = vunpack.c.l.b16 %v3996
      %v4110 = vunpack.c.l.b16 %v3997
      %v4111 = vunpack.c.l.b16 %v3998
      %v4112 = vunpack.c.l.b16 %v3999
      %v4113 = vunpack.c.l.b16 %v4000
      %v4114 = vunpack.c.l.b16 %v4001
      %v4115 = vunpack.c.l.b16 %v4002
      %v4116 = vunpack.c.l.b16 %v4003
      %v4117 = vunpack.c.l.b16 %v4004
      %v4118 = vunpack.c.l.b16 %v4005
      %v4119 = vunpack.c.l.b16 %v4006
      %v4120 = vunpack.c.l.b16 %v4007
      %v4121 = vunpack.c.l.b16 %v4008
      %v4122 = vunpack.c.l.b16 %v4009
      %v4123 = vunpack.c.l.b16 %v4010
      %v4124 = vunpack.c.l.b16 %v4011
      %v4125 = vunpack.c.l.b16 %v4012
      %v4126 = vunpack.c.l.b16 %v4013
      %v4127 = vunpack.c.l.b16 %v4014
      %v4128 = vunpack.c.l.b16 %v4015
      %v4129 = vunpack.c.l.b16 %v4016
      %v4130 = vunpack.c.l.b16 %v4017
      %v4131 = vpack.c.b16 %v4100, %v4099
      %v4132 = vpack.c.b16 %v4102, %v4101
      %v4133 = vpack.c.b16 %v4104, %v4103
      %v4134 = vpack.c.b16 %v4106, %v4105
      %v4135 = vpack.c.b16 %v4108, %v4107
      %v4136 = vpack.c.b16 %v4110, %v4109
      %v4137 = vpack.c.b16 %v4112, %v4111
      %v4138 = vpack.c.b16 %v4114, %v4113
      %v4139 = vpack.c.b16 %v4116, %v4115
      %v4140 = vpack.c.b16 %v4118, %v4117
      %v4141 = vpack.c.b16 %v4120, %v4119
      %v4142 = vpack.c.b16 %v4122, %v4121
      %v4143 = vpack.c.b16 %v4124, %v4123
      %v4144 = vpack.c.b16 %v4126, %v4125
      %v4145 = vpack.c.b16 %v4128, %v4127
      %v4146 = vpack.c.b16 %v4130, %v4129
      %v4179 = vunpack.c.l.b16 %v4051
      %v4180 = vunpack.c.l.b16 %v4052
      %v4181 = vunpack.c.l.b16 %v4053
      %v4182 = vunpack.c.l.b16 %v4054
      %v4183 = vunpack.c.l.b16 %v4055
      %v4184 = vunpack.c.l.b16 %v4056
      %v4185 = vunpack.c.l.b16 %v4057
      %v4186 = vunpack.c.l.b16 %v4058
      %v4187 = vunpack.c.l.b16 %v4059
      %v4188 = vunpack.c.l.b16 %v4060
      %v4189 = vunpack.c.l.b16 %v4061
      %v4190 = vunpack.c.l.b16 %v4062
      %v4191 = vunpack.c.l.b16 %v4063
      %v4192 = vunpack.c.l.b16 %v4064
      %v4193 = vunpack.c.l.b16 %v4065
      %v4194 = vunpack.c.l.b16 %v4066
      %v4195 = vpack.c.b16 %v4180, %v4179
      %v4196 = vpack.c.b16 %v4182, %v4181
      %v4197 = vpack.c.b16 %v4184, %v4183
      %v4198 = vpack.c.b16 %v4186, %v4185
      %v4199 = vpack.c.b16 %v4188, %v4187
      %v4200 = vpack.c.b16 %v4190, %v4189
      %v4201 = vpack.c.b16 %v4192, %v4191
      %v4202 = vpack.c.b16 %v4194, %v4193
      %4211 = vmatprep.subr.bf16.mxu0 0
      %4212 = vmatpush1.bf16.msra.mxu0 %v4202
      %4213 = vmatprep.subr.bf16.mxu0 0
      %4214 = vmatpush1.bf16.msra.mxu0 %v4201
      %4215 = vmatprep.subr.bf16.mxu0 0
      %4216 = vmatpush1.bf16.msra.mxu0 %v4200
      %4217 = vmatprep.subr.bf16.mxu0 0
      %4218 = vmatpush1.bf16.msra.mxu0 %v4199
      %4219 = vmatprep.subr.bf16.mxu0 0
      %4220 = vmatpush1.bf16.msra.mxu0 %v4198
      %4221 = vmatprep.subr.bf16.mxu0 0
      %4222 = vmatpush1.bf16.msra.mxu0 %v4197
      %4223 = vmatprep.subr.bf16.mxu0 0
      %4224 = vmatpush1.bf16.msra.mxu0 %v4196
      %4225 = vmatprep.subr.bf16.mxu0 0
      %4226 = vmatpush1.bf16.msra.mxu0 %v4195
      %4227 = vmatprep.subr.bf16.mxu0 0
      %4228 = vmatpush2.bf16.msra.mxu0 0
      %4229 = vmatprep.subr.bf16.mxu0 0
      %4230 = vmatpush2.bf16.msra.mxu0 0
      %4231 = vmatprep.subr.bf16.mxu0 0
      %4232 = vmatpush2.bf16.msra.mxu0 0
      %4233 = vmatprep.subr.bf16.mxu0 0
      %4234 = vmatpush2.bf16.msra.mxu0 0
      %4235 = vmatprep.subr.bf16.mxu0 0
      %4236 = vmatpush2.bf16.msra.mxu0 0
      %4237 = vmatprep.subr.bf16.mxu0 0
      %4238 = vmatpush2.bf16.msra.mxu0 0
      %4239 = vmatprep.subr.bf16.mxu0 0
      %4240 = vmatpush2.bf16.msra.mxu0 0
      %4241 = vmatprep.subr.bf16.mxu0 0
      %4242 = vmatpush2.bf16.msra.mxu0 0
      %4243 = vmatprep.mubr.bf16.mxu0 0
      %4244 = vmatmul.mubr.bf16.gmra.mxu0 %v4131
      %v4245 = vpop.f32.mrf.mxu0
      %v4246 = vadd.f32 0.0, %v4245
      %v4247 = vpop.f32.mrf.mxu0
      %v4248 = vpop.f32.mrf.mxu0
      %v4249 = vadd.f32 0.0, %v4248
      %v4250 = vpop.f32.mrf.mxu0
      %4251 = vmatprep.mubr.bf16.mxu0 0
      %4252 = vmatmul.mubr.bf16.gmra.mxu0 %v4132
      %v4253 = vpop.f32.mrf.mxu0
      %v4254 = vadd.f32 0.0, %v4253
      %v4255 = vpop.f32.mrf.mxu0
      %v4256 = vpop.f32.mrf.mxu0
      %v4257 = vadd.f32 0.0, %v4256
      %v4258 = vpop.f32.mrf.mxu0
      %4259 = vmatprep.mubr.bf16.mxu0 0
      %4260 = vmatmul.mubr.bf16.gmra.mxu0 %v4133
      %v4261 = vpop.f32.mrf.mxu0
      %v4262 = vadd.f32 0.0, %v4261
      %v4263 = vpop.f32.mrf.mxu0
      %v4264 = vpop.f32.mrf.mxu0
      %v4265 = vadd.f32 0.0, %v4264
      %v4266 = vpop.f32.mrf.mxu0
      %4267 = vmatprep.mubr.bf16.mxu0 0
      %4268 = vmatmul.mubr.bf16.gmra.mxu0 %v4134
      %v4269 = vpop.f32.mrf.mxu0
      %v4270 = vadd.f32 0.0, %v4269
      %v4271 = vpop.f32.mrf.mxu0
      %v4272 = vpop.f32.mrf.mxu0
      %v4273 = vadd.f32 0.0, %v4272
      %v4274 = vpop.f32.mrf.mxu0
      %4275 = vmatprep.mubr.bf16.mxu0 0
      %4276 = vmatmul.mubr.bf16.gmra.mxu0 %v4135
      %v4277 = vpop.f32.mrf.mxu0
      %v4278 = vadd.f32 0.0, %v4277
      %v4279 = vpop.f32.mrf.mxu0
      %v4280 = vpop.f32.mrf.mxu0
      %v4281 = vadd.f32 0.0, %v4280
      %v4282 = vpop.f32.mrf.mxu0
      %4283 = vmatprep.mubr.bf16.mxu0 0
      %4284 = vmatmul.mubr.bf16.gmra.mxu0 %v4136
      %v4285 = vpop.f32.mrf.mxu0
      %v4286 = vadd.f32 0.0, %v4285
      %v4287 = vpop.f32.mrf.mxu0
      %v4288 = vpop.f32.mrf.mxu0
      %v4289 = vadd.f32 0.0, %v4288
      %v4290 = vpop.f32.mrf.mxu0
      %4291 = vmatprep.mubr.bf16.mxu0 0
      %4292 = vmatmul.mubr.bf16.gmra.mxu0 %v4137
      %v4293 = vpop.f32.mrf.mxu0
      %v4294 = vadd.f32 0.0, %v4293
      %v4295 = vpop.f32.mrf.mxu0
      %v4296 = vpop.f32.mrf.mxu0
      %v4297 = vadd.f32 0.0, %v4296
      %v4298 = vpop.f32.mrf.mxu0
      %4299 = vmatprep.mubr.bf16.mxu0 0
      %4300 = vmatmul.mubr.bf16.gmra.mxu0 %v4138
      %v4301 = vpop.f32.mrf.mxu0
      %v4302 = vadd.f32 0.0, %v4301
      %v4303 = vpop.f32.mrf.mxu0
      %v4304 = vpop.f32.mrf.mxu0
      %v4305 = vadd.f32 0.0, %v4304
      %v4306 = vpop.f32.mrf.mxu0
      %4307 = vmatprep.mubr.bf16.mxu0 0
      %4308 = vmatmul.mubr.bf16.gmra.mxu0 %v4139
      %v4309 = vpop.f32.mrf.mxu0
      %v4310 = vadd.f32 0.0, %v4309
      %v4311 = vpop.f32.mrf.mxu0
      %v4312 = vpop.f32.mrf.mxu0
      %v4313 = vadd.f32 0.0, %v4312
      %v4314 = vpop.f32.mrf.mxu0
      %4315 = vmatprep.mubr.bf16.mxu0 0
      %4316 = vmatmul.mubr.bf16.gmra.mxu0 %v4140
      %v4317 = vpop.f32.mrf.mxu0
      %v4318 = vadd.f32 0.0, %v4317
      %v4319 = vpop.f32.mrf.mxu0
      %v4320 = vpop.f32.mrf.mxu0
      %v4321 = vadd.f32 0.0, %v4320
      %v4322 = vpop.f32.mrf.mxu0
      %4323 = vmatprep.mubr.bf16.mxu0 0
      %4324 = vmatmul.mubr.bf16.gmra.mxu0 %v4141
      %v4325 = vpop.f32.mrf.mxu0
      %v4326 = vadd.f32 0.0, %v4325
      %v4327 = vpop.f32.mrf.mxu0
      %v4328 = vpop.f32.mrf.mxu0
      %v4329 = vadd.f32 0.0, %v4328
      %v4330 = vpop.f32.mrf.mxu0
      %4331 = vmatprep.mubr.bf16.mxu0 0
      %4332 = vmatmul.mubr.bf16.gmra.mxu0 %v4142
      %v4333 = vpop.f32.mrf.mxu0
      %v4334 = vadd.f32 0.0, %v4333
      %v4335 = vpop.f32.mrf.mxu0
      %v4336 = vpop.f32.mrf.mxu0
      %v4337 = vadd.f32 0.0, %v4336
      %v4338 = vpop.f32.mrf.mxu0
      %4339 = vmatprep.mubr.bf16.mxu0 0
      %4340 = vmatmul.mubr.bf16.gmra.mxu0 %v4143
      %v4341 = vpop.f32.mrf.mxu0
      %v4342 = vadd.f32 0.0, %v4341
      %v4343 = vpop.f32.mrf.mxu0
      %v4344 = vpop.f32.mrf.mxu0
      %v4345 = vadd.f32 0.0, %v4344
      %v4346 = vpop.f32.mrf.mxu0
      %4347 = vmatprep.mubr.bf16.mxu0 0
      %4348 = vmatmul.mubr.bf16.gmra.mxu0 %v4144
      %v4349 = vpop.f32.mrf.mxu0
      %v4350 = vadd.f32 0.0, %v4349
      %v4351 = vpop.f32.mrf.mxu0
      %v4352 = vpop.f32.mrf.mxu0
      %v4353 = vadd.f32 0.0, %v4352
      %v4354 = vpop.f32.mrf.mxu0
      %4355 = vmatprep.mubr.bf16.mxu0 0
      %4356 = vmatmul.mubr.bf16.gmra.mxu0 %v4145
      %v4357 = vpop.f32.mrf.mxu0
      %v4358 = vadd.f32 0.0, %v4357
      %v4359 = vpop.f32.mrf.mxu0
      %v4360 = vpop.f32.mrf.mxu0
      %v4361 = vadd.f32 0.0, %v4360
      %v4362 = vpop.f32.mrf.mxu0
      %4363 = vmatprep.mubr.bf16.mxu0 0
      %4364 = vmatmul.mubr.bf16.gmra.mxu0 %v4146
      %v4365 = vpop.f32.mrf.mxu0
      %v4366 = vadd.f32 0.0, %v4365
      %v4367 = vpop.f32.mrf.mxu0
      %v4368 = vpop.f32.mrf.mxu0
      %v4369 = vadd.f32 0.0, %v4368
      %v4370 = vpop.f32.mrf.mxu0
      %4371 = vdwg.mxu0
      %v4372 = vadd.f32 %v4018, %v4246
      %v4373 = vadd.f32 %v4019, %v4249
      %v4374 = vadd.f32 %v4020, %v4254
      %v4375 = vadd.f32 %v4021, %v4257
      %v4376 = vadd.f32 %v4022, %v4262
      %v4377 = vadd.f32 %v4023, %v4265
      %v4378 = vadd.f32 %v4024, %v4270
      %v4379 = vadd.f32 %v4025, %v4273
      %v4380 = vadd.f32 %v4026, %v4278
      %v4381 = vadd.f32 %v4027, %v4281
      %v4382 = vadd.f32 %v4028, %v4286
      %v4383 = vadd.f32 %v4029, %v4289
      %v4384 = vadd.f32 %v4030, %v4294
      %v4385 = vadd.f32 %v4031, %v4297
      %v4386 = vadd.f32 %v4032, %v4302
      %v4387 = vadd.f32 %v4033, %v4305
      %v4388 = vadd.f32 %v4034, %v4310
      %v4389 = vadd.f32 %v4035, %v4313
      %v4390 = vadd.f32 %v4036, %v4318
      %v4391 = vadd.f32 %v4037, %v4321
      %v4392 = vadd.f32 %v4038, %v4326
      %v4393 = vadd.f32 %v4039, %v4329
      %v4394 = vadd.f32 %v4040, %v4334
      %v4395 = vadd.f32 %v4041, %v4337
      %v4396 = vadd.f32 %v4042, %v4342
      %v4397 = vadd.f32 %v4043, %v4345
      %v4398 = vadd.f32 %v4044, %v4350
      %v4399 = vadd.f32 %v4045, %v4353
      %v4400 = vadd.f32 %v4046, %v4358
      %v4401 = vadd.f32 %v4047, %v4361
      %v4402 = vadd.f32 %v4048, %v4366
      %v4403 = vadd.f32 %v4049, %v4369
      %4404 = vst [vmem:[#allocation2] sm:$0xff] %v4372
      %4405 = vst [vmem:[#allocation2 + $0x8] sm:$0xff] %v4373
      %4406 = vst [vmem:[#allocation2 + $0x10] sm:$0xff] %v4374
      %4407 = vst [vmem:[#allocation2 + $0x18] sm:$0xff] %v4375
      %4408 = vst [vmem:[#allocation2 + $0x20] sm:$0xff] %v4376
      %4409 = vst [vmem:[#allocation2 + $0x28] sm:$0xff] %v4377
      %4410 = vst [vmem:[#allocation2 + $0x30] sm:$0xff] %v4378
      %4411 = vst [vmem:[#allocation2 + $0x38] sm:$0xff] %v4379
      %4412 = vst [vmem:[#allocation2 + $0x40] sm:$0xff] %v4380
      %4413 = vst [vmem:[#allocation2 + $0x48] sm:$0xff] %v4381
      %4414 = vst [vmem:[#allocation2 + $0x50] sm:$0xff] %v4382
      %4415 = vst [vmem:[#allocation2 + $0x58] sm:$0xff] %v4383
      %4416 = vst [vmem:[#allocation2 + $0x60] sm:$0xff] %v4384
      %4417 = vst [vmem:[#allocation2 + $0x68] sm:$0xff] %v4385
      %4418 = vst [vmem:[#allocation2 + $0x70] sm:$0xff] %v4386
      %4419 = vst [vmem:[#allocation2 + $0x78] sm:$0xff] %v4387
      %4420 = vst [vmem:[#allocation2 + $0x80] sm:$0xff] %v4388
      %4421 = vst [vmem:[#allocation2 + $0x88] sm:$0xff] %v4389
      %4422 = vst [vmem:[#allocation2 + $0x90] sm:$0xff] %v4390
      %4423 = vst [vmem:[#allocation2 + $0x98] sm:$0xff] %v4391
      %4424 = vst [vmem:[#allocation2 + $0xa0] sm:$0xff] %v4392
      %4425 = vst [vmem:[#allocation2 + $0xa8] sm:$0xff] %v4393
      %4426 = vst [vmem:[#allocation2 + $0xb0] sm:$0xff] %v4394
      %4427 = vst [vmem:[#allocation2 + $0xb8] sm:$0xff] %v4395
      %4428 = vst [vmem:[#allocation2 + $0xc0] sm:$0xff] %v4396
      %4429 = vst [vmem:[#allocation2 + $0xc8] sm:$0xff] %v4397
      %4430 = vst [vmem:[#allocation2 + $0xd0] sm:$0xff] %v4398
      %4431 = vst [vmem:[#allocation2 + $0xd8] sm:$0xff] %v4399
      %4432 = vst [vmem:[#allocation2 + $0xe0] sm:$0xff] %v4400
      %4433 = vst [vmem:[#allocation2 + $0xe8] sm:$0xff] %v4401
      %4434 = vst [vmem:[#allocation2 + $0xf0] sm:$0xff] %v4402
      %4435 = vst [vmem:[#allocation2 + $0xf8] sm:$0xff] %v4403
      %v4436 = vld [vmem:[%s3985] sm:$0xf]
      %v4437 = vld [vmem:[%s3985 + $0x4] sm:$0xf]
      %v4438 = vld [vmem:[%s3985 + $0x8] sm:$0x1]
      %v4439 = vld [vmem:[%s3985 + $0xc] sm:$0xf]
      %v4440 = vld [vmem:[%s3985 + $0x10] sm:$0xf]
      %v4441 = vld [vmem:[%s3985 + $0x14] sm:$0x1]
      %v4442 = vld [vmem:[%s3985 + $0x18] sm:$0xf]
      %v4443 = vld [vmem:[%s3985 + $0x1c] sm:$0xf]
      %v4444 = vld [vmem:[%s3985 + $0x20] sm:$0x1]
      %v4445 = vld [vmem:[%s3985 + $0x24] sm:$0xf]
      %v4446 = vld [vmem:[%s3985 + $0x28] sm:$0xf]
      %v4447 = vld [vmem:[%s3985 + $0x2c] sm:$0x1]
      %v4448 = vld [vmem:[%s3985 + $0x30] sm:$0xf]
      %v4449 = vld [vmem:[%s3985 + $0x34] sm:$0xf]
      %v4450 = vld [vmem:[%s3985 + $0x38] sm:$0x1]
      %v4451 = vld [vmem:[%s3985 + $0x3c] sm:$0xf]
      %v4452 = vld [vmem:[%s3985 + $0x40] sm:$0xf]
      %v4453 = vld [vmem:[%s3985 + $0x44] sm:$0x1]
      %v4454 = vld [vmem:[%s3985 + $0x48] sm:$0xf]
      %v4455 = vld [vmem:[%s3985 + $0x4c] sm:$0xf]
      %v4456 = vld [vmem:[%s3985 + $0x50] sm:$0x1]
      %v4457 = vld [vmem:[%s3985 + $0x54] sm:$0xf]
      %v4458 = vld [vmem:[%s3985 + $0x58] sm:$0xf]
      %v4459 = vld [vmem:[%s3985 + $0x5c] sm:$0x1]
      %v4460 = vld [vmem:[%s3985 + $0x60] sm:$0xf]
      %v4461 = vld [vmem:[%s3985 + $0x64] sm:$0xf]
      %v4462 = vld [vmem:[%s3985 + $0x68] sm:$0x1]
      %v4463 = vld [vmem:[%s3985 + $0x6c] sm:$0xf]
      %v4464 = vld [vmem:[%s3985 + $0x70] sm:$0xf]
      %v4465 = vld [vmem:[%s3985 + $0x74] sm:$0x1]
      %v4466 = vld [vmem:[%s3985 + $0x78] sm:$0xf]
      %v4467 = vld [vmem:[%s3985 + $0x7c] sm:$0xf]
      %v4468 = vld [vmem:[%s3985 + $0x80] sm:$0x1]
      %v4469 = vld [vmem:[%s3985 + $0x84] sm:$0xf]
      %v4470 = vld [vmem:[%s3985 + $0x88] sm:$0xf]
      %v4471 = vld [vmem:[%s3985 + $0x8c] sm:$0x1]
      %v4472 = vld [vmem:[%s3985 + $0x90] sm:$0xf]
      %v4473 = vld [vmem:[%s3985 + $0x94] sm:$0xf]
      %v4474 = vld [vmem:[%s3985 + $0x98] sm:$0x1]
      %v4475 = vld [vmem:[%s3985 + $0x9c] sm:$0xf]
      %v4476 = vld [vmem:[%s3985 + $0xa0] sm:$0xf]
      %v4477 = vld [vmem:[%s3985 + $0xa4] sm:$0x1]
      %v4478 = vld [vmem:[%s3985 + $0xa8] sm:$0xf]
      %v4479 = vld [vmem:[%s3985 + $0xac] sm:$0xf]
      %v4480 = vld [vmem:[%s3985 + $0xb0] sm:$0x1]
      %v4481 = vld [vmem:[%s3985 + $0xb4] sm:$0xf]
      %v4482 = vld [vmem:[%s3985 + $0xb8] sm:$0xf]
      %v4483 = vld [vmem:[%s3985 + $0xbc] sm:$0x1]
      %v4484 = vld [vmem:[#allocation2] sm:$0xff]
      %v4485 = vld [vmem:[#allocation2 + $0x8] sm:$0xff]
      %v4486 = vld [vmem:[#allocation2 + $0x10] sm:$0xff]
      %v4487 = vld [vmem:[#allocation2 + $0x18] sm:$0xff]
      %v4488 = vld [vmem:[#allocation2 + $0x20] sm:$0xff]
      %v4489 = vld [vmem:[#allocation2 + $0x28] sm:$0xff]
      %v4490 = vld [vmem:[#allocation2 + $0x30] sm:$0xff]
      %v4491 = vld [vmem:[#allocation2 + $0x38] sm:$0xff]
      %v4492 = vld [vmem:[#allocation2 + $0x40] sm:$0xff]
      %v4493 = vld [vmem:[#allocation2 + $0x48] sm:$0xff]
      %v4494 = vld [vmem:[#allocation2 + $0x50] sm:$0xff]
      %v4495 = vld [vmem:[#allocation2 + $0x58] sm:$0xff]
      %v4496 = vld [vmem:[#allocation2 + $0x60] sm:$0xff]
      %v4497 = vld [vmem:[#allocation2 + $0x68] sm:$0xff]
      %v4498 = vld [vmem:[#allocation2 + $0x70] sm:$0xff]
      %v4499 = vld [vmem:[#allocation2 + $0x78] sm:$0xff]
      %v4500 = vld [vmem:[#allocation2 + $0x80] sm:$0xff]
      %v4501 = vld [vmem:[#allocation2 + $0x88] sm:$0xff]
      %v4502 = vld [vmem:[#allocation2 + $0x90] sm:$0xff]
      %v4503 = vld [vmem:[#allocation2 + $0x98] sm:$0xff]
      %v4504 = vld [vmem:[#allocation2 + $0xa0] sm:$0xff]
      %v4505 = vld [vmem:[#allocation2 + $0xa8] sm:$0xff]
      %v4506 = vld [vmem:[#allocation2 + $0xb0] sm:$0xff]
      %v4507 = vld [vmem:[#allocation2 + $0xb8] sm:$0xff]
      %v4508 = vld [vmem:[#allocation2 + $0xc0] sm:$0xff]
      %v4509 = vld [vmem:[#allocation2 + $0xc8] sm:$0xff]
      %v4510 = vld [vmem:[#allocation2 + $0xd0] sm:$0xff]
      %v4511 = vld [vmem:[#allocation2 + $0xd8] sm:$0xff]
      %v4512 = vld [vmem:[#allocation2 + $0xe0] sm:$0xff]
      %v4513 = vld [vmem:[#allocation2 + $0xe8] sm:$0xff]
      %v4514 = vld [vmem:[#allocation2 + $0xf0] sm:$0xff]
      %v4515 = vld [vmem:[#allocation2 + $0xf8] sm:$0xff]
      %v4517 = vshrl.u32 %v4436, 16
      %v4519 = vrot.slane %v4517, 4
      %v4520 = vshll.u32 %v4436, 16
      %v4522 = vrot.slane %v4520, 5
      %v4523 = vor.u32 %v4519, %v4522
      %v4524 = vrot.slane %v4523, 4
      %v4526 = vshll.u32 %v4437, 16
      %v4528 = vrot.slane %v4526, 5
      %v4529 = vsel %vm786, %v4524, %v4528
      %v4530 = vshrl.u32 %v4437, 16
      %v4532 = vrot.slane %v4530, 4
      %v4533 = vor.u32 %v4532, %v4528
      %v4534 = vrot.slane %v4533, 4
      %v4536 = vshll.u32 %v4438, 16
      %v4538 = vrot.slane %v4536, 5
      %v4539 = vsel %vm786, %v4534, %v4538
      %v4541 = vshrl.u32 %v4439, 16
      %v4543 = vrot.slane %v4541, 4
      %v4544 = vshll.u32 %v4439, 16
      %v4546 = vrot.slane %v4544, 5
      %v4547 = vor.u32 %v4543, %v4546
      %v4548 = vrot.slane %v4547, 4
      %v4550 = vshll.u32 %v4440, 16
      %v4552 = vrot.slane %v4550, 5
      %v4553 = vsel %vm786, %v4548, %v4552
      %v4554 = vshrl.u32 %v4440, 16
      %v4556 = vrot.slane %v4554, 4
      %v4557 = vor.u32 %v4556, %v4552
      %v4558 = vrot.slane %v4557, 4
      %v4560 = vshll.u32 %v4441, 16
      %v4562 = vrot.slane %v4560, 5
      %v4563 = vsel %vm786, %v4558, %v4562
      %v4565 = vshrl.u32 %v4442, 16
      %v4567 = vrot.slane %v4565, 4
      %v4568 = vshll.u32 %v4442, 16
      %v4570 = vrot.slane %v4568, 5
      %v4571 = vor.u32 %v4567, %v4570
      %v4572 = vrot.slane %v4571, 4
      %v4574 = vshll.u32 %v4443, 16
      %v4576 = vrot.slane %v4574, 5
      %v4577 = vsel %vm786, %v4572, %v4576
      %v4578 = vshrl.u32 %v4443, 16
      %v4580 = vrot.slane %v4578, 4
      %v4581 = vor.u32 %v4580, %v4576
      %v4582 = vrot.slane %v4581, 4
      %v4584 = vshll.u32 %v4444, 16
      %v4586 = vrot.slane %v4584, 5
      %v4587 = vsel %vm786, %v4582, %v4586
      %v4589 = vshrl.u32 %v4445, 16
      %v4591 = vrot.slane %v4589, 4
      %v4592 = vshll.u32 %v4445, 16
      %v4594 = vrot.slane %v4592, 5
      %v4595 = vor.u32 %v4591, %v4594
      %v4596 = vrot.slane %v4595, 4
      %v4598 = vshll.u32 %v4446, 16
      %v4600 = vrot.slane %v4598, 5
      %v4601 = vsel %vm786, %v4596, %v4600
      %v4602 = vshrl.u32 %v4446, 16
      %v4604 = vrot.slane %v4602, 4
      %v4605 = vor.u32 %v4604, %v4600
      %v4606 = vrot.slane %v4605, 4
      %v4608 = vshll.u32 %v4447, 16
      %v4610 = vrot.slane %v4608, 5
      %v4611 = vsel %vm786, %v4606, %v4610
      %v4613 = vshrl.u32 %v4448, 16
      %v4615 = vrot.slane %v4613, 4
      %v4616 = vshll.u32 %v4448, 16
      %v4618 = vrot.slane %v4616, 5
      %v4619 = vor.u32 %v4615, %v4618
      %v4620 = vrot.slane %v4619, 4
      %v4622 = vshll.u32 %v4449, 16
      %v4624 = vrot.slane %v4622, 5
      %v4625 = vsel %vm786, %v4620, %v4624
      %v4626 = vshrl.u32 %v4449, 16
      %v4628 = vrot.slane %v4626, 4
      %v4629 = vor.u32 %v4628, %v4624
      %v4630 = vrot.slane %v4629, 4
      %v4632 = vshll.u32 %v4450, 16
      %v4634 = vrot.slane %v4632, 5
      %v4635 = vsel %vm786, %v4630, %v4634
      %v4637 = vshrl.u32 %v4451, 16
      %v4639 = vrot.slane %v4637, 4
      %v4640 = vshll.u32 %v4451, 16
      %v4642 = vrot.slane %v4640, 5
      %v4643 = vor.u32 %v4639, %v4642
      %v4644 = vrot.slane %v4643, 4
      %v4646 = vshll.u32 %v4452, 16
      %v4648 = vrot.slane %v4646, 5
      %v4649 = vsel %vm786, %v4644, %v4648
      %v4650 = vshrl.u32 %v4452, 16
      %v4652 = vrot.slane %v4650, 4
      %v4653 = vor.u32 %v4652, %v4648
      %v4654 = vrot.slane %v4653, 4
      %v4656 = vshll.u32 %v4453, 16
      %v4658 = vrot.slane %v4656, 5
      %v4659 = vsel %vm786, %v4654, %v4658
      %v4661 = vshrl.u32 %v4454, 16
      %v4663 = vrot.slane %v4661, 4
      %v4664 = vshll.u32 %v4454, 16
      %v4666 = vrot.slane %v4664, 5
      %v4667 = vor.u32 %v4663, %v4666
      %v4668 = vrot.slane %v4667, 4
      %v4670 = vshll.u32 %v4455, 16
      %v4672 = vrot.slane %v4670, 5
      %v4673 = vsel %vm786, %v4668, %v4672
      %v4674 = vshrl.u32 %v4455, 16
      %v4676 = vrot.slane %v4674, 4
      %v4677 = vor.u32 %v4676, %v4672
      %v4678 = vrot.slane %v4677, 4
      %v4680 = vshll.u32 %v4456, 16
      %v4682 = vrot.slane %v4680, 5
      %v4683 = vsel %vm786, %v4678, %v4682
      %v4685 = vshrl.u32 %v4457, 16
      %v4687 = vrot.slane %v4685, 4
      %v4688 = vshll.u32 %v4457, 16
      %v4690 = vrot.slane %v4688, 5
      %v4691 = vor.u32 %v4687, %v4690
      %v4692 = vrot.slane %v4691, 4
      %v4694 = vshll.u32 %v4458, 16
      %v4696 = vrot.slane %v4694, 5
      %v4697 = vsel %vm786, %v4692, %v4696
      %v4698 = vshrl.u32 %v4458, 16
      %v4700 = vrot.slane %v4698, 4
      %v4701 = vor.u32 %v4700, %v4696
      %v4702 = vrot.slane %v4701, 4
      %v4704 = vshll.u32 %v4459, 16
      %v4706 = vrot.slane %v4704, 5
      %v4707 = vsel %vm786, %v4702, %v4706
      %v4709 = vshrl.u32 %v4460, 16
      %v4711 = vrot.slane %v4709, 4
      %v4712 = vshll.u32 %v4460, 16
      %v4714 = vrot.slane %v4712, 5
      %v4715 = vor.u32 %v4711, %v4714
      %v4716 = vrot.slane %v4715, 4
      %v4718 = vshll.u32 %v4461, 16
      %v4720 = vrot.slane %v4718, 5
      %v4721 = vsel %vm786, %v4716, %v4720
      %v4722 = vshrl.u32 %v4461, 16
      %v4724 = vrot.slane %v4722, 4
      %v4725 = vor.u32 %v4724, %v4720
      %v4726 = vrot.slane %v4725, 4
      %v4728 = vshll.u32 %v4462, 16
      %v4730 = vrot.slane %v4728, 5
      %v4731 = vsel %vm786, %v4726, %v4730
      %v4733 = vshrl.u32 %v4463, 16
      %v4735 = vrot.slane %v4733, 4
      %v4736 = vshll.u32 %v4463, 16
      %v4738 = vrot.slane %v4736, 5
      %v4739 = vor.u32 %v4735, %v4738
      %v4740 = vrot.slane %v4739, 4
      %v4742 = vshll.u32 %v4464, 16
      %v4744 = vrot.slane %v4742, 5
      %v4745 = vsel %vm786, %v4740, %v4744
      %v4746 = vshrl.u32 %v4464, 16
      %v4748 = vrot.slane %v4746, 4
      %v4749 = vor.u32 %v4748, %v4744
      %v4750 = vrot.slane %v4749, 4
      %v4752 = vshll.u32 %v4465, 16
      %v4754 = vrot.slane %v4752, 5
      %v4755 = vsel %vm786, %v4750, %v4754
      %v4757 = vshrl.u32 %v4466, 16
      %v4759 = vrot.slane %v4757, 4
      %v4760 = vshll.u32 %v4466, 16
      %v4762 = vrot.slane %v4760, 5
      %v4763 = vor.u32 %v4759, %v4762
      %v4764 = vrot.slane %v4763, 4
      %v4766 = vshll.u32 %v4467, 16
      %v4768 = vrot.slane %v4766, 5
      %v4769 = vsel %vm786, %v4764, %v4768
      %v4770 = vshrl.u32 %v4467, 16
      %v4772 = vrot.slane %v4770, 4
      %v4773 = vor.u32 %v4772, %v4768
      %v4774 = vrot.slane %v4773, 4
      %v4776 = vshll.u32 %v4468, 16
      %v4778 = vrot.slane %v4776, 5
      %v4779 = vsel %vm786, %v4774, %v4778
      %v4781 = vshrl.u32 %v4469, 16
      %v4783 = vrot.slane %v4781, 4
      %v4784 = vshll.u32 %v4469, 16
      %v4786 = vrot.slane %v4784, 5
      %v4787 = vor.u32 %v4783, %v4786
      %v4788 = vrot.slane %v4787, 4
      %v4790 = vshll.u32 %v4470, 16
      %v4792 = vrot.slane %v4790, 5
      %v4793 = vsel %vm786, %v4788, %v4792
      %v4794 = vshrl.u32 %v4470, 16
      %v4796 = vrot.slane %v4794, 4
      %v4797 = vor.u32 %v4796, %v4792
      %v4798 = vrot.slane %v4797, 4
      %v4800 = vshll.u32 %v4471, 16
      %v4802 = vrot.slane %v4800, 5
      %v4803 = vsel %vm786, %v4798, %v4802
      %v4805 = vshrl.u32 %v4472, 16
      %v4807 = vrot.slane %v4805, 4
      %v4808 = vshll.u32 %v4472, 16
      %v4810 = vrot.slane %v4808, 5
      %v4811 = vor.u32 %v4807, %v4810
      %v4812 = vrot.slane %v4811, 4
      %v4814 = vshll.u32 %v4473, 16
      %v4816 = vrot.slane %v4814, 5
      %v4817 = vsel %vm786, %v4812, %v4816
      %v4818 = vshrl.u32 %v4473, 16
      %v4820 = vrot.slane %v4818, 4
      %v4821 = vor.u32 %v4820, %v4816
      %v4822 = vrot.slane %v4821, 4
      %v4824 = vshll.u32 %v4474, 16
      %v4826 = vrot.slane %v4824, 5
      %v4827 = vsel %vm786, %v4822, %v4826
      %v4829 = vshrl.u32 %v4475, 16
      %v4831 = vrot.slane %v4829, 4
      %v4832 = vshll.u32 %v4475, 16
      %v4834 = vrot.slane %v4832, 5
      %v4835 = vor.u32 %v4831, %v4834
      %v4836 = vrot.slane %v4835, 4
      %v4838 = vshll.u32 %v4476, 16
      %v4840 = vrot.slane %v4838, 5
      %v4841 = vsel %vm786, %v4836, %v4840
      %v4842 = vshrl.u32 %v4476, 16
      %v4844 = vrot.slane %v4842, 4
      %v4845 = vor.u32 %v4844, %v4840
      %v4846 = vrot.slane %v4845, 4
      %v4848 = vshll.u32 %v4477, 16
      %v4850 = vrot.slane %v4848, 5
      %v4851 = vsel %vm786, %v4846, %v4850
      %v4853 = vshrl.u32 %v4478, 16
      %v4855 = vrot.slane %v4853, 4
      %v4856 = vshll.u32 %v4478, 16
      %v4858 = vrot.slane %v4856, 5
      %v4859 = vor.u32 %v4855, %v4858
      %v4860 = vrot.slane %v4859, 4
      %v4862 = vshll.u32 %v4479, 16
      %v4864 = vrot.slane %v4862, 5
      %v4865 = vsel %vm786, %v4860, %v4864
      %v4866 = vshrl.u32 %v4479, 16
      %v4868 = vrot.slane %v4866, 4
      %v4869 = vor.u32 %v4868, %v4864
      %v4870 = vrot.slane %v4869, 4
      %v4872 = vshll.u32 %v4480, 16
      %v4874 = vrot.slane %v4872, 5
      %v4875 = vsel %vm786, %v4870, %v4874
      %v4877 = vshrl.u32 %v4481, 16
      %v4879 = vrot.slane %v4877, 4
      %v4880 = vshll.u32 %v4481, 16
      %v4882 = vrot.slane %v4880, 5
      %v4883 = vor.u32 %v4879, %v4882
      %v4884 = vrot.slane %v4883, 4
      %v4886 = vshll.u32 %v4482, 16
      %v4888 = vrot.slane %v4886, 5
      %v4889 = vsel %vm786, %v4884, %v4888
      %v4890 = vshrl.u32 %v4482, 16
      %v4892 = vrot.slane %v4890, 4
      %v4893 = vor.u32 %v4892, %v4888
      %v4894 = vrot.slane %v4893, 4
      %v4896 = vshll.u32 %v4483, 16
      %v4898 = vrot.slane %v4896, 5
      %v4899 = vsel %vm786, %v4894, %v4898
      %s4900 = scalar_lea.vmem %s210, 448
      %v4901 = vld [vmem:[%s4900] sm:$0xf]
      %v4902 = vld [vmem:[%s4900 + $0x4] sm:$0xf]
      %v4903 = vld [vmem:[%s4900 + $0x8] sm:$0xf]
      %v4904 = vld [vmem:[%s4900 + $0xc] sm:$0xf]
      %v4905 = vld [vmem:[%s4900 + $0x10] sm:$0xf]
      %v4906 = vld [vmem:[%s4900 + $0x14] sm:$0xf]
      %v4907 = vld [vmem:[%s4900 + $0x18] sm:$0xf]
      %v4908 = vld [vmem:[%s4900 + $0x1c] sm:$0xf]
      %v4909 = vld [vmem:[%s4900 + $0x20] sm:$0xf]
      %v4910 = vld [vmem:[%s4900 + $0x24] sm:$0xf]
      %v4911 = vld [vmem:[%s4900 + $0x28] sm:$0xf]
      %v4912 = vld [vmem:[%s4900 + $0x2c] sm:$0xf]
      %v4913 = vld [vmem:[%s4900 + $0x30] sm:$0xf]
      %v4914 = vld [vmem:[%s4900 + $0x34] sm:$0xf]
      %v4915 = vld [vmem:[%s4900 + $0x38] sm:$0xf]
      %v4916 = vld [vmem:[%s4900 + $0x3c] sm:$0xf]
      %v4917 = vunpack.c.l.b16 %v4529
      %v4918 = vunpack.c.l.b16 %v4539
      %v4919 = vunpack.c.l.b16 %v4553
      %v4920 = vunpack.c.l.b16 %v4563
      %v4921 = vunpack.c.l.b16 %v4577
      %v4922 = vunpack.c.l.b16 %v4587
      %v4923 = vunpack.c.l.b16 %v4601
      %v4924 = vunpack.c.l.b16 %v4611
      %v4925 = vunpack.c.l.b16 %v4625
      %v4926 = vunpack.c.l.b16 %v4635
      %v4927 = vunpack.c.l.b16 %v4649
      %v4928 = vunpack.c.l.b16 %v4659
      %v4929 = vunpack.c.l.b16 %v4673
      %v4930 = vunpack.c.l.b16 %v4683
      %v4931 = vunpack.c.l.b16 %v4697
      %v4932 = vunpack.c.l.b16 %v4707
      %v4933 = vunpack.c.l.b16 %v4721
      %v4934 = vunpack.c.l.b16 %v4731
      %v4935 = vunpack.c.l.b16 %v4745
      %v4936 = vunpack.c.l.b16 %v4755
      %v4937 = vunpack.c.l.b16 %v4769
      %v4938 = vunpack.c.l.b16 %v4779
      %v4939 = vunpack.c.l.b16 %v4793
      %v4940 = vunpack.c.l.b16 %v4803
      %v4941 = vunpack.c.l.b16 %v4817
      %v4942 = vunpack.c.l.b16 %v4827
      %v4943 = vunpack.c.l.b16 %v4841
      %v4944 = vunpack.c.l.b16 %v4851
      %v4945 = vunpack.c.l.b16 %v4865
      %v4946 = vunpack.c.l.b16 %v4875
      %v4947 = vunpack.c.l.b16 %v4889
      %v4948 = vunpack.c.l.b16 %v4899
      %v4949 = vpack.c.b16 %v4918, %v4917
      %v4950 = vpack.c.b16 %v4920, %v4919
      %v4951 = vpack.c.b16 %v4922, %v4921
      %v4952 = vpack.c.b16 %v4924, %v4923
      %v4953 = vpack.c.b16 %v4926, %v4925
      %v4954 = vpack.c.b16 %v4928, %v4927
      %v4955 = vpack.c.b16 %v4930, %v4929
      %v4956 = vpack.c.b16 %v4932, %v4931
      %v4957 = vpack.c.b16 %v4934, %v4933
      %v4958 = vpack.c.b16 %v4936, %v4935
      %v4959 = vpack.c.b16 %v4938, %v4937
      %v4960 = vpack.c.b16 %v4940, %v4939
      %v4961 = vpack.c.b16 %v4942, %v4941
      %v4962 = vpack.c.b16 %v4944, %v4943
      %v4963 = vpack.c.b16 %v4946, %v4945
      %v4964 = vpack.c.b16 %v4948, %v4947
      %v4997 = vunpack.c.l.b16 %v4901
      %v4998 = vunpack.c.l.b16 %v4902
      %v4999 = vunpack.c.l.b16 %v4903
      %v5000 = vunpack.c.l.b16 %v4904
      %v5001 = vunpack.c.l.b16 %v4905
      %v5002 = vunpack.c.l.b16 %v4906
      %v5003 = vunpack.c.l.b16 %v4907
      %v5004 = vunpack.c.l.b16 %v4908
      %v5005 = vunpack.c.l.b16 %v4909
      %v5006 = vunpack.c.l.b16 %v4910
      %v5007 = vunpack.c.l.b16 %v4911
      %v5008 = vunpack.c.l.b16 %v4912
      %v5009 = vunpack.c.l.b16 %v4913
      %v5010 = vunpack.c.l.b16 %v4914
      %v5011 = vunpack.c.l.b16 %v4915
      %v5012 = vunpack.c.l.b16 %v4916
      %v5013 = vpack.c.b16 %v4998, %v4997
      %v5014 = vpack.c.b16 %v5000, %v4999
      %v5015 = vpack.c.b16 %v5002, %v5001
      %v5016 = vpack.c.b16 %v5004, %v5003
      %v5017 = vpack.c.b16 %v5006, %v5005
      %v5018 = vpack.c.b16 %v5008, %v5007
      %v5019 = vpack.c.b16 %v5010, %v5009
      %v5020 = vpack.c.b16 %v5012, %v5011
      %5029 = vmatprep.subr.bf16.mxu0 0
      %5030 = vmatpush1.bf16.msra.mxu0 %v5020
      %5031 = vmatprep.subr.bf16.mxu0 0
      %5032 = vmatpush1.bf16.msra.mxu0 %v5019
      %5033 = vmatprep.subr.bf16.mxu0 0
      %5034 = vmatpush1.bf16.msra.mxu0 %v5018
      %5035 = vmatprep.subr.bf16.mxu0 0
      %5036 = vmatpush1.bf16.msra.mxu0 %v5017
      %5037 = vmatprep.subr.bf16.mxu0 0
      %5038 = vmatpush1.bf16.msra.mxu0 %v5016
      %5039 = vmatprep.subr.bf16.mxu0 0
      %5040 = vmatpush1.bf16.msra.mxu0 %v5015
      %5041 = vmatprep.subr.bf16.mxu0 0
      %5042 = vmatpush1.bf16.msra.mxu0 %v5014
      %5043 = vmatprep.subr.bf16.mxu0 0
      %5044 = vmatpush1.bf16.msra.mxu0 %v5013
      %5045 = vmatprep.subr.bf16.mxu0 0
      %5046 = vmatpush2.bf16.msra.mxu0 0
      %5047 = vmatprep.subr.bf16.mxu0 0
      %5048 = vmatpush2.bf16.msra.mxu0 0
      %5049 = vmatprep.subr.bf16.mxu0 0
      %5050 = vmatpush2.bf16.msra.mxu0 0
      %5051 = vmatprep.subr.bf16.mxu0 0
      %5052 = vmatpush2.bf16.msra.mxu0 0
      %5053 = vmatprep.subr.bf16.mxu0 0
      %5054 = vmatpush2.bf16.msra.mxu0 0
      %5055 = vmatprep.subr.bf16.mxu0 0
      %5056 = vmatpush2.bf16.msra.mxu0 0
      %5057 = vmatprep.subr.bf16.mxu0 0
      %5058 = vmatpush2.bf16.msra.mxu0 0
      %5059 = vmatprep.subr.bf16.mxu0 0
      %5060 = vmatpush2.bf16.msra.mxu0 0
      %5061 = vmatprep.mubr.bf16.mxu0 0
      %5062 = vmatmul.mubr.bf16.gmra.mxu0 %v4949
      %v5063 = vpop.f32.mrf.mxu0
      %v5064 = vadd.f32 0.0, %v5063
      %v5065 = vpop.f32.mrf.mxu0
      %v5066 = vpop.f32.mrf.mxu0
      %v5067 = vadd.f32 0.0, %v5066
      %v5068 = vpop.f32.mrf.mxu0
      %5069 = vmatprep.mubr.bf16.mxu0 0
      %5070 = vmatmul.mubr.bf16.gmra.mxu0 %v4950
      %v5071 = vpop.f32.mrf.mxu0
      %v5072 = vadd.f32 0.0, %v5071
      %v5073 = vpop.f32.mrf.mxu0
      %v5074 = vpop.f32.mrf.mxu0
      %v5075 = vadd.f32 0.0, %v5074
      %v5076 = vpop.f32.mrf.mxu0
      %5077 = vmatprep.mubr.bf16.mxu0 0
      %5078 = vmatmul.mubr.bf16.gmra.mxu0 %v4951
      %v5079 = vpop.f32.mrf.mxu0
      %v5080 = vadd.f32 0.0, %v5079
      %v5081 = vpop.f32.mrf.mxu0
      %v5082 = vpop.f32.mrf.mxu0
      %v5083 = vadd.f32 0.0, %v5082
      %v5084 = vpop.f32.mrf.mxu0
      %5085 = vmatprep.mubr.bf16.mxu0 0
      %5086 = vmatmul.mubr.bf16.gmra.mxu0 %v4952
      %v5087 = vpop.f32.mrf.mxu0
      %v5088 = vadd.f32 0.0, %v5087
      %v5089 = vpop.f32.mrf.mxu0
      %v5090 = vpop.f32.mrf.mxu0
      %v5091 = vadd.f32 0.0, %v5090
      %v5092 = vpop.f32.mrf.mxu0
      %5093 = vmatprep.mubr.bf16.mxu0 0
      %5094 = vmatmul.mubr.bf16.gmra.mxu0 %v4953
      %v5095 = vpop.f32.mrf.mxu0
      %v5096 = vadd.f32 0.0, %v5095
      %v5097 = vpop.f32.mrf.mxu0
      %v5098 = vpop.f32.mrf.mxu0
      %v5099 = vadd.f32 0.0, %v5098
      %v5100 = vpop.f32.mrf.mxu0
      %5101 = vmatprep.mubr.bf16.mxu0 0
      %5102 = vmatmul.mubr.bf16.gmra.mxu0 %v4954
      %v5103 = vpop.f32.mrf.mxu0
      %v5104 = vadd.f32 0.0, %v5103
      %v5105 = vpop.f32.mrf.mxu0
      %v5106 = vpop.f32.mrf.mxu0
      %v5107 = vadd.f32 0.0, %v5106
      %v5108 = vpop.f32.mrf.mxu0
      %5109 = vmatprep.mubr.bf16.mxu0 0
      %5110 = vmatmul.mubr.bf16.gmra.mxu0 %v4955
      %v5111 = vpop.f32.mrf.mxu0
      %v5112 = vadd.f32 0.0, %v5111
      %v5113 = vpop.f32.mrf.mxu0
      %v5114 = vpop.f32.mrf.mxu0
      %v5115 = vadd.f32 0.0, %v5114
      %v5116 = vpop.f32.mrf.mxu0
      %5117 = vmatprep.mubr.bf16.mxu0 0
      %5118 = vmatmul.mubr.bf16.gmra.mxu0 %v4956
      %v5119 = vpop.f32.mrf.mxu0
      %v5120 = vadd.f32 0.0, %v5119
      %v5121 = vpop.f32.mrf.mxu0
      %v5122 = vpop.f32.mrf.mxu0
      %v5123 = vadd.f32 0.0, %v5122
      %v5124 = vpop.f32.mrf.mxu0
      %5125 = vmatprep.mubr.bf16.mxu0 0
      %5126 = vmatmul.mubr.bf16.gmra.mxu0 %v4957
      %v5127 = vpop.f32.mrf.mxu0
      %v5128 = vadd.f32 0.0, %v5127
      %v5129 = vpop.f32.mrf.mxu0
      %v5130 = vpop.f32.mrf.mxu0
      %v5131 = vadd.f32 0.0, %v5130
      %v5132 = vpop.f32.mrf.mxu0
      %5133 = vmatprep.mubr.bf16.mxu0 0
      %5134 = vmatmul.mubr.bf16.gmra.mxu0 %v4958
      %v5135 = vpop.f32.mrf.mxu0
      %v5136 = vadd.f32 0.0, %v5135
      %v5137 = vpop.f32.mrf.mxu0
      %v5138 = vpop.f32.mrf.mxu0
      %v5139 = vadd.f32 0.0, %v5138
      %v5140 = vpop.f32.mrf.mxu0
      %5141 = vmatprep.mubr.bf16.mxu0 0
      %5142 = vmatmul.mubr.bf16.gmra.mxu0 %v4959
      %v5143 = vpop.f32.mrf.mxu0
      %v5144 = vadd.f32 0.0, %v5143
      %v5145 = vpop.f32.mrf.mxu0
      %v5146 = vpop.f32.mrf.mxu0
      %v5147 = vadd.f32 0.0, %v5146
      %v5148 = vpop.f32.mrf.mxu0
      %5149 = vmatprep.mubr.bf16.mxu0 0
      %5150 = vmatmul.mubr.bf16.gmra.mxu0 %v4960
      %v5151 = vpop.f32.mrf.mxu0
      %v5152 = vadd.f32 0.0, %v5151
      %v5153 = vpop.f32.mrf.mxu0
      %v5154 = vpop.f32.mrf.mxu0
      %v5155 = vadd.f32 0.0, %v5154
      %v5156 = vpop.f32.mrf.mxu0
      %5157 = vmatprep.mubr.bf16.mxu0 0
      %5158 = vmatmul.mubr.bf16.gmra.mxu0 %v4961
      %v5159 = vpop.f32.mrf.mxu0
      %v5160 = vadd.f32 0.0, %v5159
      %v5161 = vpop.f32.mrf.mxu0
      %v5162 = vpop.f32.mrf.mxu0
      %v5163 = vadd.f32 0.0, %v5162
      %v5164 = vpop.f32.mrf.mxu0
      %5165 = vmatprep.mubr.bf16.mxu0 0
      %5166 = vmatmul.mubr.bf16.gmra.mxu0 %v4962
      %v5167 = vpop.f32.mrf.mxu0
      %v5168 = vadd.f32 0.0, %v5167
      %v5169 = vpop.f32.mrf.mxu0
      %v5170 = vpop.f32.mrf.mxu0
      %v5171 = vadd.f32 0.0, %v5170
      %v5172 = vpop.f32.mrf.mxu0
      %5173 = vmatprep.mubr.bf16.mxu0 0
      %5174 = vmatmul.mubr.bf16.gmra.mxu0 %v4963
      %v5175 = vpop.f32.mrf.mxu0
      %v5176 = vadd.f32 0.0, %v5175
      %v5177 = vpop.f32.mrf.mxu0
      %v5178 = vpop.f32.mrf.mxu0
      %v5179 = vadd.f32 0.0, %v5178
      %v5180 = vpop.f32.mrf.mxu0
      %5181 = vmatprep.mubr.bf16.mxu0 0
      %5182 = vmatmul.mubr.bf16.gmra.mxu0 %v4964
      %v5183 = vpop.f32.mrf.mxu0
      %v5184 = vadd.f32 0.0, %v5183
      %v5185 = vpop.f32.mrf.mxu0
      %v5186 = vpop.f32.mrf.mxu0
      %v5187 = vadd.f32 0.0, %v5186
      %v5188 = vpop.f32.mrf.mxu0
      %5189 = vdwg.mxu0
      %v5190 = vadd.f32 %v4484, %v5064
      %v5191 = vadd.f32 %v4485, %v5067
      %v5192 = vadd.f32 %v4486, %v5072
      %v5193 = vadd.f32 %v4487, %v5075
      %v5194 = vadd.f32 %v4488, %v5080
      %v5195 = vadd.f32 %v4489, %v5083
      %v5196 = vadd.f32 %v4490, %v5088
      %v5197 = vadd.f32 %v4491, %v5091
      %v5198 = vadd.f32 %v4492, %v5096
      %v5199 = vadd.f32 %v4493, %v5099
      %v5200 = vadd.f32 %v4494, %v5104
      %v5201 = vadd.f32 %v4495, %v5107
      %v5202 = vadd.f32 %v4496, %v5112
      %v5203 = vadd.f32 %v4497, %v5115
      %v5204 = vadd.f32 %v4498, %v5120
      %v5205 = vadd.f32 %v4499, %v5123
      %v5206 = vadd.f32 %v4500, %v5128
      %v5207 = vadd.f32 %v4501, %v5131
      %v5208 = vadd.f32 %v4502, %v5136
      %v5209 = vadd.f32 %v4503, %v5139
      %v5210 = vadd.f32 %v4504, %v5144
      %v5211 = vadd.f32 %v4505, %v5147
      %v5212 = vadd.f32 %v4506, %v5152
      %v5213 = vadd.f32 %v4507, %v5155
      %v5214 = vadd.f32 %v4508, %v5160
      %v5215 = vadd.f32 %v4509, %v5163
      %v5216 = vadd.f32 %v4510, %v5168
      %v5217 = vadd.f32 %v4511, %v5171
      %v5218 = vadd.f32 %v4512, %v5176
      %v5219 = vadd.f32 %v4513, %v5179
      %v5220 = vadd.f32 %v4514, %v5184
      %v5221 = vadd.f32 %v4515, %v5187
      %5222 = vst [vmem:[#allocation2] sm:$0xff] %v5190
      %5223 = vst [vmem:[#allocation2 + $0x8] sm:$0xff] %v5191
      %5224 = vst [vmem:[#allocation2 + $0x10] sm:$0xff] %v5192
      %5225 = vst [vmem:[#allocation2 + $0x18] sm:$0xff] %v5193
      %5226 = vst [vmem:[#allocation2 + $0x20] sm:$0xff] %v5194
      %5227 = vst [vmem:[#allocation2 + $0x28] sm:$0xff] %v5195
      %5228 = vst [vmem:[#allocation2 + $0x30] sm:$0xff] %v5196
      %5229 = vst [vmem:[#allocation2 + $0x38] sm:$0xff] %v5197
      %5230 = vst [vmem:[#allocation2 + $0x40] sm:$0xff] %v5198
      %5231 = vst [vmem:[#allocation2 + $0x48] sm:$0xff] %v5199
      %5232 = vst [vmem:[#allocation2 + $0x50] sm:$0xff] %v5200
      %5233 = vst [vmem:[#allocation2 + $0x58] sm:$0xff] %v5201
      %5234 = vst [vmem:[#allocation2 + $0x60] sm:$0xff] %v5202
      %5235 = vst [vmem:[#allocation2 + $0x68] sm:$0xff] %v5203
      %5236 = vst [vmem:[#allocation2 + $0x70] sm:$0xff] %v5204
      %5237 = vst [vmem:[#allocation2 + $0x78] sm:$0xff] %v5205
      %5238 = vst [vmem:[#allocation2 + $0x80] sm:$0xff] %v5206
      %5239 = vst [vmem:[#allocation2 + $0x88] sm:$0xff] %v5207
      %5240 = vst [vmem:[#allocation2 + $0x90] sm:$0xff] %v5208
      %5241 = vst [vmem:[#allocation2 + $0x98] sm:$0xff] %v5209
      %5242 = vst [vmem:[#allocation2 + $0xa0] sm:$0xff] %v5210
      %5243 = vst [vmem:[#allocation2 + $0xa8] sm:$0xff] %v5211
      %5244 = vst [vmem:[#allocation2 + $0xb0] sm:$0xff] %v5212
      %5245 = vst [vmem:[#allocation2 + $0xb8] sm:$0xff] %v5213
      %5246 = vst [vmem:[#allocation2 + $0xc0] sm:$0xff] %v5214
      %5247 = vst [vmem:[#allocation2 + $0xc8] sm:$0xff] %v5215
      %5248 = vst [vmem:[#allocation2 + $0xd0] sm:$0xff] %v5216
      %5249 = vst [vmem:[#allocation2 + $0xd8] sm:$0xff] %v5217
      %5250 = vst [vmem:[#allocation2 + $0xe0] sm:$0xff] %v5218
      %5251 = vst [vmem:[#allocation2 + $0xe8] sm:$0xff] %v5219
      %5252 = vst [vmem:[#allocation2 + $0xf0] sm:$0xff] %v5220
      %5253 = vst [vmem:[#allocation2 + $0xf8] sm:$0xff] %v5221
      %v5254 = vld [vmem:[%s3985] sm:$0xe]
      %v5255 = vld [vmem:[%s3985 + $0x4] sm:$0xf]
      %v5256 = vld [vmem:[%s3985 + $0x8] sm:$0x1]
      %v5257 = vld [vmem:[%s3985 + $0xc] sm:$0xe]
      %v5258 = vld [vmem:[%s3985 + $0x10] sm:$0xf]
      %v5259 = vld [vmem:[%s3985 + $0x14] sm:$0x1]
      %v5260 = vld [vmem:[%s3985 + $0x18] sm:$0xe]
      %v5261 = vld [vmem:[%s3985 + $0x1c] sm:$0xf]
      %v5262 = vld [vmem:[%s3985 + $0x20] sm:$0x1]
      %v5263 = vld [vmem:[%s3985 + $0x24] sm:$0xe]
      %v5264 = vld [vmem:[%s3985 + $0x28] sm:$0xf]
      %v5265 = vld [vmem:[%s3985 + $0x2c] sm:$0x1]
      %v5266 = vld [vmem:[%s3985 + $0x30] sm:$0xe]
      %v5267 = vld [vmem:[%s3985 + $0x34] sm:$0xf]
      %v5268 = vld [vmem:[%s3985 + $0x38] sm:$0x1]
      %v5269 = vld [vmem:[%s3985 + $0x3c] sm:$0xe]
      %v5270 = vld [vmem:[%s3985 + $0x40] sm:$0xf]
      %v5271 = vld [vmem:[%s3985 + $0x44] sm:$0x1]
      %v5272 = vld [vmem:[%s3985 + $0x48] sm:$0xe]
      %v5273 = vld [vmem:[%s3985 + $0x4c] sm:$0xf]
      %v5274 = vld [vmem:[%s3985 + $0x50] sm:$0x1]
      %v5275 = vld [vmem:[%s3985 + $0x54] sm:$0xe]
      %v5276 = vld [vmem:[%s3985 + $0x58] sm:$0xf]
      %v5277 = vld [vmem:[%s3985 + $0x5c] sm:$0x1]
      %v5278 = vld [vmem:[%s3985 + $0x60] sm:$0xe]
      %v5279 = vld [vmem:[%s3985 + $0x64] sm:$0xf]
      %v5280 = vld [vmem:[%s3985 + $0x68] sm:$0x1]
      %v5281 = vld [vmem:[%s3985 + $0x6c] sm:$0xe]
      %v5282 = vld [vmem:[%s3985 + $0x70] sm:$0xf]
      %v5283 = vld [vmem:[%s3985 + $0x74] sm:$0x1]
      %v5284 = vld [vmem:[%s3985 + $0x78] sm:$0xe]
      %v5285 = vld [vmem:[%s3985 + $0x7c] sm:$0xf]
      %v5286 = vld [vmem:[%s3985 + $0x80] sm:$0x1]
      %v5287 = vld [vmem:[%s3985 + $0x84] sm:$0xe]
      %v5288 = vld [vmem:[%s3985 + $0x88] sm:$0xf]
      %v5289 = vld [vmem:[%s3985 + $0x8c] sm:$0x1]
      %v5290 = vld [vmem:[%s3985 + $0x90] sm:$0xe]
      %v5291 = vld [vmem:[%s3985 + $0x94] sm:$0xf]
      %v5292 = vld [vmem:[%s3985 + $0x98] sm:$0x1]
      %v5293 = vld [vmem:[%s3985 + $0x9c] sm:$0xe]
      %v5294 = vld [vmem:[%s3985 + $0xa0] sm:$0xf]
      %v5295 = vld [vmem:[%s3985 + $0xa4] sm:$0x1]
      %v5296 = vld [vmem:[%s3985 + $0xa8] sm:$0xe]
      %v5297 = vld [vmem:[%s3985 + $0xac] sm:$0xf]
      %v5298 = vld [vmem:[%s3985 + $0xb0] sm:$0x1]
      %v5299 = vld [vmem:[%s3985 + $0xb4] sm:$0xe]
      %v5300 = vld [vmem:[%s3985 + $0xb8] sm:$0xf]
      %v5301 = vld [vmem:[%s3985 + $0xbc] sm:$0x1]
      %v5302 = vld [vmem:[#allocation2] sm:$0xff]
      %v5303 = vld [vmem:[#allocation2 + $0x8] sm:$0xff]
      %v5304 = vld [vmem:[#allocation2 + $0x10] sm:$0xff]
      %v5305 = vld [vmem:[#allocation2 + $0x18] sm:$0xff]
      %v5306 = vld [vmem:[#allocation2 + $0x20] sm:$0xff]
      %v5307 = vld [vmem:[#allocation2 + $0x28] sm:$0xff]
      %v5308 = vld [vmem:[#allocation2 + $0x30] sm:$0xff]
      %v5309 = vld [vmem:[#allocation2 + $0x38] sm:$0xff]
      %v5310 = vld [vmem:[#allocation2 + $0x40] sm:$0xff]
      %v5311 = vld [vmem:[#allocation2 + $0x48] sm:$0xff]
      %v5312 = vld [vmem:[#allocation2 + $0x50] sm:$0xff]
      %v5313 = vld [vmem:[#allocation2 + $0x58] sm:$0xff]
      %v5314 = vld [vmem:[#allocation2 + $0x60] sm:$0xff]
      %v5315 = vld [vmem:[#allocation2 + $0x68] sm:$0xff]
      %v5316 = vld [vmem:[#allocation2 + $0x70] sm:$0xff]
      %v5317 = vld [vmem:[#allocation2 + $0x78] sm:$0xff]
      %v5318 = vld [vmem:[#allocation2 + $0x80] sm:$0xff]
      %v5319 = vld [vmem:[#allocation2 + $0x88] sm:$0xff]
      %v5320 = vld [vmem:[#allocation2 + $0x90] sm:$0xff]
      %v5321 = vld [vmem:[#allocation2 + $0x98] sm:$0xff]
      %v5322 = vld [vmem:[#allocation2 + $0xa0] sm:$0xff]
      %v5323 = vld [vmem:[#allocation2 + $0xa8] sm:$0xff]
      %v5324 = vld [vmem:[#allocation2 + $0xb0] sm:$0xff]
      %v5325 = vld [vmem:[#allocation2 + $0xb8] sm:$0xff]
      %v5326 = vld [vmem:[#allocation2 + $0xc0] sm:$0xff]
      %v5327 = vld [vmem:[#allocation2 + $0xc8] sm:$0xff]
      %v5328 = vld [vmem:[#allocation2 + $0xd0] sm:$0xff]
      %v5329 = vld [vmem:[#allocation2 + $0xd8] sm:$0xff]
      %v5330 = vld [vmem:[#allocation2 + $0xe0] sm:$0xff]
      %v5331 = vld [vmem:[#allocation2 + $0xe8] sm:$0xff]
      %v5332 = vld [vmem:[#allocation2 + $0xf0] sm:$0xff]
      %v5333 = vld [vmem:[#allocation2 + $0xf8] sm:$0xff]
      %v5382 = vrot.slane %v5254, 5
      %v5383 = vrot.slane %v5382, 4
      %v5384 = vrot.slane %v5255, 5
      %v5385 = vsel %vm1655, %v5383, %v5384
      %v5386 = vrot.slane %v5384, 4
      %v5387 = vrot.slane %v5256, 5
      %v5388 = vsel %vm1655, %v5386, %v5387
      %v5389 = vrot.slane %v5257, 5
      %v5390 = vrot.slane %v5389, 4
      %v5391 = vrot.slane %v5258, 5
      %v5392 = vsel %vm1655, %v5390, %v5391
      %v5393 = vrot.slane %v5391, 4
      %v5394 = vrot.slane %v5259, 5
      %v5395 = vsel %vm1655, %v5393, %v5394
      %v5396 = vrot.slane %v5260, 5
      %v5397 = vrot.slane %v5396, 4
      %v5398 = vrot.slane %v5261, 5
      %v5399 = vsel %vm1655, %v5397, %v5398
      %v5400 = vrot.slane %v5398, 4
      %v5401 = vrot.slane %v5262, 5
      %v5402 = vsel %vm1655, %v5400, %v5401
      %v5403 = vrot.slane %v5263, 5
      %v5404 = vrot.slane %v5403, 4
      %v5405 = vrot.slane %v5264, 5
      %v5406 = vsel %vm1655, %v5404, %v5405
      %v5407 = vrot.slane %v5405, 4
      %v5408 = vrot.slane %v5265, 5
      %v5409 = vsel %vm1655, %v5407, %v5408
      %v5410 = vrot.slane %v5266, 5
      %v5411 = vrot.slane %v5410, 4
      %v5412 = vrot.slane %v5267, 5
      %v5413 = vsel %vm1655, %v5411, %v5412
      %v5414 = vrot.slane %v5412, 4
      %v5415 = vrot.slane %v5268, 5
      %v5416 = vsel %vm1655, %v5414, %v5415
      %v5417 = vrot.slane %v5269, 5
      %v5418 = vrot.slane %v5417, 4
      %v5419 = vrot.slane %v5270, 5
      %v5420 = vsel %vm1655, %v5418, %v5419
      %v5421 = vrot.slane %v5419, 4
      %v5422 = vrot.slane %v5271, 5
      %v5423 = vsel %vm1655, %v5421, %v5422
      %v5424 = vrot.slane %v5272, 5
      %v5425 = vrot.slane %v5424, 4
      %v5426 = vrot.slane %v5273, 5
      %v5427 = vsel %vm1655, %v5425, %v5426
      %v5428 = vrot.slane %v5426, 4
      %v5429 = vrot.slane %v5274, 5
      %v5430 = vsel %vm1655, %v5428, %v5429
      %v5431 = vrot.slane %v5275, 5
      %v5432 = vrot.slane %v5431, 4
      %v5433 = vrot.slane %v5276, 5
      %v5434 = vsel %vm1655, %v5432, %v5433
      %v5435 = vrot.slane %v5433, 4
      %v5436 = vrot.slane %v5277, 5
      %v5437 = vsel %vm1655, %v5435, %v5436
      %v5438 = vrot.slane %v5278, 5
      %v5439 = vrot.slane %v5438, 4
      %v5440 = vrot.slane %v5279, 5
      %v5441 = vsel %vm1655, %v5439, %v5440
      %v5442 = vrot.slane %v5440, 4
      %v5443 = vrot.slane %v5280, 5
      %v5444 = vsel %vm1655, %v5442, %v5443
      %v5445 = vrot.slane %v5281, 5
      %v5446 = vrot.slane %v5445, 4
      %v5447 = vrot.slane %v5282, 5
      %v5448 = vsel %vm1655, %v5446, %v5447
      %v5449 = vrot.slane %v5447, 4
      %v5450 = vrot.slane %v5283, 5
      %v5451 = vsel %vm1655, %v5449, %v5450
      %v5452 = vrot.slane %v5284, 5
      %v5453 = vrot.slane %v5452, 4
      %v5454 = vrot.slane %v5285, 5
      %v5455 = vsel %vm1655, %v5453, %v5454
      %v5456 = vrot.slane %v5454, 4
      %v5457 = vrot.slane %v5286, 5
      %v5458 = vsel %vm1655, %v5456, %v5457
      %v5459 = vrot.slane %v5287, 5
      %v5460 = vrot.slane %v5459, 4
      %v5461 = vrot.slane %v5288, 5
      %v5462 = vsel %vm1655, %v5460, %v5461
      %v5463 = vrot.slane %v5461, 4
      %v5464 = vrot.slane %v5289, 5
      %v5465 = vsel %vm1655, %v5463, %v5464
      %v5466 = vrot.slane %v5290, 5
      %v5467 = vrot.slane %v5466, 4
      %v5468 = vrot.slane %v5291, 5
      %v5469 = vsel %vm1655, %v5467, %v5468
      %v5470 = vrot.slane %v5468, 4
      %v5471 = vrot.slane %v5292, 5
      %v5472 = vsel %vm1655, %v5470, %v5471
      %v5473 = vrot.slane %v5293, 5
      %v5474 = vrot.slane %v5473, 4
      %v5475 = vrot.slane %v5294, 5
      %v5476 = vsel %vm1655, %v5474, %v5475
      %v5477 = vrot.slane %v5475, 4
      %v5478 = vrot.slane %v5295, 5
      %v5479 = vsel %vm1655, %v5477, %v5478
      %v5480 = vrot.slane %v5296, 5
      %v5481 = vrot.slane %v5480, 4
      %v5482 = vrot.slane %v5297, 5
      %v5483 = vsel %vm1655, %v5481, %v5482
      %v5484 = vrot.slane %v5482, 4
      %v5485 = vrot.slane %v5298, 5
      %v5486 = vsel %vm1655, %v5484, %v5485
      %v5487 = vrot.slane %v5299, 5
      %v5488 = vrot.slane %v5487, 4
      %v5489 = vrot.slane %v5300, 5
      %v5490 = vsel %vm1655, %v5488, %v5489
      %v5491 = vrot.slane %v5489, 4
      %v5492 = vrot.slane %v5301, 5
      %v5493 = vsel %vm1655, %v5491, %v5492
      %s5494 = scalar_lea.vmem %s210, 512
      %v5495 = vld [vmem:[%s5494] sm:$0xf]
      %v5496 = vld [vmem:[%s5494 + $0x4] sm:$0xf]
      %v5497 = vld [vmem:[%s5494 + $0x8] sm:$0xf]
      %v5498 = vld [vmem:[%s5494 + $0xc] sm:$0xf]
      %v5499 = vld [vmem:[%s5494 + $0x10] sm:$0xf]
      %v5500 = vld [vmem:[%s5494 + $0x14] sm:$0xf]
      %v5501 = vld [vmem:[%s5494 + $0x18] sm:$0xf]
      %v5502 = vld [vmem:[%s5494 + $0x1c] sm:$0xf]
      %v5503 = vld [vmem:[%s5494 + $0x20] sm:$0xf]
      %v5504 = vld [vmem:[%s5494 + $0x24] sm:$0xf]
      %v5505 = vld [vmem:[%s5494 + $0x28] sm:$0xf]
      %v5506 = vld [vmem:[%s5494 + $0x2c] sm:$0xf]
      %v5507 = vld [vmem:[%s5494 + $0x30] sm:$0xf]
      %v5508 = vld [vmem:[%s5494 + $0x34] sm:$0xf]
      %v5509 = vld [vmem:[%s5494 + $0x38] sm:$0xf]
      %v5510 = vld [vmem:[%s5494 + $0x3c] sm:$0xf]
      %v5511 = vunpack.c.l.b16 %v5385
      %v5512 = vunpack.c.l.b16 %v5388
      %v5513 = vunpack.c.l.b16 %v5392
      %v5514 = vunpack.c.l.b16 %v5395
      %v5515 = vunpack.c.l.b16 %v5399
      %v5516 = vunpack.c.l.b16 %v5402
      %v5517 = vunpack.c.l.b16 %v5406
      %v5518 = vunpack.c.l.b16 %v5409
      %v5519 = vunpack.c.l.b16 %v5413
      %v5520 = vunpack.c.l.b16 %v5416
      %v5521 = vunpack.c.l.b16 %v5420
      %v5522 = vunpack.c.l.b16 %v5423
      %v5523 = vunpack.c.l.b16 %v5427
      %v5524 = vunpack.c.l.b16 %v5430
      %v5525 = vunpack.c.l.b16 %v5434
      %v5526 = vunpack.c.l.b16 %v5437
      %v5527 = vunpack.c.l.b16 %v5441
      %v5528 = vunpack.c.l.b16 %v5444
      %v5529 = vunpack.c.l.b16 %v5448
      %v5530 = vunpack.c.l.b16 %v5451
      %v5531 = vunpack.c.l.b16 %v5455
      %v5532 = vunpack.c.l.b16 %v5458
      %v5533 = vunpack.c.l.b16 %v5462
      %v5534 = vunpack.c.l.b16 %v5465
      %v5535 = vunpack.c.l.b16 %v5469
      %v5536 = vunpack.c.l.b16 %v5472
      %v5537 = vunpack.c.l.b16 %v5476
      %v5538 = vunpack.c.l.b16 %v5479
      %v5539 = vunpack.c.l.b16 %v5483
      %v5540 = vunpack.c.l.b16 %v5486
      %v5541 = vunpack.c.l.b16 %v5490
      %v5542 = vunpack.c.l.b16 %v5493
      %v5543 = vpack.c.b16 %v5512, %v5511
      %v5544 = vpack.c.b16 %v5514, %v5513
      %v5545 = vpack.c.b16 %v5516, %v5515
      %v5546 = vpack.c.b16 %v5518, %v5517
      %v5547 = vpack.c.b16 %v5520, %v5519
      %v5548 = vpack.c.b16 %v5522, %v5521
      %v5549 = vpack.c.b16 %v5524, %v5523
      %v5550 = vpack.c.b16 %v5526, %v5525
      %v5551 = vpack.c.b16 %v5528, %v5527
      %v5552 = vpack.c.b16 %v5530, %v5529
      %v5553 = vpack.c.b16 %v5532, %v5531
      %v5554 = vpack.c.b16 %v5534, %v5533
      %v5555 = vpack.c.b16 %v5536, %v5535
      %v5556 = vpack.c.b16 %v5538, %v5537
      %v5557 = vpack.c.b16 %v5540, %v5539
      %v5558 = vpack.c.b16 %v5542, %v5541
      %v5591 = vunpack.c.l.b16 %v5495
      %v5592 = vunpack.c.l.b16 %v5496
      %v5593 = vunpack.c.l.b16 %v5497
      %v5594 = vunpack.c.l.b16 %v5498
      %v5595 = vunpack.c.l.b16 %v5499
      %v5596 = vunpack.c.l.b16 %v5500
      %v5597 = vunpack.c.l.b16 %v5501
      %v5598 = vunpack.c.l.b16 %v5502
      %v5599 = vunpack.c.l.b16 %v5503
      %v5600 = vunpack.c.l.b16 %v5504
      %v5601 = vunpack.c.l.b16 %v5505
      %v5602 = vunpack.c.l.b16 %v5506
      %v5603 = vunpack.c.l.b16 %v5507
      %v5604 = vunpack.c.l.b16 %v5508
      %v5605 = vunpack.c.l.b16 %v5509
      %v5606 = vunpack.c.l.b16 %v5510
      %v5607 = vpack.c.b16 %v5592, %v5591
      %v5608 = vpack.c.b16 %v5594, %v5593
      %v5609 = vpack.c.b16 %v5596, %v5595
      %v5610 = vpack.c.b16 %v5598, %v5597
      %v5611 = vpack.c.b16 %v5600, %v5599
      %v5612 = vpack.c.b16 %v5602, %v5601
      %v5613 = vpack.c.b16 %v5604, %v5603
      %v5614 = vpack.c.b16 %v5606, %v5605
      %5623 = vmatprep.subr.bf16.mxu0 0
      %5624 = vmatpush1.bf16.msra.mxu0 %v5614
      %5625 = vmatprep.subr.bf16.mxu0 0
      %5626 = vmatpush1.bf16.msra.mxu0 %v5613
      %5627 = vmatprep.subr.bf16.mxu0 0
      %5628 = vmatpush1.bf16.msra.mxu0 %v5612
      %5629 = vmatprep.subr.bf16.mxu0 0
      %5630 = vmatpush1.bf16.msra.mxu0 %v5611
      %5631 = vmatprep.subr.bf16.mxu0 0
      %5632 = vmatpush1.bf16.msra.mxu0 %v5610
      %5633 = vmatprep.subr.bf16.mxu0 0
      %5634 = vmatpush1.bf16.msra.mxu0 %v5609
      %5635 = vmatprep.subr.bf16.mxu0 0
      %5636 = vmatpush1.bf16.msra.mxu0 %v5608
      %5637 = vmatprep.subr.bf16.mxu0 0
      %5638 = vmatpush1.bf16.msra.mxu0 %v5607
      %5639 = vmatprep.subr.bf16.mxu0 0
      %5640 = vmatpush2.bf16.msra.mxu0 0
      %5641 = vmatprep.subr.bf16.mxu0 0
      %5642 = vmatpush2.bf16.msra.mxu0 0
      %5643 = vmatprep.subr.bf16.mxu0 0
      %5644 = vmatpush2.bf16.msra.mxu0 0
      %5645 = vmatprep.subr.bf16.mxu0 0
      %5646 = vmatpush2.bf16.msra.mxu0 0
      %5647 = vmatprep.subr.bf16.mxu0 0
      %5648 = vmatpush2.bf16.msra.mxu0 0
      %5649 = vmatprep.subr.bf16.mxu0 0
      %5650 = vmatpush2.bf16.msra.mxu0 0
      %5651 = vmatprep.subr.bf16.mxu0 0
      %5652 = vmatpush2.bf16.msra.mxu0 0
      %5653 = vmatprep.subr.bf16.mxu0 0
      %5654 = vmatpush2.bf16.msra.mxu0 0
      %5655 = vmatprep.mubr.bf16.mxu0 0
      %5656 = vmatmul.mubr.bf16.gmra.mxu0 %v5543
      %v5657 = vpop.f32.mrf.mxu0
      %v5658 = vadd.f32 0.0, %v5657
      %v5659 = vpop.f32.mrf.mxu0
      %v5660 = vpop.f32.mrf.mxu0
      %v5661 = vadd.f32 0.0, %v5660
      %v5662 = vpop.f32.mrf.mxu0
      %5663 = vmatprep.mubr.bf16.mxu0 0
      %5664 = vmatmul.mubr.bf16.gmra.mxu0 %v5544
      %v5665 = vpop.f32.mrf.mxu0
      %v5666 = vadd.f32 0.0, %v5665
      %v5667 = vpop.f32.mrf.mxu0
      %v5668 = vpop.f32.mrf.mxu0
      %v5669 = vadd.f32 0.0, %v5668
      %v5670 = vpop.f32.mrf.mxu0
      %5671 = vmatprep.mubr.bf16.mxu0 0
      %5672 = vmatmul.mubr.bf16.gmra.mxu0 %v5545
      %v5673 = vpop.f32.mrf.mxu0
      %v5674 = vadd.f32 0.0, %v5673
      %v5675 = vpop.f32.mrf.mxu0
      %v5676 = vpop.f32.mrf.mxu0
      %v5677 = vadd.f32 0.0, %v5676
      %v5678 = vpop.f32.mrf.mxu0
      %5679 = vmatprep.mubr.bf16.mxu0 0
      %5680 = vmatmul.mubr.bf16.gmra.mxu0 %v5546
      %v5681 = vpop.f32.mrf.mxu0
      %v5682 = vadd.f32 0.0, %v5681
      %v5683 = vpop.f32.mrf.mxu0
      %v5684 = vpop.f32.mrf.mxu0
      %v5685 = vadd.f32 0.0, %v5684
      %v5686 = vpop.f32.mrf.mxu0
      %5687 = vmatprep.mubr.bf16.mxu0 0
      %5688 = vmatmul.mubr.bf16.gmra.mxu0 %v5547
      %v5689 = vpop.f32.mrf.mxu0
      %v5690 = vadd.f32 0.0, %v5689
      %v5691 = vpop.f32.mrf.mxu0
      %v5692 = vpop.f32.mrf.mxu0
      %v5693 = vadd.f32 0.0, %v5692
      %v5694 = vpop.f32.mrf.mxu0
      %5695 = vmatprep.mubr.bf16.mxu0 0
      %5696 = vmatmul.mubr.bf16.gmra.mxu0 %v5548
      %v5697 = vpop.f32.mrf.mxu0
      %v5698 = vadd.f32 0.0, %v5697
      %v5699 = vpop.f32.mrf.mxu0
      %v5700 = vpop.f32.mrf.mxu0
      %v5701 = vadd.f32 0.0, %v5700
      %v5702 = vpop.f32.mrf.mxu0
      %5703 = vmatprep.mubr.bf16.mxu0 0
      %5704 = vmatmul.mubr.bf16.gmra.mxu0 %v5549
      %v5705 = vpop.f32.mrf.mxu0
      %v5706 = vadd.f32 0.0, %v5705
      %v5707 = vpop.f32.mrf.mxu0
      %v5708 = vpop.f32.mrf.mxu0
      %v5709 = vadd.f32 0.0, %v5708
      %v5710 = vpop.f32.mrf.mxu0
      %5711 = vmatprep.mubr.bf16.mxu0 0
      %5712 = vmatmul.mubr.bf16.gmra.mxu0 %v5550
      %v5713 = vpop.f32.mrf.mxu0
      %v5714 = vadd.f32 0.0, %v5713
      %v5715 = vpop.f32.mrf.mxu0
      %v5716 = vpop.f32.mrf.mxu0
      %v5717 = vadd.f32 0.0, %v5716
      %v5718 = vpop.f32.mrf.mxu0
      %5719 = vmatprep.mubr.bf16.mxu0 0
      %5720 = vmatmul.mubr.bf16.gmra.mxu0 %v5551
      %v5721 = vpop.f32.mrf.mxu0
      %v5722 = vadd.f32 0.0, %v5721
      %v5723 = vpop.f32.mrf.mxu0
      %v5724 = vpop.f32.mrf.mxu0
      %v5725 = vadd.f32 0.0, %v5724
      %v5726 = vpop.f32.mrf.mxu0
      %5727 = vmatprep.mubr.bf16.mxu0 0
      %5728 = vmatmul.mubr.bf16.gmra.mxu0 %v5552
      %v5729 = vpop.f32.mrf.mxu0
      %v5730 = vadd.f32 0.0, %v5729
      %v5731 = vpop.f32.mrf.mxu0
      %v5732 = vpop.f32.mrf.mxu0
      %v5733 = vadd.f32 0.0, %v5732
      %v5734 = vpop.f32.mrf.mxu0
      %5735 = vmatprep.mubr.bf16.mxu0 0
      %5736 = vmatmul.mubr.bf16.gmra.mxu0 %v5553
      %v5737 = vpop.f32.mrf.mxu0
      %v5738 = vadd.f32 0.0, %v5737
      %v5739 = vpop.f32.mrf.mxu0
      %v5740 = vpop.f32.mrf.mxu0
      %v5741 = vadd.f32 0.0, %v5740
      %v5742 = vpop.f32.mrf.mxu0
      %5743 = vmatprep.mubr.bf16.mxu0 0
      %5744 = vmatmul.mubr.bf16.gmra.mxu0 %v5554
      %v5745 = vpop.f32.mrf.mxu0
      %v5746 = vadd.f32 0.0, %v5745
      %v5747 = vpop.f32.mrf.mxu0
      %v5748 = vpop.f32.mrf.mxu0
      %v5749 = vadd.f32 0.0, %v5748
      %v5750 = vpop.f32.mrf.mxu0
      %5751 = vmatprep.mubr.bf16.mxu0 0
      %5752 = vmatmul.mubr.bf16.gmra.mxu0 %v5555
      %v5753 = vpop.f32.mrf.mxu0
      %v5754 = vadd.f32 0.0, %v5753
      %v5755 = vpop.f32.mrf.mxu0
      %v5756 = vpop.f32.mrf.mxu0
      %v5757 = vadd.f32 0.0, %v5756
      %v5758 = vpop.f32.mrf.mxu0
      %5759 = vmatprep.mubr.bf16.mxu0 0
      %5760 = vmatmul.mubr.bf16.gmra.mxu0 %v5556
      %v5761 = vpop.f32.mrf.mxu0
      %v5762 = vadd.f32 0.0, %v5761
      %v5763 = vpop.f32.mrf.mxu0
      %v5764 = vpop.f32.mrf.mxu0
      %v5765 = vadd.f32 0.0, %v5764
      %v5766 = vpop.f32.mrf.mxu0
      %5767 = vmatprep.mubr.bf16.mxu0 0
      %5768 = vmatmul.mubr.bf16.gmra.mxu0 %v5557
      %v5769 = vpop.f32.mrf.mxu0
      %v5770 = vadd.f32 0.0, %v5769
      %v5771 = vpop.f32.mrf.mxu0
      %v5772 = vpop.f32.mrf.mxu0
      %v5773 = vadd.f32 0.0, %v5772
      %v5774 = vpop.f32.mrf.mxu0
      %5775 = vmatprep.mubr.bf16.mxu0 0
      %5776 = vmatmul.mubr.bf16.gmra.mxu0 %v5558
      %v5777 = vpop.f32.mrf.mxu0
      %v5778 = vadd.f32 0.0, %v5777
      %v5779 = vpop.f32.mrf.mxu0
      %v5780 = vpop.f32.mrf.mxu0
      %v5781 = vadd.f32 0.0, %v5780
      %v5782 = vpop.f32.mrf.mxu0
      %5783 = vdwg.mxu0
      %v5784 = vadd.f32 %v5302, %v5658
      %v5785 = vadd.f32 %v5303, %v5661
      %v5786 = vadd.f32 %v5304, %v5666
      %v5787 = vadd.f32 %v5305, %v5669
      %v5788 = vadd.f32 %v5306, %v5674
      %v5789 = vadd.f32 %v5307, %v5677
      %v5790 = vadd.f32 %v5308, %v5682
      %v5791 = vadd.f32 %v5309, %v5685
      %v5792 = vadd.f32 %v5310, %v5690
      %v5793 = vadd.f32 %v5311, %v5693
      %v5794 = vadd.f32 %v5312, %v5698
      %v5795 = vadd.f32 %v5313, %v5701
      %v5796 = vadd.f32 %v5314, %v5706
      %v5797 = vadd.f32 %v5315, %v5709
      %v5798 = vadd.f32 %v5316, %v5714
      %v5799 = vadd.f32 %v5317, %v5717
      %v5800 = vadd.f32 %v5318, %v5722
      %v5801 = vadd.f32 %v5319, %v5725
      %v5802 = vadd.f32 %v5320, %v5730
      %v5803 = vadd.f32 %v5321, %v5733
      %v5804 = vadd.f32 %v5322, %v5738
      %v5805 = vadd.f32 %v5323, %v5741
      %v5806 = vadd.f32 %v5324, %v5746
      %v5807 = vadd.f32 %v5325, %v5749
      %v5808 = vadd.f32 %v5326, %v5754
      %v5809 = vadd.f32 %v5327, %v5757
      %v5810 = vadd.f32 %v5328, %v5762
      %v5811 = vadd.f32 %v5329, %v5765
      %v5812 = vadd.f32 %v5330, %v5770
      %v5813 = vadd.f32 %v5331, %v5773
      %v5814 = vadd.f32 %v5332, %v5778
      %v5815 = vadd.f32 %v5333, %v5781
      %5816 = vst [vmem:[#allocation2] sm:$0xff] %v5784
      %5817 = vst [vmem:[#allocation2 + $0x8] sm:$0xff] %v5785
      %5818 = vst [vmem:[#allocation2 + $0x10] sm:$0xff] %v5786
      %5819 = vst [vmem:[#allocation2 + $0x18] sm:$0xff] %v5787
      %5820 = vst [vmem:[#allocation2 + $0x20] sm:$0xff] %v5788
      %5821 = vst [vmem:[#allocation2 + $0x28] sm:$0xff] %v5789
      %5822 = vst [vmem:[#allocation2 + $0x30] sm:$0xff] %v5790
      %5823 = vst [vmem:[#allocation2 + $0x38] sm:$0xff] %v5791
      %5824 = vst [vmem:[#allocation2 + $0x40] sm:$0xff] %v5792
      %5825 = vst [vmem:[#allocation2 + $0x48] sm:$0xff] %v5793
      %5826 = vst [vmem:[#allocation2 + $0x50] sm:$0xff] %v5794
      %5827 = vst [vmem:[#allocation2 + $0x58] sm:$0xff] %v5795
      %5828 = vst [vmem:[#allocation2 + $0x60] sm:$0xff] %v5796
      %5829 = vst [vmem:[#allocation2 + $0x68] sm:$0xff] %v5797
      %5830 = vst [vmem:[#allocation2 + $0x70] sm:$0xff] %v5798
      %5831 = vst [vmem:[#allocation2 + $0x78] sm:$0xff] %v5799
      %5832 = vst [vmem:[#allocation2 + $0x80] sm:$0xff] %v5800
      %5833 = vst [vmem:[#allocation2 + $0x88] sm:$0xff] %v5801
      %5834 = vst [vmem:[#allocation2 + $0x90] sm:$0xff] %v5802
      %5835 = vst [vmem:[#allocation2 + $0x98] sm:$0xff] %v5803
      %5836 = vst [vmem:[#allocation2 + $0xa0] sm:$0xff] %v5804
      %5837 = vst [vmem:[#allocation2 + $0xa8] sm:$0xff] %v5805
      %5838 = vst [vmem:[#allocation2 + $0xb0] sm:$0xff] %v5806
      %5839 = vst [vmem:[#allocation2 + $0xb8] sm:$0xff] %v5807
      %5840 = vst [vmem:[#allocation2 + $0xc0] sm:$0xff] %v5808
      %5841 = vst [vmem:[#allocation2 + $0xc8] sm:$0xff] %v5809
      %5842 = vst [vmem:[#allocation2 + $0xd0] sm:$0xff] %v5810
      %5843 = vst [vmem:[#allocation2 + $0xd8] sm:$0xff] %v5811
      %5844 = vst [vmem:[#allocation2 + $0xe0] sm:$0xff] %v5812
      %5845 = vst [vmem:[#allocation2 + $0xe8] sm:$0xff] %v5813
      %5846 = vst [vmem:[#allocation2 + $0xf0] sm:$0xff] %v5814
      %5847 = vst [vmem:[#allocation2 + $0xf8] sm:$0xff] %v5815
      %v5848 = vld [vmem:[#allocation2] sm:$0xff]
      %v5849 = vld [vmem:[#allocation2 + $0x8] sm:$0xff]
      %v5850 = vld [vmem:[#allocation2 + $0x10] sm:$0xff]
      %v5851 = vld [vmem:[#allocation2 + $0x18] sm:$0xff]
      %v5852 = vld [vmem:[#allocation2 + $0x20] sm:$0xff]
      %v5853 = vld [vmem:[#allocation2 + $0x28] sm:$0xff]
      %v5854 = vld [vmem:[#allocation2 + $0x30] sm:$0xff]
      %v5855 = vld [vmem:[#allocation2 + $0x38] sm:$0xff]
      %v5856 = vld [vmem:[#allocation2 + $0x40] sm:$0xff]
      %v5857 = vld [vmem:[#allocation2 + $0x48] sm:$0xff]
      %v5858 = vld [vmem:[#allocation2 + $0x50] sm:$0xff]
      %v5859 = vld [vmem:[#allocation2 + $0x58] sm:$0xff]
      %v5860 = vld [vmem:[#allocation2 + $0x60] sm:$0xff]
      %v5861 = vld [vmem:[#allocation2 + $0x68] sm:$0xff]
      %v5862 = vld [vmem:[#allocation2 + $0x70] sm:$0xff]
      %v5863 = vld [vmem:[#allocation2 + $0x78] sm:$0xff]
      %v5864 = vld [vmem:[#allocation2 + $0x80] sm:$0xff]
      %v5865 = vld [vmem:[#allocation2 + $0x88] sm:$0xff]
      %v5866 = vld [vmem:[#allocation2 + $0x90] sm:$0xff]
      %v5867 = vld [vmem:[#allocation2 + $0x98] sm:$0xff]
      %v5868 = vld [vmem:[#allocation2 + $0xa0] sm:$0xff]
      %v5869 = vld [vmem:[#allocation2 + $0xa8] sm:$0xff]
      %v5870 = vld [vmem:[#allocation2 + $0xb0] sm:$0xff]
      %v5871 = vld [vmem:[#allocation2 + $0xb8] sm:$0xff]
      %v5872 = vld [vmem:[#allocation2 + $0xc0] sm:$0xff]
      %v5873 = vld [vmem:[#allocation2 + $0xc8] sm:$0xff]
      %v5874 = vld [vmem:[#allocation2 + $0xd0] sm:$0xff]
      %v5875 = vld [vmem:[#allocation2 + $0xd8] sm:$0xff]
      %v5876 = vld [vmem:[#allocation2 + $0xe0] sm:$0xff]
      %v5877 = vld [vmem:[#allocation2 + $0xe8] sm:$0xff]
      %v5878 = vld [vmem:[#allocation2 + $0xf0] sm:$0xff]
      %v5879 = vld [vmem:[#allocation2 + $0xf8] sm:$0xff]
      %v5880 = vld [vmem:[%s213] sm:$0x1]
      %v5882 = vlaneseq
      %v5883 = vshrl.u32 %v5882, 7
      %v5884 = vsub.s32 0, %v5883
      %v5885 = vrot.slane %v5880, %v5884
      %v5887 = vadd.f32 %v5848, %v5885
      %v5888 = vadd.f32 %v5849, %v5885
      %v5889 = vadd.f32 %v5850, %v5885
      %v5890 = vadd.f32 %v5851, %v5885
      %v5891 = vadd.f32 %v5852, %v5885
      %v5892 = vadd.f32 %v5853, %v5885
      %v5893 = vadd.f32 %v5854, %v5885
      %v5894 = vadd.f32 %v5855, %v5885
      %v5895 = vadd.f32 %v5856, %v5885
      %v5896 = vadd.f32 %v5857, %v5885
      %v5897 = vadd.f32 %v5858, %v5885
      %v5898 = vadd.f32 %v5859, %v5885
      %v5899 = vadd.f32 %v5860, %v5885
      %v5900 = vadd.f32 %v5861, %v5885
      %v5901 = vadd.f32 %v5862, %v5885
      %v5902 = vadd.f32 %v5863, %v5885
      %v5903 = vadd.f32 %v5864, %v5885
      %v5904 = vadd.f32 %v5865, %v5885
      %v5905 = vadd.f32 %v5866, %v5885
      %v5906 = vadd.f32 %v5867, %v5885
      %v5907 = vadd.f32 %v5868, %v5885
      %v5908 = vadd.f32 %v5869, %v5885
      %v5909 = vadd.f32 %v5870, %v5885
      %v5910 = vadd.f32 %v5871, %v5885
      %v5911 = vadd.f32 %v5872, %v5885
      %v5912 = vadd.f32 %v5873, %v5885
      %v5913 = vadd.f32 %v5874, %v5885
      %v5914 = vadd.f32 %v5875, %v5885
      %v5915 = vadd.f32 %v5876, %v5885
      %v5916 = vadd.f32 %v5877, %v5885
      %v5917 = vadd.f32 %v5878, %v5885
      %v5918 = vadd.f32 %v5879, %v5885
      %vm5919 = vcmp.gt.f32.partialorder %v5887, 0.0
      %vm5920 = vcmp.gt.f32.partialorder %v5888, 0.0
      %vm5921 = vcmp.gt.f32.partialorder %v5889, 0.0
      %vm5922 = vcmp.gt.f32.partialorder %v5890, 0.0
      %vm5923 = vcmp.gt.f32.partialorder %v5891, 0.0
      %vm5924 = vcmp.gt.f32.partialorder %v5892, 0.0
      %vm5925 = vcmp.gt.f32.partialorder %v5893, 0.0
      %vm5926 = vcmp.gt.f32.partialorder %v5894, 0.0
      %vm5927 = vcmp.gt.f32.partialorder %v5895, 0.0
      %vm5928 = vcmp.gt.f32.partialorder %v5896, 0.0
      %vm5929 = vcmp.gt.f32.partialorder %v5897, 0.0
      %vm5930 = vcmp.gt.f32.partialorder %v5898, 0.0
      %vm5931 = vcmp.gt.f32.partialorder %v5899, 0.0
      %vm5932 = vcmp.gt.f32.partialorder %v5900, 0.0
      %vm5933 = vcmp.gt.f32.partialorder %v5901, 0.0
      %vm5934 = vcmp.gt.f32.partialorder %v5902, 0.0
      %vm5935 = vcmp.gt.f32.partialorder %v5903, 0.0
      %vm5936 = vcmp.gt.f32.partialorder %v5904, 0.0
      %vm5937 = vcmp.gt.f32.partialorder %v5905, 0.0
      %vm5938 = vcmp.gt.f32.partialorder %v5906, 0.0
      %vm5939 = vcmp.gt.f32.partialorder %v5907, 0.0
      %vm5940 = vcmp.gt.f32.partialorder %v5908, 0.0
      %vm5941 = vcmp.gt.f32.partialorder %v5909, 0.0
      %vm5942 = vcmp.gt.f32.partialorder %v5910, 0.0
      %vm5943 = vcmp.gt.f32.partialorder %v5911, 0.0
      %vm5944 = vcmp.gt.f32.partialorder %v5912, 0.0
      %vm5945 = vcmp.gt.f32.partialorder %v5913, 0.0
      %vm5946 = vcmp.gt.f32.partialorder %v5914, 0.0
      %vm5947 = vcmp.gt.f32.partialorder %v5915, 0.0
      %vm5948 = vcmp.gt.f32.partialorder %v5916, 0.0
      %vm5949 = vcmp.gt.f32.partialorder %v5917, 0.0
      %vm5950 = vcmp.gt.f32.partialorder %v5918, 0.0
      %v5951 = vmin.f32 %v5887, 0.0
      %v5952 = vmin.f32 %v5888, 0.0
      %v5953 = vmin.f32 %v5889, 0.0
      %v5954 = vmin.f32 %v5890, 0.0
      %v5955 = vmin.f32 %v5891, 0.0
      %v5956 = vmin.f32 %v5892, 0.0
      %v5957 = vmin.f32 %v5893, 0.0
      %v5958 = vmin.f32 %v5894, 0.0
      %v5959 = vmin.f32 %v5895, 0.0
      %v5960 = vmin.f32 %v5896, 0.0
      %v5961 = vmin.f32 %v5897, 0.0
      %v5962 = vmin.f32 %v5898, 0.0
      %v5963 = vmin.f32 %v5899, 0.0
      %v5964 = vmin.f32 %v5900, 0.0
      %v5965 = vmin.f32 %v5901, 0.0
      %v5966 = vmin.f32 %v5902, 0.0
      %v5967 = vmin.f32 %v5903, 0.0
      %v5968 = vmin.f32 %v5904, 0.0
      %v5969 = vmin.f32 %v5905, 0.0
      %v5970 = vmin.f32 %v5906, 0.0
      %v5971 = vmin.f32 %v5907, 0.0
      %v5972 = vmin.f32 %v5908, 0.0
      %v5973 = vmin.f32 %v5909, 0.0
      %v5974 = vmin.f32 %v5910, 0.0
      %v5975 = vmin.f32 %v5911, 0.0
      %v5976 = vmin.f32 %v5912, 0.0
      %v5977 = vmin.f32 %v5913, 0.0
      %v5978 = vmin.f32 %v5914, 0.0
      %v5979 = vmin.f32 %v5915, 0.0
      %v5980 = vmin.f32 %v5916, 0.0
      %v5981 = vmin.f32 %v5917, 0.0
      %v5982 = vmin.f32 %v5918, 0.0
      %v5983 = vmul.f32 %v5951, 1.442695
      %v5984 = vpow.pop %v5983
      %v5985 = vmul.f32 %v5952, 1.442695
      %v5986 = vpow.pop %v5985
      %v5987 = vmul.f32 %v5953, 1.442695
      %v5988 = vpow.pop %v5987
      %v5989 = vmul.f32 %v5954, 1.442695
      %v5990 = vpow.pop %v5989
      %v5991 = vmul.f32 %v5955, 1.442695
      %v5992 = vpow.pop %v5991
      %v5993 = vmul.f32 %v5956, 1.442695
      %v5994 = vpow.pop %v5993
      %v5995 = vmul.f32 %v5957, 1.442695
      %v5996 = vpow.pop %v5995
      %v5997 = vmul.f32 %v5958, 1.442695
      %v5998 = vpow.pop %v5997
      %v5999 = vmul.f32 %v5959, 1.442695
      %v6000 = vpow.pop %v5999
      %v6001 = vmul.f32 %v5960, 1.442695
      %v6002 = vpow.pop %v6001
      %v6003 = vmul.f32 %v5961, 1.442695
      %v6004 = vpow.pop %v6003
      %v6005 = vmul.f32 %v5962, 1.442695
      %v6006 = vpow.pop %v6005
      %v6007 = vmul.f32 %v5963, 1.442695
      %v6008 = vpow.pop %v6007
      %v6009 = vmul.f32 %v5964, 1.442695
      %v6010 = vpow.pop %v6009
      %v6011 = vmul.f32 %v5965, 1.442695
      %v6012 = vpow.pop %v6011
      %v6013 = vmul.f32 %v5966, 1.442695
      %v6014 = vpow.pop %v6013
      %v6015 = vmul.f32 %v5967, 1.442695
      %v6016 = vpow.pop %v6015
      %v6017 = vmul.f32 %v5968, 1.442695
      %v6018 = vpow.pop %v6017
      %v6019 = vmul.f32 %v5969, 1.442695
      %v6020 = vpow.pop %v6019
      %v6021 = vmul.f32 %v5970, 1.442695
      %v6022 = vpow.pop %v6021
      %v6023 = vmul.f32 %v5971, 1.442695
      %v6024 = vpow.pop %v6023
      %v6025 = vmul.f32 %v5972, 1.442695
      %v6026 = vpow.pop %v6025
      %v6027 = vmul.f32 %v5973, 1.442695
      %v6028 = vpow.pop %v6027
      %v6029 = vmul.f32 %v5974, 1.442695
      %v6030 = vpow.pop %v6029
      %v6031 = vmul.f32 %v5975, 1.442695
      %v6032 = vpow.pop %v6031
      %v6033 = vmul.f32 %v5976, 1.442695
      %v6034 = vpow.pop %v6033
      %v6035 = vmul.f32 %v5977, 1.442695
      %v6036 = vpow.pop %v6035
      %v6037 = vmul.f32 %v5978, 1.442695
      %v6038 = vpow.pop %v6037
      %v6039 = vmul.f32 %v5979, 1.442695
      %v6040 = vpow.pop %v6039
      %v6041 = vmul.f32 %v5980, 1.442695
      %v6042 = vpow.pop %v6041
      %v6043 = vmul.f32 %v5981, 1.442695
      %v6044 = vpow.pop %v6043
      %v6045 = vmul.f32 %v5982, 1.442695
      %v6046 = vpow.pop %v6045
      %v6047 = vsub.f32 %v5984, 1.0
      %v6048 = vsub.f32 %v5986, 1.0
      %v6049 = vsub.f32 %v5988, 1.0
      %v6050 = vsub.f32 %v5990, 1.0
      %v6051 = vsub.f32 %v5992, 1.0
      %v6052 = vsub.f32 %v5994, 1.0
      %v6053 = vsub.f32 %v5996, 1.0
      %v6054 = vsub.f32 %v5998, 1.0
      %v6055 = vsub.f32 %v6000, 1.0
      %v6056 = vsub.f32 %v6002, 1.0
      %v6057 = vsub.f32 %v6004, 1.0
      %v6058 = vsub.f32 %v6006, 1.0
      %v6059 = vsub.f32 %v6008, 1.0
      %v6060 = vsub.f32 %v6010, 1.0
      %v6061 = vsub.f32 %v6012, 1.0
      %v6062 = vsub.f32 %v6014, 1.0
      %v6063 = vsub.f32 %v6016, 1.0
      %v6064 = vsub.f32 %v6018, 1.0
      %v6065 = vsub.f32 %v6020, 1.0
      %v6066 = vsub.f32 %v6022, 1.0
      %v6067 = vsub.f32 %v6024, 1.0
      %v6068 = vsub.f32 %v6026, 1.0
      %v6069 = vsub.f32 %v6028, 1.0
      %v6070 = vsub.f32 %v6030, 1.0
      %v6071 = vsub.f32 %v6032, 1.0
      %v6072 = vsub.f32 %v6034, 1.0
      %v6073 = vsub.f32 %v6036, 1.0
      %v6074 = vsub.f32 %v6038, 1.0
      %v6075 = vsub.f32 %v6040, 1.0
      %v6076 = vsub.f32 %v6042, 1.0
      %v6077 = vsub.f32 %v6044, 1.0
      %v6078 = vsub.f32 %v6046, 1.0
      %v6079 = vsel %vm5919, %v5887, %v6047
      %v6080 = vsel %vm5920, %v5888, %v6048
      %v6081 = vsel %vm5921, %v5889, %v6049
      %v6082 = vsel %vm5922, %v5890, %v6050
      %v6083 = vsel %vm5923, %v5891, %v6051
      %v6084 = vsel %vm5924, %v5892, %v6052
      %v6085 = vsel %vm5925, %v5893, %v6053
      %v6086 = vsel %vm5926, %v5894, %v6054
      %v6087 = vsel %vm5927, %v5895, %v6055
      %v6088 = vsel %vm5928, %v5896, %v6056
      %v6089 = vsel %vm5929, %v5897, %v6057
      %v6090 = vsel %vm5930, %v5898, %v6058
      %v6091 = vsel %vm5931, %v5899, %v6059
      %v6092 = vsel %vm5932, %v5900, %v6060
      %v6093 = vsel %vm5933, %v5901, %v6061
      %v6094 = vsel %vm5934, %v5902, %v6062
      %v6095 = vsel %vm5935, %v5903, %v6063
      %v6096 = vsel %vm5936, %v5904, %v6064
      %v6097 = vsel %vm5937, %v5905, %v6065
      %v6098 = vsel %vm5938, %v5906, %v6066
      %v6099 = vsel %vm5939, %v5907, %v6067
      %v6100 = vsel %vm5940, %v5908, %v6068
      %v6101 = vsel %vm5941, %v5909, %v6069
      %v6102 = vsel %vm5942, %v5910, %v6070
      %v6103 = vsel %vm5943, %v5911, %v6071
      %v6104 = vsel %vm5944, %v5912, %v6072
      %v6105 = vsel %vm5945, %v5913, %v6073
      %v6106 = vsel %vm5946, %v5914, %v6074
      %v6107 = vsel %vm5947, %v5915, %v6075
      %v6108 = vsel %vm5948, %v5916, %v6076
      %v6109 = vsel %vm5949, %v5917, %v6077
      %v6110 = vsel %vm5950, %v5918, %v6078
      %6111 = vst [vmem:[%s221] sm:$0xff] %v6079
      %6112 = vst [vmem:[%s221 + $0x8] sm:$0xff] %v6080
      %6113 = vst [vmem:[%s221 + $0x10] sm:$0xff] %v6081
      %6114 = vst [vmem:[%s221 + $0x18] sm:$0xff] %v6082
      %6115 = vst [vmem:[%s221 + $0x20] sm:$0xff] %v6083
      %6116 = vst [vmem:[%s221 + $0x28] sm:$0xff] %v6084
      %6117 = vst [vmem:[%s221 + $0x30] sm:$0xff] %v6085
      %6118 = vst [vmem:[%s221 + $0x38] sm:$0xff] %v6086
      %6119 = vst [vmem:[%s221 + $0x40] sm:$0xff] %v6087
      %6120 = vst [vmem:[%s221 + $0x48] sm:$0xff] %v6088
      %6121 = vst [vmem:[%s221 + $0x50] sm:$0xff] %v6089
      %6122 = vst [vmem:[%s221 + $0x58] sm:$0xff] %v6090
      %6123 = vst [vmem:[%s221 + $0x60] sm:$0xff] %v6091
      %6124 = vst [vmem:[%s221 + $0x68] sm:$0xff] %v6092
      %6125 = vst [vmem:[%s221 + $0x70] sm:$0xff] %v6093
      %6126 = vst [vmem:[%s221 + $0x78] sm:$0xff] %v6094
      %6127 = vst [vmem:[%s221 + $0x80] sm:$0xff] %v6095
      %6128 = vst [vmem:[%s221 + $0x88] sm:$0xff] %v6096
      %6129 = vst [vmem:[%s221 + $0x90] sm:$0xff] %v6097
      %6130 = vst [vmem:[%s221 + $0x98] sm:$0xff] %v6098
      %6131 = vst [vmem:[%s221 + $0xa0] sm:$0xff] %v6099
      %6132 = vst [vmem:[%s221 + $0xa8] sm:$0xff] %v6100
      %6133 = vst [vmem:[%s221 + $0xb0] sm:$0xff] %v6101
      %6134 = vst [vmem:[%s221 + $0xb8] sm:$0xff] %v6102
      %6135 = vst [vmem:[%s221 + $0xc0] sm:$0xff] %v6103
      %6136 = vst [vmem:[%s221 + $0xc8] sm:$0xff] %v6104
      %6137 = vst [vmem:[%s221 + $0xd0] sm:$0xff] %v6105
      %6138 = vst [vmem:[%s221 + $0xd8] sm:$0xff] %v6106
      %6139 = vst [vmem:[%s221 + $0xe0] sm:$0xff] %v6107
      %6140 = vst [vmem:[%s221 + $0xe8] sm:$0xff] %v6108
      %6141 = vst [vmem:[%s221 + $0xf0] sm:$0xff] %v6109
      %6142 = vst [vmem:[%s221 + $0xf8] sm:$0xff] %v6110
      %p6143 = scmp.lt.s32.totalorder %s18, 1
      %s6144 = scalar_select %p6143, %s18, 1
      %p6145 = scmp.lt.s32.totalorder %s19, 0
      %s6146 = scalar_select %p6145, %s19, 0
      %s6147 = smul.addr %s6144, 32
      %s6148 = sadd.s32 %s6146, %s6147
      %s6149 = smul.addr %s6148, 8
      %s6150 = scalar_lea.vmem %s3, %s6149
      // Predicated region
      $region33: #{conv3bn_forward.1} parent=31 // pred_check
        %p6151 = pneg %p124
      $region34: #{conv3bn_forward.1} parent=31 // pred_check_branch
        %6153 = sbr.rel (%p6151) target = $region36
      $region35: #{conv3bn_forward.1} parent=31 // pred_region
        _
      $region36: #{conv3bn_forward.1} parent=31 // pred_fallthru
        _
    $region32: #{conv3bn_forward.1} parent=5 // pred_fallthru
      _
    %p6154 = scmp.le.s32.totalorder 2, %s9
    // Predicated region
    $region37: #{conv3bn_forward.1} parent=5 // pred_check
      %p6155 = pneg %p6154
    $region38: #{conv3bn_forward.1} parent=5 // pred_check_branch
      %6157 = sbr.rel (%p6155) target = $region40
    $region39: #{conv3bn_forward.1} parent=5 // pred_region
      %s6158 = ssub.s32 %s9, 2
      // Predicated region
      $region41: #{conv3bn_forward.1} parent=39 // pred_check
        %p6159 = pneg %p130
      $region42: #{conv3bn_forward.1} parent=39 // pred_check_branch
        %6161 = sbr.rel (%p6159) target = $region44
      $region43: #{conv3bn_forward.1} parent=39 // pred_region
        %p6162 = scmp.lt.s32.totalorder %s20, 1
        %s6163 = scalar_select %p6162, %s20, 1
        %p6164 = scmp.lt.s32.totalorder %s21, 0
        %s6165 = scalar_select %p6164, %s21, 0
        %s6166 = smul.addr %s6163, 32
        %s6167 = sadd.s32 %s6165, %s6166
        %s6168 = smul.addr %s6167, 8
        %s6169 = scalar_lea.vmem %s3, %s6168
      $region44: #{conv3bn_forward.1} parent=39 // pred_fallthru
        _
    $region40: #{conv3bn_forward.1} parent=5 // pred_fallthru
      _
  $region6: #{conv3bn_forward.1} parent=0 // loop_footer
    %s13 = sadd.s32 1, %s9
  $region7: #{conv3bn_forward.1} parent=0 // loop_footer_branch
    %8 = sbr.rel target = $region3
  $region8: #{conv3bn_forward.1} parent=0 // loop_exit
    _

</llo_original>
